<compile_context>
chip_gen: v5e
topology: v5e:2x2
jax: 0.10.0
libtpu: 0.0.40
codegen_flags: <defaults>
</compile_context>

<pallas_src>
import jax
import jax.numpy as jnp
from jax import lax
from jax.experimental import pallas as pl
from jax.experimental.pallas import tpu as pltpu


def _silu_to_bf16(h):
    """SiLU(x) = 0.5*x*(1 + tanh(x/2)): one EUP op (tanh) instead of
    exp+reciprocal, computed in bf16 (the value feeds a bf16 MXU matmul next).
    On v5e (no bf16 EUP/VPU) Mosaic upconverts; the halved EUP count remains."""
    hb = h.astype(jnp.bfloat16)
    return (0.5 * hb) * (1.0 + jnp.tanh(0.5 * hb))


def _mlp_kernel(xn_ref, w1_ref, b1_ref, w2_ref, b2_ref, w3_ref, b3_ref,
                h_ref, rsum_ref, rsq_ref):
    # Pass 1: per [1, TE, *] edge tile.
    #   xn_ref: [1, TE, 2*memb+eemb] bf16 (merged layer-1 input, single K dot)
    #   w*_ref: bf16 weights (resident), b*_ref: f32 biases (1, fan_out)
    #   h_ref : [1, TE, eemb] bf16  pre-LayerNorm activations
    #   rsum/rsq: [1, TE, 1] f32    hierarchical LayerNorm partials (lane reduce)
    x = xn_ref[0]                                                    # bf16 [TE, Din]
    h = jnp.dot(x, w1_ref[...], preferred_element_type=jnp.float32) + b1_ref[...]
    h = _silu_to_bf16(h)                                             # bf16 [TE, 512]
    h = jnp.dot(h, w2_ref[...], preferred_element_type=jnp.float32) + b2_ref[...]
    h = _silu_to_bf16(h)                                             # bf16 [TE, 256]
    h = jnp.dot(h, w3_ref[...], preferred_element_type=jnp.float32) + b3_ref[...]
    # Hierarchical stats: f32 lane-axis reduce here; the (tiny) cross-row /
    # cross-tile reduction happens outside on the [B, E, 1] partials.
    rsum_ref[0] = jnp.sum(h, axis=-1, keepdims=True)
    rsq_ref[0] = jnp.sum(h * h, axis=-1, keepdims=True)
    h_ref[0] = h.astype(h_ref.dtype)


def _ln_residual_kernel(h_ref, mex_ref, lnw_ref, lnb_ref, stats_ref, out_ref):
    # Pass 2 (lane-dense when possible): normalize with the global per-batch
    # mean/rstd (SMEM scalars), apply the per-element affine, add the residual.
    b = pl.program_id(0)
    mean = stats_ref[b, 0]
    rstd = stats_ref[b, 1]
    h = h_ref[0].astype(jnp.float32)
    out_ref[0] = mex_ref[0] + (h - mean) * rstd * lnw_ref[...] + lnb_ref[...]


def _edge_tile_and_vmem(n_edges):
    """Per-generation E-tile and scoped-VMEM budget.
    v7x has 64 MiB physical VMEM (vs 128 MiB on v5e/v6e) -> smaller tile and a
    smaller explicit limit.  Conservative (v7x-sized) fallback if the query
    is unavailable."""
    try:
        vmem_cap = pltpu.get_tpu_info().vmem_capacity_bytes
    except Exception:
        vmem_cap = 64 * 1024 * 1024
    if vmem_cap <= 64 * 1024 * 1024:            # v7x-class
        te_max, vmem_limit = 4096, 48 * 1024 * 1024
    else:                                       # v5e / v6e (128 MiB physical)
        te_max, vmem_limit = 8192, 96 * 1024 * 1024
    te = min(n_edges, te_max)
    te -= te % 8
    while te >= 8:
        if n_edges % te == 0:
            return te, vmem_limit
        te -= 8
    return n_edges, vmem_limit                  # single whole-E tile fallback


def _mesh_edge_update_impl(gx, mx, me_i, me_x, g2me_i, g2me_x, m2ge_i, m2ge_x,
                           params):
    row, col = me_i
    w1, b1, w2, b2, w3, b3, lnw, lnb = params
    B, E, eemb = me_x.shape
    memb = mx.shape[-1]
    din = 2 * memb + eemb
    hid1, hid2 = w1.shape[1], w2.shape[1]

    te, vmem_limit = _edge_tile_and_vmem(E)
    n_et = E // te

    # Glue (fused by XLA under jit): gather endpoint embeddings and build the
    # merged bf16 layer-1 input once -> one K=din MXU contraction in the kernel.
    xn = jnp.concatenate([mx[:, row], mx[:, col], me_x], axis=-1).astype(jnp.bfloat16)
    mex = me_x.astype(jnp.float32)

    w1b = w1.astype(jnp.bfloat16)
    w2b = w2.astype(jnp.bfloat16)
    w3b = w3.astype(jnp.bfloat16)
    b1r, b2r, b3r = b1.reshape(1, -1), b2.reshape(1, -1), b3.reshape(1, -1)

    cp = pltpu.CompilerParams(dimension_semantics=("parallel", "parallel"),
                              vmem_limit_bytes=vmem_limit)
    cost = pl.CostEstimate(
        flops=2 * B * E * (din * hid1 + hid1 * hid2 + hid2 * eemb),
        transcendentals=B * E * (hid1 + hid2),
        bytes_accessed=(xn.size * 2
                        + (w1.size + w2.size + w3.size) * 2
                        + (b1.size + b2.size + b3.size) * 4
                        + B * E * eemb * 2 + 2 * B * E * 4),
    )

    # ---- Pass 1: tiled MLP + LayerNorm partials --------------------------------
    h_pre, row_sum, row_sq = pl.pallas_call(
        _mlp_kernel,
        out_shape=(jax.ShapeDtypeStruct((B, E, eemb), jnp.bfloat16),
                   jax.ShapeDtypeStruct((B, E, 1), jnp.float32),
                   jax.ShapeDtypeStruct((B, E, 1), jnp.float32)),
        grid=(B, n_et),
        in_specs=[
            pl.BlockSpec((1, te, din), lambda b, e: (b, e, 0)),
            pl.BlockSpec((din, hid1), lambda b, e: (0, 0)),    # resident weights
            pl.BlockSpec((1, hid1), lambda b, e: (0, 0)),
            pl.BlockSpec((hid1, hid2), lambda b, e: (0, 0)),
            pl.BlockSpec((1, hid2), lambda b, e: (0, 0)),
            pl.BlockSpec((hid2, eemb), lambda b, e: (0, 0)),
            pl.BlockSpec((1, eemb), lambda b, e: (0, 0)),
        ],
        out_specs=(
            pl.BlockSpec((1, te, eemb), lambda b, e: (b, e, 0)),
            pl.BlockSpec((1, te, 1), lambda b, e: (b, e, 0)),
            pl.BlockSpec((1, te, 1), lambda b, e: (b, e, 0)),
        ),
        compiler_params=cp,
        cost_estimate=cost,
    )(xn, w1b, b1r, w2b, b2r, w3b, b3r)

    # ---- Global LayerNorm stats over the WHOLE [E, eemb] (module semantics) ----
    n = float(E * eemb)                              # GLOBAL count, not per-tile
    s = jnp.sum(row_sum, axis=(1, 2))
    s2 = jnp.sum(row_sq, axis=(1, 2))
    mean = s / n
    var = jnp.maximum(s2 / n - mean * mean, 0.0)
    rstd = lax.rsqrt(var + 1e-5)
    mu_rstd = jnp.stack([mean, rstd], axis=-1).astype(jnp.float32)   # [B, 2]

    # ---- Pass 2: LayerNorm affine + residual (lane-dense epilogue) -------------
    if (te * eemb) % (128 * 8) == 0:
        tl = te * eemb // 128
        r = E * eemb // 128
        h2 = h_pre.reshape(B, r, 128)                # free row-major re-views
        mex2 = mex.reshape(B, r, 128)
        lnw2 = lnw.astype(jnp.float32).reshape(r, 128)
        lnb2 = lnb.astype(jnp.float32).reshape(r, 128)
        blk_e, blk_p = (1, tl, 128), (tl, 128)
        out_sd = jax.ShapeDtypeStruct((B, r, 128), jnp.float32)
    else:                                            # natural-layout fallback
        h2, mex2 = h_pre, mex
        lnw2, lnb2 = lnw.astype(jnp.float32), lnb.astype(jnp.float32)
        blk_e, blk_p = (1, te, eemb), (te, eemb)
        out_sd = jax.ShapeDtypeStruct((B, E, eemb), jnp.float32)

    out = pl.pallas_call(
        _ln_residual_kernel,
        out_shape=out_sd,
        grid=(B, n_et),
        in_specs=[
            pl.BlockSpec(blk_e, lambda b, e: (b, e, 0)),
            pl.BlockSpec(blk_e, lambda b, e: (b, e, 0)),
            pl.BlockSpec(blk_p, lambda b, e: (e, 0)),          # lnw tiled along E
            pl.BlockSpec(blk_p, lambda b, e: (e, 0)),          # lnb tiled along E
            pl.BlockSpec(memory_space=pltpu.MemorySpace.SMEM),  # [B,2] mean/rstd
        ],
        out_specs=pl.BlockSpec(blk_e, lambda b, e: (b, e, 0)),
        # Residual output reuses me_x's f32 buffer.  Safe: pass 1 never writes
        # this buffer, and each pass-2 grid step reads its block before writeback.
        input_output_aliases={1: 0},
        compiler_params=cp,
    )(h2, mex2, lnw2, lnb2, mu_rstd)

    me_x_new = out.reshape(B, E, eemb).astype(me_x.dtype)
    return (gx, mx, me_i, me_x_new, g2me_i, g2me_x, m2ge_i, m2ge_x)


mesh_edge_update_pallas = jax.jit(_mesh_edge_update_impl)


def _linear_init(key, fan_in, fan_out):
    # matches torch.nn.Linear default: U(-1/sqrt(fan_in), 1/sqrt(fan_in))
    kw, kb = jax.random.split(key)
    bound = 1.0 / jnp.sqrt(fan_in)
    w = jax.random.uniform(kw, (fan_in, fan_out), jnp.float32, -bound, bound)
    b = jax.random.uniform(kb, (fan_out,), jnp.float32, -bound, bound)
    return w, b


def _reference_f32(mx, me_i, me_x, params):
    # Pure-JAX f32 reference of the PyTorch forward.
    w1, b1, w2, b2, w3, b3, lnw, lnb = params
    row, col = me_i
    x = jnp.concatenate([mx[:, row], mx[:, col], me_x], axis=-1)
    h = jax.nn.silu(x @ w1 + b1)
    h = jax.nn.silu(h @ w2 + b2)
    h = h @ w3 + b3
    mean = jnp.mean(h, axis=(-2, -1), keepdims=True)
    var = jnp.mean(jnp.square(h - mean), axis=(-2, -1), keepdims=True)
    h = (h - mean) * lax.rsqrt(var + 1e-5) * lnw + lnb
    return me_x + h


def _reference_matched(mx, me_i, me_x, params):
    # Same math with the kernel's precision choices (bf16 MXU operands with f32
    # accumulation, bf16 tanh-SiLU, f32 LayerNorm statistics and residual).
    w1, b1, w2, b2, w3, b3, lnw, lnb = params
    row, col = me_i
    bf = jnp.bfloat16
    x = jnp.concatenate([mx[:, row], mx[:, col], me_x], axis=-1).astype(bf)
    h = jnp.dot(x, w1.astype(bf), preferred_element_type=jnp.float32) + b1
    h = _silu_to_bf16(h)
    h = jnp.dot(h, w2.astype(bf), preferred_element_type=jnp.float32) + b2
    h = _silu_to_bf16(h)
    h = jnp.dot(h, w3.astype(bf), preferred_element_type=jnp.float32) + b3
    mean = jnp.mean(h, axis=(-2, -1), keepdims=True)
    var = jnp.mean(jnp.square(h - mean), axis=(-2, -1), keepdims=True)
    h = (h - mean) * lax.rsqrt(var + 1e-5) * lnw + lnb
    return me_x + h


if __name__ == "__main__":
    # small but representative sizes
    B = 2              # batch
    N = 64             # num mesh nodes
    E = 128            # args.mesh_edge_num
    memb = 32          # args.mesh_node_embed_dim
    eemb = 32          # args.edge_embed_dim
    Din = memb + memb + eemb

    key = jax.random.PRNGKey(0)
    k = jax.random.split(key, 14)

    gx = jax.random.normal(k[0], (B, 16, 8), jnp.float32)          # pass-through
    mx = jax.random.normal(k[1], (B, N, memb), jnp.float32)
    row = jax.random.randint(k[2], (E,), 0, N, jnp.int32)
    col = jax.random.randint(k[3], (E,), 0, N, jnp.int32)
    me_i = (row, col)
    me_x = jax.random.normal(k[4], (B, E, eemb), jnp.float32)
    g2me_i = jax.random.randint(k[5], (2, 16), 0, N, jnp.int32)    # pass-through
    g2me_x = jax.random.normal(k[6], (B, 16, eemb), jnp.float32)   # pass-through
    m2ge_i = jax.random.randint(k[7], (2, 16), 0, N, jnp.int32)    # pass-through
    m2ge_x = jax.random.normal(k[8], (B, 16, eemb), jnp.float32)   # pass-through

    w1, b1 = _linear_init(k[9], Din, 512)
    w2, b2 = _linear_init(k[10], 512, 256)
    w3, b3 = _linear_init(k[11], 256, eemb)
    # LayerNorm([E, eemb]) affine params (perturbed from default init so the
    # per-element gamma/beta path is actually exercised).
    lnw = 1.0 + 0.1 * jax.random.normal(k[12], (E, eemb), jnp.float32)
    lnb = 0.1 * jax.random.normal(k[13], (E, eemb), jnp.float32)
    params = (w1, b1, w2, b2, w3, b3, lnw, lnb)

    out = mesh_edge_update_pallas(gx, mx, me_i, me_x, g2me_i, g2me_x,
                                  m2ge_i, m2ge_x, params)
    me_x_new = jax.block_until_ready(out[3])
    assert me_x_new.shape == (B, E, eemb)

    # Tight check against a precision-matched (bf16 matmul + bf16 SiLU) reference.
    ref_m = _reference_matched(mx, me_i, me_x, params)
    assert jnp.allclose(me_x_new, ref_m, atol=3e-2, rtol=3e-2), \
        "mismatch vs precision-matched reference"

    # Loose sanity check against the full f32 reference (module semantics).
    ref_f32 = _reference_f32(mx, me_i, me_x, params)
    assert jnp.allclose(me_x_new, ref_f32, atol=1.5e-1, rtol=1.5e-1), \
        "mismatch vs f32 reference"

    print("KERNEL_OK")
</pallas_src>

<mosaic_0001>
module attributes {stable_mosaic.version = 11 : i64} {
  func.func @_mlp_kernel(%arg0: i32, %arg1: i32, %arg2: memref<1x128x96xbf16, #tpu.memory_space<vmem>>, %arg3: memref<96x512xbf16, #tpu.memory_space<vmem>>, %arg4: memref<1x512xf32, #tpu.memory_space<vmem>>, %arg5: memref<512x256xbf16, #tpu.memory_space<vmem>>, %arg6: memref<1x256xf32, #tpu.memory_space<vmem>>, %arg7: memref<256x32xbf16, #tpu.memory_space<vmem>>, %arg8: memref<1x32xf32, #tpu.memory_space<vmem>>, %arg9: memref<1x128x32xbf16, #tpu.memory_space<vmem>>, %arg10: memref<1x128x1xf32, #tpu.memory_space<vmem>>, %arg11: memref<1x128x1xf32, #tpu.memory_space<vmem>>) attributes {dimension_semantics = [#tpu.dimension_semantics<parallel>, #tpu.dimension_semantics<parallel>], iteration_bounds = array<i64: 2, 1>, scalar_prefetch = 0 : i64, scratch_operands = 0 : i64, tpu.core_type = #tpu.core_type<tc>, window_params = [{transform_indices = @transform_0, window_bounds = array<i64: 1, 128, 96>}, {pipeline_mode = #tpu.pipeline_mode<synchronous>, transform_indices = @transform_1, window_bounds = array<i64: 96, 512>}, {pipeline_mode = #tpu.pipeline_mode<synchronous>, transform_indices = @transform_2, window_bounds = array<i64: 1, 512>}, {pipeline_mode = #tpu.pipeline_mode<synchronous>, transform_indices = @transform_3, window_bounds = array<i64: 512, 256>}, {pipeline_mode = #tpu.pipeline_mode<synchronous>, transform_indices = @transform_4, window_bounds = array<i64: 1, 256>}, {pipeline_mode = #tpu.pipeline_mode<synchronous>, transform_indices = @transform_5, window_bounds = array<i64: 256, 32>}, {pipeline_mode = #tpu.pipeline_mode<synchronous>, transform_indices = @transform_6, window_bounds = array<i64: 1, 32>}, {transform_indices = @transform_7, window_bounds = array<i64: 1, 128, 32>}, {transform_indices = @transform_8, window_bounds = array<i64: 1, 128, 1>}, {transform_indices = @transform_9, window_bounds = array<i64: 1, 128, 1>}]} {
    %c0 = arith.constant 0 : index
    %c0_0 = arith.constant 0 : index
    %c0_1 = arith.constant 0 : index
    %0 = vector.load %arg2[%c0, %c0_0, %c0_1] : memref<1x128x96xbf16, #tpu.memory_space<vmem>>, vector<1x128x96xbf16>
    %1 = vector.shape_cast %0 : vector<1x128x96xbf16> to vector<128x96xbf16>
    %c0_2 = arith.constant 0 : index
    %c0_3 = arith.constant 0 : index
    %2 = vector.load %arg3[%c0_2, %c0_3] : memref<96x512xbf16, #tpu.memory_space<vmem>>, vector<96x512xbf16>
    %cst = arith.constant dense<0.000000e+00> : vector<128x512xf32>
    %3 = tpu.matmul %1, %2, %cst {dimension_numbers = #tpu.dot_dimension_numbers<[1], [0], [0], [1], [0, 0, 1, 1], [], []>} : vector<128x96xbf16>, vector<96x512xbf16>, vector<128x512xf32> -> vector<128x512xf32>
    %c0_4 = arith.constant 0 : index
    %c0_5 = arith.constant 0 : index
    %4 = vector.load %arg4[%c0_4, %c0_5] : memref<1x512xf32, #tpu.memory_space<vmem>>, vector<1x512xf32>
    %5 = vector.broadcast %4 : vector<1x512xf32> to vector<128x512xf32>
    %6 = arith.addf %3, %5 : vector<128x512xf32>
    %7 = arith.truncf %6 : vector<128x512xf32> to vector<128x512xbf16>
    %cst_6 = arith.constant 5.000000e-01 : bf16
    %8 = vector.broadcast %cst_6 : bf16 to vector<128x512xbf16>
    %9 = arith.mulf %8, %7 : vector<128x512xbf16>
    %cst_7 = arith.constant 5.000000e-01 : bf16
    %10 = vector.broadcast %cst_7 : bf16 to vector<128x512xbf16>
    %11 = arith.mulf %10, %7 : vector<128x512xbf16>
    %12 = math.tanh %11 : vector<128x512xbf16>
    %cst_8 = arith.constant 1.000000e+00 : bf16
    %13 = vector.broadcast %cst_8 : bf16 to vector<128x512xbf16>
    %14 = arith.addf %13, %12 : vector<128x512xbf16>
    %15 = arith.mulf %9, %14 : vector<128x512xbf16>
    %c0_9 = arith.constant 0 : index
    %c0_10 = arith.constant 0 : index
    %16 = vector.load %arg5[%c0_9, %c0_10] : memref<512x256xbf16, #tpu.memory_space<vmem>>, vector<512x256xbf16>
    %cst_11 = arith.constant dense<0.000000e+00> : vector<128x256xf32>
    %17 = tpu.matmul %15, %16, %cst_11 {dimension_numbers = #tpu.dot_dimension_numbers<[1], [0], [0], [1], [0, 0, 1, 1], [], []>} : vector<128x512xbf16>, vector<512x256xbf16>, vector<128x256xf32> -> vector<128x256xf32>
    %c0_12 = arith.constant 0 : index
    %c0_13 = arith.constant 0 : index
    %18 = vector.load %arg6[%c0_12, %c0_13] : memref<1x256xf32, #tpu.memory_space<vmem>>, vector<1x256xf32>
    %19 = vector.broadcast %18 : vector<1x256xf32> to vector<128x256xf32>
    %20 = arith.addf %17, %19 : vector<128x256xf32>
    %21 = arith.truncf %20 : vector<128x256xf32> to vector<128x256xbf16>
    %cst_14 = arith.constant 5.000000e-01 : bf16
    %22 = vector.broadcast %cst_14 : bf16 to vector<128x256xbf16>
    %23 = arith.mulf %22, %21 : vector<128x256xbf16>
    %cst_15 = arith.constant 5.000000e-01 : bf16
    %24 = vector.broadcast %cst_15 : bf16 to vector<128x256xbf16>
    %25 = arith.mulf %24, %21 : vector<128x256xbf16>
    %26 = math.tanh %25 : vector<128x256xbf16>
    %cst_16 = arith.constant 1.000000e+00 : bf16
    %27 = vector.broadcast %cst_16 : bf16 to vector<128x256xbf16>
    %28 = arith.addf %27, %26 : vector<128x256xbf16>
    %29 = arith.mulf %23, %28 : vector<128x256xbf16>
    %c0_17 = arith.constant 0 : index
    %c0_18 = arith.constant 0 : index
    %30 = vector.load %arg7[%c0_17, %c0_18] : memref<256x32xbf16, #tpu.memory_space<vmem>>, vector<256x32xbf16>
    %cst_19 = arith.constant dense<0.000000e+00> : vector<128x32xf32>
    %31 = tpu.matmul %29, %30, %cst_19 {dimension_numbers = #tpu.dot_dimension_numbers<[1], [0], [0], [1], [0, 0, 1, 1], [], []>} : vector<128x256xbf16>, vector<256x32xbf16>, vector<128x32xf32> -> vector<128x32xf32>
    %c0_20 = arith.constant 0 : index
    %c0_21 = arith.constant 0 : index
    %32 = vector.load %arg8[%c0_20, %c0_21] : memref<1x32xf32, #tpu.memory_space<vmem>>, vector<1x32xf32>
    %33 = vector.broadcast %32 : vector<1x32xf32> to vector<128x32xf32>
    %34 = arith.addf %31, %33 : vector<128x32xf32>
    %cst_22 = arith.constant dense<0.000000e+00> : vector<128xf32>
    %35 = vector.multi_reduction <add>, %34, %cst_22 [1] : vector<128x32xf32> to vector<128xf32>
    %36 = vector.shape_cast %35 : vector<128xf32> to vector<128x1xf32>
    %c0_23 = arith.constant 0 : index
    %c0_24 = arith.constant 0 : index
    %c0_25 = arith.constant 0 : index
    %37 = vector.load %arg10[%c0_23, %c0_24, %c0_25] : memref<1x128x1xf32, #tpu.memory_space<vmem>>, vector<1x128x1xf32>
    %38 = vector.shape_cast %37 : vector<1x128x1xf32> to vector<128x1xf32>
    %39 = vector.shape_cast %36 : vector<128x1xf32> to vector<1x128x1xf32>
    tpu.vector_store %arg10[%c0_23, %c0_24, %c0_25], %39 {strides = array<i32>} : memref<1x128x1xf32, #tpu.memory_space<vmem>>, vector<1x128x1xf32>,
    %40 = arith.mulf %34, %34 : vector<128x32xf32>
    %cst_26 = arith.constant dense<0.000000e+00> : vector<128xf32>
    %41 = vector.multi_reduction <add>, %40, %cst_26 [1] : vector<128x32xf32> to vector<128xf32>
    %42 = vector.shape_cast %41 : vector<128xf32> to vector<128x1xf32>
    %c0_27 = arith.constant 0 : index
    %c0_28 = arith.constant 0 : index
    %c0_29 = arith.constant 0 : index
    %43 = vector.load %arg11[%c0_27, %c0_28, %c0_29] : memref<1x128x1xf32, #tpu.memory_space<vmem>>, vector<1x128x1xf32>
    %44 = vector.shape_cast %43 : vector<1x128x1xf32> to vector<128x1xf32>
    %45 = vector.shape_cast %42 : vector<128x1xf32> to vector<1x128x1xf32>
    tpu.vector_store %arg11[%c0_27, %c0_28, %c0_29], %45 {strides = array<i32>} : memref<1x128x1xf32, #tpu.memory_space<vmem>>, vector<1x128x1xf32>,
    %46 = arith.truncf %34 : vector<128x32xf32> to vector<128x32xbf16>
    %c0_30 = arith.constant 0 : index
    %c0_31 = arith.constant 0 : index
    %c0_32 = arith.constant 0 : index
    %47 = vector.load %arg9[%c0_30, %c0_31, %c0_32] : memref<1x128x32xbf16, #tpu.memory_space<vmem>>, vector<1x128x32xbf16>
    %48 = vector.shape_cast %47 : vector<1x128x32xbf16> to vector<128x32xbf16>
    %49 = vector.shape_cast %46 : vector<128x32xbf16> to vector<1x128x32xbf16>
    tpu.vector_store %arg9[%c0_30, %c0_31, %c0_32], %49 {strides = array<i32>} : memref<1x128x32xbf16, #tpu.memory_space<vmem>>, vector<1x128x32xbf16>,
    return
  }
  func.func @transform_0(%arg0: i32, %arg1: i32) -> (i32, i32, i32) {
    %c0_i32 = arith.constant 0 : i32
    %c0_i32_0 = arith.constant 0 : i32
    return %arg0, %arg1, %c0_i32 : i32, i32, i32
  }
  func.func @transform_1(%arg0: i32, %arg1: i32) -> (i32, i32) {
    %c0_i32 = arith.constant 0 : i32
    %c0_i32_0 = arith.constant 0 : i32
    %c0_i32_1 = arith.constant 0 : i32
    return %c0_i32, %c0_i32_0 : i32, i32
  }
  func.func @transform_2(%arg0: i32, %arg1: i32) -> (i32, i32) {
    %c0_i32 = arith.constant 0 : i32
    %c0_i32_0 = arith.constant 0 : i32
    %c0_i32_1 = arith.constant 0 : i32
    return %c0_i32, %c0_i32_0 : i32, i32
  }
  func.func @transform_3(%arg0: i32, %arg1: i32) -> (i32, i32) {
    %c0_i32 = arith.constant 0 : i32
    %c0_i32_0 = arith.constant 0 : i32
    %c0_i32_1 = arith.constant 0 : i32
    return %c0_i32, %c0_i32_0 : i32, i32
  }
  func.func @transform_4(%arg0: i32, %arg1: i32) -> (i32, i32) {
    %c0_i32 = arith.constant 0 : i32
    %c0_i32_0 = arith.constant 0 : i32
    %c0_i32_1 = arith.constant 0 : i32
    return %c0_i32, %c0_i32_0 : i32, i32
  }
  func.func @transform_5(%arg0: i32, %arg1: i32) -> (i32, i32) {
    %c0_i32 = arith.constant 0 : i32
    %c0_i32_0 = arith.constant 0 : i32
    %c0_i32_1 = arith.constant 0 : i32
    return %c0_i32, %c0_i32_0 : i32, i32
  }
  func.func @transform_6(%arg0: i32, %arg1: i32) -> (i32, i32) {
    %c0_i32 = arith.constant 0 : i32
    %c0_i32_0 = arith.constant 0 : i32
    %c0_i32_1 = arith.constant 0 : i32
    return %c0_i32, %c0_i32_0 : i32, i32
  }
  func.func @transform_7(%arg0: i32, %arg1: i32) -> (i32, i32, i32) {
    %c0_i32 = arith.constant 0 : i32
    %c0_i32_0 = arith.constant 0 : i32
    return %arg0, %arg1, %c0_i32 : i32, i32, i32
  }
  func.func @transform_8(%arg0: i32, %arg1: i32) -> (i32, i32, i32) {
    %c0_i32 = arith.constant 0 : i32
    %c0_i32_0 = arith.constant 0 : i32
    return %arg0, %arg1, %c0_i32 : i32, i32, i32
  }
  func.func @transform_9(%arg0: i32, %arg1: i32) -> (i32, i32, i32) {
    %c0_i32 = arith.constant 0 : i32
    %c0_i32_0 = arith.constant 0 : i32
    return %arg0, %arg1, %c0_i32 : i32, i32, i32
  }
}

module attributes {stable_mosaic.version = 11 : i64} {
  func.func @_ln_residual_kernel(%arg0: i32, %arg1: i32, %arg2: memref<1x32x128xbf16, #tpu.memory_space<vmem>>, %arg3: memref<1x32x128xf32, #tpu.memory_space<vmem>>, %arg4: memref<32x128xf32, #tpu.memory_space<vmem>>, %arg5: memref<32x128xf32, #tpu.memory_space<vmem>>, %arg6: memref<2x2xf32, #tpu.memory_space<smem>>, %arg7: memref<1x32x128xf32, #tpu.memory_space<vmem>>) attributes {dimension_semantics = [#tpu.dimension_semantics<parallel>, #tpu.dimension_semantics<parallel>], iteration_bounds = array<i64: 2, 1>, scalar_prefetch = 0 : i64, scratch_operands = 0 : i64, tpu.core_type = #tpu.core_type<tc>, window_params = [{transform_indices = @transform_0, window_bounds = array<i64: 1, 32, 128>}, {transform_indices = @transform_1, window_bounds = array<i64: 1, 32, 128>}, {transform_indices = @transform_2, window_bounds = array<i64: 32, 128>}, {transform_indices = @transform_3, window_bounds = array<i64: 32, 128>}, {transform_indices = @transform_4, window_bounds = array<i64: 2, 2>}, {transform_indices = @transform_5, window_bounds = array<i64: 1, 32, 128>}]} {
    %0 = arith.index_cast %arg0 : i32 to index
    %c0 = arith.constant 0 : index
    %1 = memref.load %arg6[%0, %c0] : memref<2x2xf32, #tpu.memory_space<smem>>
    %2 = arith.index_cast %arg0 : i32 to index
    %c1 = arith.constant 1 : index
    %3 = memref.load %arg6[%2, %c1] : memref<2x2xf32, #tpu.memory_space<smem>>
    %c0_0 = arith.constant 0 : index
    %c0_1 = arith.constant 0 : index
    %c0_2 = arith.constant 0 : index
    %4 = vector.load %arg2[%c0_0, %c0_1, %c0_2] : memref<1x32x128xbf16, #tpu.memory_space<vmem>>, vector<1x32x128xbf16>
    %5 = vector.shape_cast %4 : vector<1x32x128xbf16> to vector<32x128xbf16>
    %6 = arith.extf %5 : vector<32x128xbf16> to vector<32x128xf32>
    %c0_3 = arith.constant 0 : index
    %c0_4 = arith.constant 0 : index
    %c0_5 = arith.constant 0 : index
    %7 = vector.load %arg3[%c0_3, %c0_4, %c0_5] : memref<1x32x128xf32, #tpu.memory_space<vmem>>, vector<1x32x128xf32>
    %8 = vector.shape_cast %7 : vector<1x32x128xf32> to vector<32x128xf32>
    %9 = vector.broadcast %1 : f32 to vector<32x128xf32>
    %10 = arith.subf %6, %9 : vector<32x128xf32>
    %11 = vector.broadcast %3 : f32 to vector<32x128xf32>
    %12 = arith.mulf %10, %11 : vector<32x128xf32>
    %c0_6 = arith.constant 0 : index
    %c0_7 = arith.constant 0 : index
    %13 = vector.load %arg4[%c0_6, %c0_7] : memref<32x128xf32, #tpu.memory_space<vmem>>, vector<32x128xf32>
    %14 = arith.mulf %12, %13 : vector<32x128xf32>
    %15 = arith.addf %8, %14 : vector<32x128xf32>
    %c0_8 = arith.constant 0 : index
    %c0_9 = arith.constant 0 : index
    %16 = vector.load %arg5[%c0_8, %c0_9] : memref<32x128xf32, #tpu.memory_space<vmem>>, vector<32x128xf32>
    %17 = arith.addf %15, %16 : vector<32x128xf32>
    %c0_10 = arith.constant 0 : index
    %c0_11 = arith.constant 0 : index
    %c0_12 = arith.constant 0 : index
    %18 = vector.load %arg7[%c0_10, %c0_11, %c0_12] : memref<1x32x128xf32, #tpu.memory_space<vmem>>, vector<1x32x128xf32>
    %19 = vector.shape_cast %18 : vector<1x32x128xf32> to vector<32x128xf32>
    %20 = vector.shape_cast %17 : vector<32x128xf32> to vector<1x32x128xf32>
    tpu.vector_store %arg7[%c0_10, %c0_11, %c0_12], %20 {strides = array<i32>} : memref<1x32x128xf32, #tpu.memory_space<vmem>>, vector<1x32x128xf32>,
    return
  }
  func.func @transform_0(%arg0: i32, %arg1: i32) -> (i32, i32, i32) {
    %c0_i32 = arith.constant 0 : i32
    %c0_i32_0 = arith.constant 0 : i32
    return %arg0, %arg1, %c0_i32 : i32, i32, i32
  }
  func.func @transform_1(%arg0: i32, %arg1: i32) -> (i32, i32, i32) {
    %c0_i32 = arith.constant 0 : i32
    %c0_i32_0 = arith.constant 0 : i32
    return %arg0, %arg1, %c0_i32 : i32, i32, i32
  }
  func.func @transform_2(%arg0: i32, %arg1: i32) -> (i32, i32) {
    %c0_i32 = arith.constant 0 : i32
    %c0_i32_0 = arith.constant 0 : i32
    return %arg1, %c0_i32 : i32, i32
  }
  func.func @transform_3(%arg0: i32, %arg1: i32) -> (i32, i32) {
    %c0_i32 = arith.constant 0 : i32
    %c0_i32_0 = arith.constant 0 : i32
    return %arg1, %c0_i32 : i32, i32
  }
  func.func @transform_4(%arg0: i32, %arg1: i32) -> (i32, i32) {
    %c0_i32 = arith.constant 0 : i32
    %c0_i32_0 = arith.constant 0 : i32
    %c0_i32_1 = arith.constant 0 : i32
    return %c0_i32, %c0_i32_0 : i32, i32
  }
  func.func @transform_5(%arg0: i32, %arg1: i32) -> (i32, i32, i32) {
    %c0_i32 = arith.constant 0 : i32
    %c0_i32_0 = arith.constant 0 : i32
    return %arg0, %arg1, %c0_i32 : i32, i32, i32
  }
}

</mosaic_0001>

<llo_original>
// kernel: _mesh_edge_update_impl.3
$region0: #{_mesh_edge_update_impl.3}
  #allocation0 [shape = 'u32[]', space=smem, size = 0x4, offset = 0x4, fixed_abs, tag = 'smem constant byte address 0x4 - core index']
  #allocation1 [shape = 'u32[72,128]{1,0:T(1,128)}', space=vmem, size = 0x9000, scoped, tag = 'internal scratch']
  %s0 = inlined_call_operand.vmem [shape: bf16[2,32,128], index: 0, kind: input, shape index: {}]
  %s1 = inlined_call_operand.vmem [shape: f32[2,32,128], index: 1, kind: input, shape index: {}, may-alias: {1,5}]
  %s2 = inlined_call_operand.vmem [shape: f32[32,128], index: 2, kind: input, shape index: {}]
  %s3 = inlined_call_operand.vmem [shape: f32[32,128], index: 3, kind: input, shape index: {}]
  %s4 = inlined_call_operand.vmem [shape: f32[2,2], index: 4, kind: input, shape index: {}]
  %s5 = inlined_call_operand.vmem [shape: f32[2,32,128], index: 5, kind: output, shape index: {}, may-alias: {1,5}]
  %s6 = sld [smem:[#allocation0]]
  $region57: #{_mesh_edge_update_impl.3} parent=0
    _
  %s8 = ssub.s32 1, %s6
  %s9 = scalar_select 0, %s8, %s6
  $region1: #{_mesh_edge_update_impl.3} parent=0
    #allocation2 [shape = 'u8[1024]{0}', space=smem, size = 0x400, scoped, tag = 'input window, operand 4, single buffered']
    #allocation3 [shape = 's32[2]{0}', space=sflag, size = 0x8, scoped, tag = 'scoped memory for _mesh_edge_update_impl.3']
    %10 = vsyncpa [#allocation3], 0
    loop: start=0, step=1, limit=4
    $region2: #{_mesh_edge_update_impl.3} parent=1 // loop_pre_header
      _
    $region3: #{_mesh_edge_update_impl.3} parent=1 // loop_header
      %s12 = sphi 0, %s16
      %p13 = scmp.ge.s32.totalorder %s12, 4
      %s19 = sphi 0, %s31
      %s20 = sphi 0, %s27
      %s21 = sphi 0, %s19
      %s22 = sphi 0, %s20
      %s23 = sphi 0, %s21
      %s24 = sphi 0, %s22
      %s36 = sphi 0, %s38
      %s39 = sphi 0, %s36
      %s40 = sphi 0, %s39
      %s56 = sphi 0, %s40
      %s64 = sphi 0, %s66
      %s67 = sphi 0, %s64
      %s68 = sphi 0, %s67
      %s84 = sphi 0, %s68
      %s90 = sphi 0, %s92
      %s93 = sphi 0, %s90
      %s94 = sphi 0, %s93
      %s110 = sphi 0, %s94
      %s116 = sphi 0, %s118
      %s119 = sphi 0, %s116
      %s120 = sphi 0, %s119
      %s136 = sphi 0, %s120
      %s140 = sphi 0, %s140
      %s142 = sphi 0, %s140
      %s143 = sphi 0, %s142
      %s157 = sphi 0, %s143
      %s165 = sphi 0, %s167
      %s168 = sphi 0, %s165
      %s169 = sphi 0, %s168
      %s185 = sphi 0, %s169
    $region4: #{_mesh_edge_update_impl.3} parent=1 // loop_header_branch
      %15 = sbr.rel (%p13) target = $region8
    $region5: #{_mesh_edge_update_impl.3} parent=1 // loop_body
      %s17 = ssub.s32 %s12, 1
      %s18 = ssub.s32 %s12, 2
      %s25 = sadd.s32 1, %s20
      %p26 = scmp.ge.s32.totalorder %s25, 1
      %s27 = scalar_select %p26, 0, %s25
      %s28 = sadd.s32 1, %s19
      %s29 = scalar_select %p26, %s28, %s19
      %p30 = scmp.ge.s32.totalorder %s29, 2
      %s31 = scalar_select %p30, 0, %s29
      %s32 = ssub.s32 %s19, %s31
      %s33 = ssub.s32 %s20, %s27
      %s34 = sor.u32 %s32, %s33
      %p35 = scmp.eq.s32.totalorder %s34, 0
      %s37 = sadd.s32 %s36, 1
      %s38 = scalar_select %p35, %s36, %s37
      %p41 = pneg %p35
      %p42 = scmp.eq.s32.totalorder %s12, 1
      %p43 = por %p41, %p42
      %p44 = scmp.ne.s32.totalorder %s36, %s39
      %p45 = scmp.eq.s32.totalorder %s12, 0
      %p46 = por %p44, %p45
      %p47 = scmp.ne.s32.totalorder %s36, %s39
      %p48 = scmp.eq.s32.totalorder %s17, 1
      %p49 = por %p47, %p48
      %p50 = scmp.ne.s32.totalorder %s39, %s40
      %p51 = scmp.eq.s32.totalorder %s17, 0
      %p52 = por %p50, %p51
      %p53 = scmp.ne.s32.totalorder %s39, %s40
      %p54 = scmp.eq.s32.totalorder %s18, 1
      %p55 = por %p53, %p54
      %p57 = scmp.ne.s32.totalorder %s40, %s56
      %p58 = scmp.eq.s32.totalorder %s18, 0
      %p59 = por %p57, %p58
      %s60 = ssub.s32 %s19, %s31
      %s61 = ssub.s32 %s20, %s27
      %s62 = sor.u32 %s60, %s61
      %p63 = scmp.eq.s32.totalorder %s62, 0
      %s65 = sadd.s32 %s64, 1
      %s66 = scalar_select %p63, %s64, %s65
      %p69 = pneg %p63
      %p70 = scmp.eq.s32.totalorder %s12, 1
      %p71 = por %p69, %p70
      %p72 = scmp.ne.s32.totalorder %s64, %s67
      %p73 = scmp.eq.s32.totalorder %s12, 0
      %p74 = por %p72, %p73
      %p75 = scmp.ne.s32.totalorder %s64, %s67
      %p76 = scmp.eq.s32.totalorder %s17, 1
      %p77 = por %p75, %p76
      %p78 = scmp.ne.s32.totalorder %s67, %s68
      %p79 = scmp.eq.s32.totalorder %s17, 0
      %p80 = por %p78, %p79
      %p81 = scmp.ne.s32.totalorder %s67, %s68
      %p82 = scmp.eq.s32.totalorder %s18, 1
      %p83 = por %p81, %p82
      %p85 = scmp.ne.s32.totalorder %s68, %s84
      %p86 = scmp.eq.s32.totalorder %s18, 0
      %p87 = por %p85, %p86
      %s88 = ssub.s32 %s20, %s27
      %p89 = scmp.eq.s32.totalorder %s88, 0
      %s91 = sadd.s32 %s90, 1
      %s92 = scalar_select %p89, %s90, %s91
      %p95 = pneg %p89
      %p96 = scmp.eq.s32.totalorder %s12, 1
      %p97 = por %p95, %p96
      %p98 = scmp.ne.s32.totalorder %s90, %s93
      %p99 = scmp.eq.s32.totalorder %s12, 0
      %p100 = por %p98, %p99
      %p101 = scmp.ne.s32.totalorder %s90, %s93
      %p102 = scmp.eq.s32.totalorder %s17, 1
      %p103 = por %p101, %p102
      %p104 = scmp.ne.s32.totalorder %s93, %s94
      %p105 = scmp.eq.s32.totalorder %s17, 0
      %p106 = por %p104, %p105
      %p107 = scmp.ne.s32.totalorder %s93, %s94
      %p108 = scmp.eq.s32.totalorder %s18, 1
      %p109 = por %p107, %p108
      %p111 = scmp.ne.s32.totalorder %s94, %s110
      %p112 = scmp.eq.s32.totalorder %s18, 0
      %p113 = por %p111, %p112
      %s114 = ssub.s32 %s20, %s27
      %p115 = scmp.eq.s32.totalorder %s114, 0
      %s117 = sadd.s32 %s116, 1
      %s118 = scalar_select %p115, %s116, %s117
      %p121 = pneg %p115
      %p122 = scmp.eq.s32.totalorder %s12, 1
      %p123 = por %p121, %p122
      %p124 = scmp.ne.s32.totalorder %s116, %s119
      %p125 = scmp.eq.s32.totalorder %s12, 0
      %p126 = por %p124, %p125
      %p127 = scmp.ne.s32.totalorder %s116, %s119
      %p128 = scmp.eq.s32.totalorder %s17, 1
      %p129 = por %p127, %p128
      %p130 = scmp.ne.s32.totalorder %s119, %s120
      %p131 = scmp.eq.s32.totalorder %s17, 0
      %p132 = por %p130, %p131
      %p133 = scmp.ne.s32.totalorder %s119, %s120
      %p134 = scmp.eq.s32.totalorder %s18, 1
      %p135 = por %p133, %p134
      %p137 = scmp.ne.s32.totalorder %s120, %s136
      %p138 = scmp.eq.s32.totalorder %s18, 0
      %p139 = por %p137, %p138
      %s141 = sadd.s32 %s140, 1
      %p144 = scmp.eq.s32.totalorder %s12, 1
      %p145 = scmp.ne.s32.totalorder %s140, %s142
      %p146 = scmp.eq.s32.totalorder %s12, 0
      %p147 = por %p145, %p146
      %p148 = scmp.ne.s32.totalorder %s140, %s142
      %p149 = scmp.eq.s32.totalorder %s17, 1
      %p150 = por %p148, %p149
      %p151 = scmp.ne.s32.totalorder %s142, %s143
      %p152 = scmp.eq.s32.totalorder %s17, 0
      %p153 = por %p151, %p152
      %p154 = scmp.ne.s32.totalorder %s142, %s143
      %p155 = scmp.eq.s32.totalorder %s18, 1
      %p156 = por %p154, %p155
      %p158 = scmp.ne.s32.totalorder %s143, %s157
      %p159 = scmp.eq.s32.totalorder %s18, 0
      %p160 = por %p158, %p159
      %s161 = ssub.s32 %s19, %s31
      %s162 = ssub.s32 %s20, %s27
      %s163 = sor.u32 %s161, %s162
      %p164 = scmp.eq.s32.totalorder %s163, 0
      %s166 = sadd.s32 %s165, 1
      %s167 = scalar_select %p164, %s165, %s166
      %p170 = pneg %p164
      %p171 = scmp.eq.s32.totalorder %s12, 1
      %p172 = por %p170, %p171
      %p173 = scmp.ne.s32.totalorder %s165, %s168
      %p174 = scmp.eq.s32.totalorder %s12, 0
      %p175 = por %p173, %p174
      %p176 = scmp.ne.s32.totalorder %s165, %s168
      %p177 = scmp.eq.s32.totalorder %s17, 1
      %p178 = por %p176, %p177
      %p179 = scmp.ne.s32.totalorder %s168, %s169
      %p180 = scmp.eq.s32.totalorder %s17, 0
      %p181 = por %p179, %p180
      %p182 = scmp.ne.s32.totalorder %s168, %s169
      %p183 = scmp.eq.s32.totalorder %s18, 1
      %p184 = por %p182, %p183
      %p186 = scmp.ne.s32.totalorder %s169, %s185
      %p187 = scmp.eq.s32.totalorder %s18, 0
      %p188 = por %p186, %p187
      %p189 = scmp.le.s32.totalorder 1, %s12
      %p190 = scmp.lt.s32.totalorder %s12, 3
      %p191 = pnand %p189, %p190
      %p192 = pneg %p191
      // Predicated region
      $region9: #{_mesh_edge_update_impl.3} parent=5 // pred_check
        _
      $region10: #{_mesh_edge_update_impl.3} parent=5 // pred_check_branch
        %194 = sbr.rel (%p191) target = $region12
      $region11: #{_mesh_edge_update_impl.3} parent=5 // pred_region
        %s195 = ssub.s32 %s12, 1
        // Predicated region
        $region13: #{_mesh_edge_update_impl.3} parent=11 // pred_check
          %p196 = pneg %p106
        $region14: #{_mesh_edge_update_impl.3} parent=11 // pred_check_branch
          %198 = sbr.rel (%p196) target = $region16
        $region15: #{_mesh_edge_update_impl.3} parent=11 // pred_region
          %s199 = smul.u32 4, %s22
          %p200 = scmp.lt.s32.totalorder %s199, 3
          %s201 = scalar_select %p200, %s199, 3
          %s202 = smul.addr %s201, 8
          %s203 = scalar_lea.vmem %s2, %s202
          %s204 = smul.u32 4, %s22
        $region16: #{_mesh_edge_update_impl.3} parent=11 // pred_fallthru
          _
        // Predicated region
        $region17: #{_mesh_edge_update_impl.3} parent=11 // pred_check
          %p205 = pneg %p132
        $region18: #{_mesh_edge_update_impl.3} parent=11 // pred_check_branch
          %207 = sbr.rel (%p205) target = $region20
        $region19: #{_mesh_edge_update_impl.3} parent=11 // pred_region
          %s208 = smul.u32 4, %s22
          %p209 = scmp.lt.s32.totalorder %s208, 3
          %s210 = scalar_select %p209, %s208, 3
          %s211 = smul.addr %s210, 8
          %s212 = scalar_lea.vmem %s3, %s211
          %s213 = smul.u32 4, %s22
        $region20: #{_mesh_edge_update_impl.3} parent=11 // pred_fallthru
          _
        // Predicated region
        $region21: #{_mesh_edge_update_impl.3} parent=11 // pred_check
          %p214 = pneg %p153
        $region22: #{_mesh_edge_update_impl.3} parent=11 // pred_check_branch
          %216 = sbr.rel (%p214) target = $region24
        $region23: #{_mesh_edge_update_impl.3} parent=11 // pred_region
          %218 = vsyncadd [#allocation3], 0
          %s220 = sshll.u32 %s4, 4
          %s221 = int_to_ptr.vmem [resolvable:$true] %s220
          %223 = dma.vmem_to_smem %s221, 32, [#allocation2], [#allocation3]
        $region24: #{_mesh_edge_update_impl.3} parent=11 // pred_fallthru
          _
      $region12: #{_mesh_edge_update_impl.3} parent=5 // pred_fallthru
        _
      %p224 = scmp.lt.s32.totalorder %s12, 2
      // Predicated region
      $region25: #{_mesh_edge_update_impl.3} parent=5 // pred_check
        %p225 = pneg %p224
      $region26: #{_mesh_edge_update_impl.3} parent=5 // pred_check_branch
        %227 = sbr.rel (%p225) target = $region28
      $region27: #{_mesh_edge_update_impl.3} parent=5 // pred_region
        // Predicated region
        $region29: #{_mesh_edge_update_impl.3} parent=27 // pred_check
          %p228 = pneg %p46
        $region30: #{_mesh_edge_update_impl.3} parent=27 // pred_check_branch
          %230 = sbr.rel (%p228) target = $region32
        $region31: #{_mesh_edge_update_impl.3} parent=27 // pred_region
          %s231 = smul.u32 4, %s20
          %p232 = scmp.lt.s32.totalorder %s19, 1
          %s233 = scalar_select %p232, %s19, 1
          %p234 = scmp.lt.s32.totalorder %s231, 3
          %s235 = scalar_select %p234, %s231, 3
          %s236 = smul.addr %s233, 4
          %s237 = sadd.s32 %s235, %s236
          %s238 = smul.addr %s237, 4
          %s239 = scalar_lea.vmem %s0, %s238
          %s240 = smul.u32 4, %s20
        $region32: #{_mesh_edge_update_impl.3} parent=27 // pred_fallthru
          _
        // Predicated region
        $region33: #{_mesh_edge_update_impl.3} parent=27 // pred_check
          %p241 = pneg %p74
        $region34: #{_mesh_edge_update_impl.3} parent=27 // pred_check_branch
          %243 = sbr.rel (%p241) target = $region36
        $region35: #{_mesh_edge_update_impl.3} parent=27 // pred_region
          %s244 = smul.u32 4, %s20
          %p245 = scmp.lt.s32.totalorder %s19, 1
          %s246 = scalar_select %p245, %s19, 1
          %p247 = scmp.lt.s32.totalorder %s244, 3
          %s248 = scalar_select %p247, %s244, 3
          %s249 = smul.addr %s246, 4
          %s250 = sadd.s32 %s248, %s249
          %s251 = smul.addr %s250, 8
          %s252 = scalar_lea.vmem %s1, %s251
          %s253 = smul.u32 4, %s20
        $region36: #{_mesh_edge_update_impl.3} parent=27 // pred_fallthru
          _
      $region28: #{_mesh_edge_update_impl.3} parent=5 // pred_fallthru
        _
      %p254 = scmp.le.s32.totalorder 1, %s12
      %p255 = scmp.lt.s32.totalorder %s12, 3
      %p256 = pnand %p254, %p255
      %p257 = pneg %p256
      // Predicated region
      $region37: #{_mesh_edge_update_impl.3} parent=5 // pred_check
        _
      $region38: #{_mesh_edge_update_impl.3} parent=5 // pred_check_branch
        %259 = sbr.rel (%p256) target = $region40
      $region39: #{_mesh_edge_update_impl.3} parent=5 // pred_region
        %s260 = ssub.s32 %s12, 1
        // Predicated region
        $region41: #{_mesh_edge_update_impl.3} parent=39 // pred_check
          %p261 = pneg %p153
        $region42: #{_mesh_edge_update_impl.3} parent=39 // pred_check_branch
          %263 = sbr.rel (%p261) target = $region44
        $region43: #{_mesh_edge_update_impl.3} parent=39 // pred_region
          %265 = dma.done [#allocation3], 32
        $region44: #{_mesh_edge_update_impl.3} parent=39 // pred_fallthru
          _
        %266 = sfence
        %s267 = smul.u32 4, %s22
        %p268 = scmp.lt.s32.totalorder %s21, 1
        %s269 = scalar_select %p268, %s21, 1
        %p270 = scmp.lt.s32.totalorder %s267, 3
        %s271 = scalar_select %p270, %s267, 3
        %s272 = smul.addr %s269, 4
        %s273 = sadd.s32 %s271, %s272
        %s274 = smul.addr %s273, 4
        %s275 = scalar_lea.vmem %s0, %s274
        %p276 = pneg %p52
        %p277 = pneg %p49
        %s278 = smul.u32 4, %s22
        %p279 = scmp.lt.s32.totalorder %s21, 1
        %s280 = scalar_select %p279, %s21, 1
        %p281 = scmp.lt.s32.totalorder %s278, 3
        %s282 = scalar_select %p281, %s278, 3
        %s283 = smul.addr %s280, 4
        %s284 = sadd.s32 %s282, %s283
        %s285 = smul.addr %s284, 8
        %s286 = scalar_lea.vmem %s1, %s285
        %p287 = pneg %p80
        %p288 = pneg %p77
        %s289 = smul.u32 4, %s22
        %p290 = scmp.lt.s32.totalorder %s289, 3
        %s291 = scalar_select %p290, %s289, 3
        %s292 = smul.addr %s291, 8
        %s293 = scalar_lea.vmem %s2, %s292
        %p294 = pneg %p106
        %p295 = pneg %p103
        %s296 = smul.u32 4, %s22
        %p297 = scmp.lt.s32.totalorder %s296, 3
        %s298 = scalar_select %p297, %s296, 3
        %s299 = smul.addr %s298, 8
        %s300 = scalar_lea.vmem %s3, %s299
        %p301 = pneg %p132
        %p302 = pneg %p129
        %p303 = pneg %p153
        %p304 = pneg %p150
        %p305 = pneg %p181
        %p306 = pneg %p178
        %s307 = smul.u32 4, %s22
        %p308 = scmp.lt.s32.totalorder %s21, 1
        %s309 = scalar_select %p308, %s21, 1
        %p310 = scmp.lt.s32.totalorder %s307, 3
        %s311 = scalar_select %p310, %s307, 3
        %s312 = smul.addr %s309, 4
        %s313 = sadd.s32 %s311, %s312
        %s314 = smul.addr %s313, 8
        %s315 = scalar_lea.vmem %s5, %s314
        %s316 = smul.u32 4, %s22
        %p317 = scmp.lt.s32.totalorder %s21, 1
        %s318 = scalar_select %p317, %s21, 1
        %p319 = scmp.lt.s32.totalorder %s316, 3
        %s320 = scalar_select %p319, %s316, 3
        %s321 = smul.addr %s318, 4
        %s322 = sadd.s32 %s320, %s321
        %s323 = smul.addr %s322, 4
        %s324 = scalar_lea.vmem %s0, %s323
        %s325 = smul.u32 4, %s22
        %s326 = smul.u32 4, %s22
        %p327 = scmp.lt.s32.totalorder %s21, 1
        %s328 = scalar_select %p327, %s21, 1
        %p329 = scmp.lt.s32.totalorder %s326, 3
        %s330 = scalar_select %p329, %s326, 3
        %s331 = smul.addr %s328, 4
        %s332 = sadd.s32 %s330, %s331
        %s333 = smul.addr %s332, 8
        %s334 = scalar_lea.vmem %s1, %s333
        %s335 = smul.u32 4, %s22
        %s336 = smul.u32 4, %s22
        %p337 = scmp.lt.s32.totalorder %s336, 3
        %s338 = scalar_select %p337, %s336, 3
        %s339 = smul.addr %s338, 8
        %s340 = scalar_lea.vmem %s2, %s339
        %s341 = smul.u32 4, %s22
        %s342 = smul.u32 4, %s22
        %p343 = scmp.lt.s32.totalorder %s342, 3
        %s344 = scalar_select %p343, %s342, 3
        %s345 = smul.addr %s344, 8
        %s346 = scalar_lea.vmem %s3, %s345
        %s347 = smul.u32 4, %s22
        %s348 = smul.u32 4, %s22
        %p349 = scmp.lt.s32.totalorder %s21, 1
        %s350 = scalar_select %p349, %s21, 1
        %p351 = scmp.lt.s32.totalorder %s348, 3
        %s352 = scalar_select %p351, %s348, 3
        %s353 = smul.addr %s350, 4
        %s354 = sadd.s32 %s352, %s353
        %s355 = smul.addr %s354, 8
        %s356 = scalar_lea.vmem %s5, %s355
        %s357 = smul.u32 4, %s22
        %s358 = smul.u32 %s21, 128
        %s359 = sld [smem:[#allocation2 + %s358]]
        %s360 = sadd.s32 %s358, 1
        %s361 = sld [smem:[#allocation2 + %s360]]
        %v362 = vld [vmem:[%s324] sm:$0xf]
        %v363 = vld [vmem:[%s324 + $0x4] sm:$0xf]
        %v364 = vld [vmem:[%s324 + $0x8] sm:$0xf]
        %v365 = vld [vmem:[%s324 + $0xc] sm:$0xf]
        %v366 = vunpack.c.l.bf16 %v362
        %v367 = vunpack.c.l.bf16 %v363
        %v368 = vunpack.c.l.bf16 %v364
        %v369 = vunpack.c.l.bf16 %v365
        %v370 = vld [vmem:[%s334] sm:$0xff]
        %v371 = vld [vmem:[%s334 + $0x8] sm:$0xff]
        %v372 = vld [vmem:[%s334 + $0x10] sm:$0xff]
        %v373 = vld [vmem:[%s334 + $0x18] sm:$0xff]
        %v374 = vstv %s359
        %v375 = vsub.f32 %v366, %v374
        %v376 = vsub.f32 %v367, %v374
        %v377 = vsub.f32 %v368, %v374
        %v378 = vsub.f32 %v369, %v374
        %v379 = vstv %s361
        %v380 = vmul.f32 %v375, %v379
        %v381 = vmul.f32 %v376, %v379
        %v382 = vmul.f32 %v377, %v379
        %v383 = vmul.f32 %v378, %v379
        %v384 = vld [vmem:[%s340] sm:$0xff]
        %v385 = vld [vmem:[%s340 + $0x8] sm:$0xff]
        %v386 = vld [vmem:[%s340 + $0x10] sm:$0xff]
        %v387 = vld [vmem:[%s340 + $0x18] sm:$0xff]
        %v388 = vmul.f32 %v380, %v384
        %v389 = vmul.f32 %v381, %v385
        %v390 = vmul.f32 %v382, %v386
        %v391 = vmul.f32 %v383, %v387
        %v392 = vadd.f32 %v370, %v388
        %v393 = vadd.f32 %v371, %v389
        %v394 = vadd.f32 %v372, %v390
        %v395 = vadd.f32 %v373, %v391
        %v396 = vld [vmem:[%s346] sm:$0xff]
        %v397 = vld [vmem:[%s346 + $0x8] sm:$0xff]
        %v398 = vld [vmem:[%s346 + $0x10] sm:$0xff]
        %v399 = vld [vmem:[%s346 + $0x18] sm:$0xff]
        %v400 = vadd.f32 %v392, %v396
        %v401 = vadd.f32 %v393, %v397
        %v402 = vadd.f32 %v394, %v398
        %v403 = vadd.f32 %v395, %v399
        %404 = vst [vmem:[%s356] sm:$0xff] %v400
        %405 = vst [vmem:[%s356 + $0x8] sm:$0xff] %v401
        %406 = vst [vmem:[%s356 + $0x10] sm:$0xff] %v402
        %407 = vst [vmem:[%s356 + $0x18] sm:$0xff] %v403
        %s408 = smul.u32 4, %s22
        %p409 = scmp.lt.s32.totalorder %s21, 1
        %s410 = scalar_select %p409, %s21, 1
        %p411 = scmp.lt.s32.totalorder %s408, 3
        %s412 = scalar_select %p411, %s408, 3
        %s413 = smul.addr %s410, 4
        %s414 = sadd.s32 %s412, %s413
        %s415 = smul.addr %s414, 8
        %s416 = scalar_lea.vmem %s5, %s415
        // Predicated region
        $region45: #{_mesh_edge_update_impl.3} parent=39 // pred_check
          %p417 = pneg %p178
        $region46: #{_mesh_edge_update_impl.3} parent=39 // pred_check_branch
          %419 = sbr.rel (%p417) target = $region48
        $region47: #{_mesh_edge_update_impl.3} parent=39 // pred_region
          %s420 = smul.u32 4, %s22
        $region48: #{_mesh_edge_update_impl.3} parent=39 // pred_fallthru
          _
      $region40: #{_mesh_edge_update_impl.3} parent=5 // pred_fallthru
        _
      %p421 = scmp.le.s32.totalorder 2, %s12
      // Predicated region
      $region49: #{_mesh_edge_update_impl.3} parent=5 // pred_check
        %p422 = pneg %p421
      $region50: #{_mesh_edge_update_impl.3} parent=5 // pred_check_branch
        %424 = sbr.rel (%p422) target = $region52
      $region51: #{_mesh_edge_update_impl.3} parent=5 // pred_region
        %s425 = ssub.s32 %s12, 2
        // Predicated region
        $region53: #{_mesh_edge_update_impl.3} parent=51 // pred_check
          %p426 = pneg %p184
        $region54: #{_mesh_edge_update_impl.3} parent=51 // pred_check_branch
          %428 = sbr.rel (%p426) target = $region56
        $region55: #{_mesh_edge_update_impl.3} parent=51 // pred_region
          %s429 = smul.u32 4, %s24
          %p430 = scmp.lt.s32.totalorder %s23, 1
          %s431 = scalar_select %p430, %s23, 1
          %p432 = scmp.lt.s32.totalorder %s429, 3
          %s433 = scalar_select %p432, %s429, 3
          %s434 = smul.addr %s431, 4
          %s435 = sadd.s32 %s433, %s434
          %s436 = smul.addr %s435, 8
          %s437 = scalar_lea.vmem %s5, %s436
        $region56: #{_mesh_edge_update_impl.3} parent=51 // pred_fallthru
          _
      $region52: #{_mesh_edge_update_impl.3} parent=5 // pred_fallthru
        _
    $region6: #{_mesh_edge_update_impl.3} parent=1 // loop_footer
      %s16 = sadd.s32 1, %s12
    $region7: #{_mesh_edge_update_impl.3} parent=1 // loop_footer_branch
      %11 = sbr.rel target = $region3
    $region8: #{_mesh_edge_update_impl.3} parent=1 // loop_exit
      _
    %438 = vsyncpa [#allocation3], 1
    %s439 = scalar_lea.sflag [#allocation3], 1
    %440 = vsyncpa %s439, 1

// kernel: _mesh_edge_update_impl.2
$region0: #{_mesh_edge_update_impl.2}
  #allocation0 [shape = 'u32[]', space=smem, size = 0x4, offset = 0x4, fixed_abs, tag = 'smem constant byte address 0x4 - core index']
  #allocation1 [shape = 'u32[72,128]{1,0:T(1,128)}', space=vmem, size = 0x9000, scoped, tag = 'internal scratch']
  %s0 = inlined_call_operand.vmem [shape: bf16[2,128,96], index: 0, kind: input, shape index: {}]
  %s1 = inlined_call_operand.vmem [shape: bf16[96,512], index: 1, kind: input, shape index: {}]
  %s2 = inlined_call_operand.vmem [shape: f32[1,512], index: 2, kind: input, shape index: {}]
  %s3 = inlined_call_operand.vmem [shape: bf16[512,256], index: 3, kind: input, shape index: {}]
  %s4 = inlined_call_operand.vmem [shape: f32[1,256], index: 4, kind: input, shape index: {}]
  %s5 = inlined_call_operand.vmem [shape: bf16[256,32], index: 5, kind: input, shape index: {}]
  %s6 = inlined_call_operand.vmem [shape: f32[1,32], index: 6, kind: input, shape index: {}]
  %s7 = inlined_call_operand.vmem [shape: bf16[2,128,32], index: 7, kind: output, shape index: {0}]
  %s8 = inlined_call_operand.vmem [shape: f32[2,128,1], index: 8, kind: output, shape index: {1}]
  %s9 = inlined_call_operand.vmem [shape: f32[2,128,1], index: 9, kind: output, shape index: {2}]
  %10 = xla_tuple %s7, %s8, %s9
  %s11 = sld [smem:[#allocation0]]
  $region77: #{_mesh_edge_update_impl.2} parent=0
    _
  %s13 = ssub.s32 1, %s11
  %s14 = scalar_select 0, %s13, %s11
  loop: start=0, step=1, limit=4
  $region2: #{_mesh_edge_update_impl.2} parent=0 // loop_pre_header
    _
  $region3: #{_mesh_edge_update_impl.2} parent=0 // loop_header
    %s16 = sphi 0, %s20
    %p17 = scmp.ge.s32.totalorder %s16, 4
    %s23 = sphi 0, %s35
    %s24 = sphi 0, %s31
    %s25 = sphi 0, %s23
    %s26 = sphi 0, %s24
    %s27 = sphi 0, %s25
    %s28 = sphi 0, %s26
    %s40 = sphi 0, %s42
    %s43 = sphi 0, %s40
    %s44 = sphi 0, %s43
    %s60 = sphi 0, %s44
    %s64 = sphi 0, %s64
    %s66 = sphi 0, %s64
    %s67 = sphi 0, %s66
    %s81 = sphi 0, %s67
    %s85 = sphi 0, %s85
    %s87 = sphi 0, %s85
    %s88 = sphi 0, %s87
    %s102 = sphi 0, %s88
    %s106 = sphi 0, %s106
    %s108 = sphi 0, %s106
    %s109 = sphi 0, %s108
    %s123 = sphi 0, %s109
    %s127 = sphi 0, %s127
    %s129 = sphi 0, %s127
    %s130 = sphi 0, %s129
    %s144 = sphi 0, %s130
    %s148 = sphi 0, %s148
    %s150 = sphi 0, %s148
    %s151 = sphi 0, %s150
    %s165 = sphi 0, %s151
    %s169 = sphi 0, %s169
    %s171 = sphi 0, %s169
    %s172 = sphi 0, %s171
    %s186 = sphi 0, %s172
    %s194 = sphi 0, %s196
    %s197 = sphi 0, %s194
    %s198 = sphi 0, %s197
    %s214 = sphi 0, %s198
    %s222 = sphi 0, %s224
    %s225 = sphi 0, %s222
    %s226 = sphi 0, %s225
    %s242 = sphi 0, %s226
    %s250 = sphi 0, %s252
    %s253 = sphi 0, %s250
    %s254 = sphi 0, %s253
    %s270 = sphi 0, %s254
  $region4: #{_mesh_edge_update_impl.2} parent=0 // loop_header_branch
    %19 = sbr.rel (%p17) target = $region8
  $region5: #{_mesh_edge_update_impl.2} parent=0 // loop_body
    %s21 = ssub.s32 %s16, 1
    %s22 = ssub.s32 %s16, 2
    %s29 = sadd.s32 1, %s24
    %p30 = scmp.ge.s32.totalorder %s29, 1
    %s31 = scalar_select %p30, 0, %s29
    %s32 = sadd.s32 1, %s23
    %s33 = scalar_select %p30, %s32, %s23
    %p34 = scmp.ge.s32.totalorder %s33, 2
    %s35 = scalar_select %p34, 0, %s33
    %s36 = ssub.s32 %s23, %s35
    %s37 = ssub.s32 %s24, %s31
    %s38 = sor.u32 %s36, %s37
    %p39 = scmp.eq.s32.totalorder %s38, 0
    %s41 = sadd.s32 %s40, 1
    %s42 = scalar_select %p39, %s40, %s41
    %p45 = pneg %p39
    %p46 = scmp.eq.s32.totalorder %s16, 1
    %p47 = por %p45, %p46
    %p48 = scmp.ne.s32.totalorder %s40, %s43
    %p49 = scmp.eq.s32.totalorder %s16, 0
    %p50 = por %p48, %p49
    %p51 = scmp.ne.s32.totalorder %s40, %s43
    %p52 = scmp.eq.s32.totalorder %s21, 1
    %p53 = por %p51, %p52
    %p54 = scmp.ne.s32.totalorder %s43, %s44
    %p55 = scmp.eq.s32.totalorder %s21, 0
    %p56 = por %p54, %p55
    %p57 = scmp.ne.s32.totalorder %s43, %s44
    %p58 = scmp.eq.s32.totalorder %s22, 1
    %p59 = por %p57, %p58
    %p61 = scmp.ne.s32.totalorder %s44, %s60
    %p62 = scmp.eq.s32.totalorder %s22, 0
    %p63 = por %p61, %p62
    %s65 = sadd.s32 %s64, 1
    %p68 = scmp.eq.s32.totalorder %s16, 1
    %p69 = scmp.ne.s32.totalorder %s64, %s66
    %p70 = scmp.eq.s32.totalorder %s16, 0
    %p71 = por %p69, %p70
    %p72 = scmp.ne.s32.totalorder %s64, %s66
    %p73 = scmp.eq.s32.totalorder %s21, 1
    %p74 = por %p72, %p73
    %p75 = scmp.ne.s32.totalorder %s66, %s67
    %p76 = scmp.eq.s32.totalorder %s21, 0
    %p77 = por %p75, %p76
    %p78 = scmp.ne.s32.totalorder %s66, %s67
    %p79 = scmp.eq.s32.totalorder %s22, 1
    %p80 = por %p78, %p79
    %p82 = scmp.ne.s32.totalorder %s67, %s81
    %p83 = scmp.eq.s32.totalorder %s22, 0
    %p84 = por %p82, %p83
    %s86 = sadd.s32 %s85, 1
    %p89 = scmp.eq.s32.totalorder %s16, 1
    %p90 = scmp.ne.s32.totalorder %s85, %s87
    %p91 = scmp.eq.s32.totalorder %s16, 0
    %p92 = por %p90, %p91
    %p93 = scmp.ne.s32.totalorder %s85, %s87
    %p94 = scmp.eq.s32.totalorder %s21, 1
    %p95 = por %p93, %p94
    %p96 = scmp.ne.s32.totalorder %s87, %s88
    %p97 = scmp.eq.s32.totalorder %s21, 0
    %p98 = por %p96, %p97
    %p99 = scmp.ne.s32.totalorder %s87, %s88
    %p100 = scmp.eq.s32.totalorder %s22, 1
    %p101 = por %p99, %p100
    %p103 = scmp.ne.s32.totalorder %s88, %s102
    %p104 = scmp.eq.s32.totalorder %s22, 0
    %p105 = por %p103, %p104
    %s107 = sadd.s32 %s106, 1
    %p110 = scmp.eq.s32.totalorder %s16, 1
    %p111 = scmp.ne.s32.totalorder %s106, %s108
    %p112 = scmp.eq.s32.totalorder %s16, 0
    %p113 = por %p111, %p112
    %p114 = scmp.ne.s32.totalorder %s106, %s108
    %p115 = scmp.eq.s32.totalorder %s21, 1
    %p116 = por %p114, %p115
    %p117 = scmp.ne.s32.totalorder %s108, %s109
    %p118 = scmp.eq.s32.totalorder %s21, 0
    %p119 = por %p117, %p118
    %p120 = scmp.ne.s32.totalorder %s108, %s109
    %p121 = scmp.eq.s32.totalorder %s22, 1
    %p122 = por %p120, %p121
    %p124 = scmp.ne.s32.totalorder %s109, %s123
    %p125 = scmp.eq.s32.totalorder %s22, 0
    %p126 = por %p124, %p125
    %s128 = sadd.s32 %s127, 1
    %p131 = scmp.eq.s32.totalorder %s16, 1
    %p132 = scmp.ne.s32.totalorder %s127, %s129
    %p133 = scmp.eq.s32.totalorder %s16, 0
    %p134 = por %p132, %p133
    %p135 = scmp.ne.s32.totalorder %s127, %s129
    %p136 = scmp.eq.s32.totalorder %s21, 1
    %p137 = por %p135, %p136
    %p138 = scmp.ne.s32.totalorder %s129, %s130
    %p139 = scmp.eq.s32.totalorder %s21, 0
    %p140 = por %p138, %p139
    %p141 = scmp.ne.s32.totalorder %s129, %s130
    %p142 = scmp.eq.s32.totalorder %s22, 1
    %p143 = por %p141, %p142
    %p145 = scmp.ne.s32.totalorder %s130, %s144
    %p146 = scmp.eq.s32.totalorder %s22, 0
    %p147 = por %p145, %p146
    %s149 = sadd.s32 %s148, 1
    %p152 = scmp.eq.s32.totalorder %s16, 1
    %p153 = scmp.ne.s32.totalorder %s148, %s150
    %p154 = scmp.eq.s32.totalorder %s16, 0
    %p155 = por %p153, %p154
    %p156 = scmp.ne.s32.totalorder %s148, %s150
    %p157 = scmp.eq.s32.totalorder %s21, 1
    %p158 = por %p156, %p157
    %p159 = scmp.ne.s32.totalorder %s150, %s151
    %p160 = scmp.eq.s32.totalorder %s21, 0
    %p161 = por %p159, %p160
    %p162 = scmp.ne.s32.totalorder %s150, %s151
    %p163 = scmp.eq.s32.totalorder %s22, 1
    %p164 = por %p162, %p163
    %p166 = scmp.ne.s32.totalorder %s151, %s165
    %p167 = scmp.eq.s32.totalorder %s22, 0
    %p168 = por %p166, %p167
    %s170 = sadd.s32 %s169, 1
    %p173 = scmp.eq.s32.totalorder %s16, 1
    %p174 = scmp.ne.s32.totalorder %s169, %s171
    %p175 = scmp.eq.s32.totalorder %s16, 0
    %p176 = por %p174, %p175
    %p177 = scmp.ne.s32.totalorder %s169, %s171
    %p178 = scmp.eq.s32.totalorder %s21, 1
    %p179 = por %p177, %p178
    %p180 = scmp.ne.s32.totalorder %s171, %s172
    %p181 = scmp.eq.s32.totalorder %s21, 0
    %p182 = por %p180, %p181
    %p183 = scmp.ne.s32.totalorder %s171, %s172
    %p184 = scmp.eq.s32.totalorder %s22, 1
    %p185 = por %p183, %p184
    %p187 = scmp.ne.s32.totalorder %s172, %s186
    %p188 = scmp.eq.s32.totalorder %s22, 0
    %p189 = por %p187, %p188
    %s190 = ssub.s32 %s23, %s35
    %s191 = ssub.s32 %s24, %s31
    %s192 = sor.u32 %s190, %s191
    %p193 = scmp.eq.s32.totalorder %s192, 0
    %s195 = sadd.s32 %s194, 1
    %s196 = scalar_select %p193, %s194, %s195
    %p199 = pneg %p193
    %p200 = scmp.eq.s32.totalorder %s16, 1
    %p201 = por %p199, %p200
    %p202 = scmp.ne.s32.totalorder %s194, %s197
    %p203 = scmp.eq.s32.totalorder %s16, 0
    %p204 = por %p202, %p203
    %p205 = scmp.ne.s32.totalorder %s194, %s197
    %p206 = scmp.eq.s32.totalorder %s21, 1
    %p207 = por %p205, %p206
    %p208 = scmp.ne.s32.totalorder %s197, %s198
    %p209 = scmp.eq.s32.totalorder %s21, 0
    %p210 = por %p208, %p209
    %p211 = scmp.ne.s32.totalorder %s197, %s198
    %p212 = scmp.eq.s32.totalorder %s22, 1
    %p213 = por %p211, %p212
    %p215 = scmp.ne.s32.totalorder %s198, %s214
    %p216 = scmp.eq.s32.totalorder %s22, 0
    %p217 = por %p215, %p216
    %s218 = ssub.s32 %s23, %s35
    %s219 = ssub.s32 %s24, %s31
    %s220 = sor.u32 %s218, %s219
    %p221 = scmp.eq.s32.totalorder %s220, 0
    %s223 = sadd.s32 %s222, 1
    %s224 = scalar_select %p221, %s222, %s223
    %p227 = pneg %p221
    %p228 = scmp.eq.s32.totalorder %s16, 1
    %p229 = por %p227, %p228
    %p230 = scmp.ne.s32.totalorder %s222, %s225
    %p231 = scmp.eq.s32.totalorder %s16, 0
    %p232 = por %p230, %p231
    %p233 = scmp.ne.s32.totalorder %s222, %s225
    %p234 = scmp.eq.s32.totalorder %s21, 1
    %p235 = por %p233, %p234
    %p236 = scmp.ne.s32.totalorder %s225, %s226
    %p237 = scmp.eq.s32.totalorder %s21, 0
    %p238 = por %p236, %p237
    %p239 = scmp.ne.s32.totalorder %s225, %s226
    %p240 = scmp.eq.s32.totalorder %s22, 1
    %p241 = por %p239, %p240
    %p243 = scmp.ne.s32.totalorder %s226, %s242
    %p244 = scmp.eq.s32.totalorder %s22, 0
    %p245 = por %p243, %p244
    %s246 = ssub.s32 %s23, %s35
    %s247 = ssub.s32 %s24, %s31
    %s248 = sor.u32 %s246, %s247
    %p249 = scmp.eq.s32.totalorder %s248, 0
    %s251 = sadd.s32 %s250, 1
    %s252 = scalar_select %p249, %s250, %s251
    %p255 = pneg %p249
    %p256 = scmp.eq.s32.totalorder %s16, 1
    %p257 = por %p255, %p256
    %p258 = scmp.ne.s32.totalorder %s250, %s253
    %p259 = scmp.eq.s32.totalorder %s16, 0
    %p260 = por %p258, %p259
    %p261 = scmp.ne.s32.totalorder %s250, %s253
    %p262 = scmp.eq.s32.totalorder %s21, 1
    %p263 = por %p261, %p262
    %p264 = scmp.ne.s32.totalorder %s253, %s254
    %p265 = scmp.eq.s32.totalorder %s21, 0
    %p266 = por %p264, %p265
    %p267 = scmp.ne.s32.totalorder %s253, %s254
    %p268 = scmp.eq.s32.totalorder %s22, 1
    %p269 = por %p267, %p268
    %p271 = scmp.ne.s32.totalorder %s254, %s270
    %p272 = scmp.eq.s32.totalorder %s22, 0
    %p273 = por %p271, %p272
    %p274 = scmp.le.s32.totalorder 1, %s16
    %p275 = scmp.lt.s32.totalorder %s16, 3
    %p276 = pnand %p274, %p275
    %p277 = pneg %p276
    // Predicated region
    $region9: #{_mesh_edge_update_impl.2} parent=5 // pred_check
      _
    $region10: #{_mesh_edge_update_impl.2} parent=5 // pred_check_branch
      %279 = sbr.rel (%p276) target = $region12
    $region11: #{_mesh_edge_update_impl.2} parent=5 // pred_region
      %s280 = ssub.s32 %s16, 1
      // Predicated region
      $region13: #{_mesh_edge_update_impl.2} parent=11 // pred_check
        %p281 = pneg %p77
      $region14: #{_mesh_edge_update_impl.2} parent=11 // pred_check_branch
        %283 = sbr.rel (%p281) target = $region16
      $region15: #{_mesh_edge_update_impl.2} parent=11 // pred_region
        _
      $region16: #{_mesh_edge_update_impl.2} parent=11 // pred_fallthru
        _
      // Predicated region
      $region17: #{_mesh_edge_update_impl.2} parent=11 // pred_check
        %p284 = pneg %p98
      $region18: #{_mesh_edge_update_impl.2} parent=11 // pred_check_branch
        %286 = sbr.rel (%p284) target = $region20
      $region19: #{_mesh_edge_update_impl.2} parent=11 // pred_region
        _
      $region20: #{_mesh_edge_update_impl.2} parent=11 // pred_fallthru
        _
      // Predicated region
      $region21: #{_mesh_edge_update_impl.2} parent=11 // pred_check
        %p287 = pneg %p119
      $region22: #{_mesh_edge_update_impl.2} parent=11 // pred_check_branch
        %289 = sbr.rel (%p287) target = $region24
      $region23: #{_mesh_edge_update_impl.2} parent=11 // pred_region
        _
      $region24: #{_mesh_edge_update_impl.2} parent=11 // pred_fallthru
        _
      // Predicated region
      $region25: #{_mesh_edge_update_impl.2} parent=11 // pred_check
        %p290 = pneg %p140
      $region26: #{_mesh_edge_update_impl.2} parent=11 // pred_check_branch
        %292 = sbr.rel (%p290) target = $region28
      $region27: #{_mesh_edge_update_impl.2} parent=11 // pred_region
        _
      $region28: #{_mesh_edge_update_impl.2} parent=11 // pred_fallthru
        _
      // Predicated region
      $region29: #{_mesh_edge_update_impl.2} parent=11 // pred_check
        %p293 = pneg %p161
      $region30: #{_mesh_edge_update_impl.2} parent=11 // pred_check_branch
        %295 = sbr.rel (%p293) target = $region32
      $region31: #{_mesh_edge_update_impl.2} parent=11 // pred_region
        _
      $region32: #{_mesh_edge_update_impl.2} parent=11 // pred_fallthru
        _
      // Predicated region
      $region33: #{_mesh_edge_update_impl.2} parent=11 // pred_check
        %p296 = pneg %p182
      $region34: #{_mesh_edge_update_impl.2} parent=11 // pred_check_branch
        %298 = sbr.rel (%p296) target = $region36
      $region35: #{_mesh_edge_update_impl.2} parent=11 // pred_region
        _
      $region36: #{_mesh_edge_update_impl.2} parent=11 // pred_fallthru
        _
    $region12: #{_mesh_edge_update_impl.2} parent=5 // pred_fallthru
      _
    %p299 = scmp.lt.s32.totalorder %s16, 2
    // Predicated region
    $region37: #{_mesh_edge_update_impl.2} parent=5 // pred_check
      %p300 = pneg %p299
    $region38: #{_mesh_edge_update_impl.2} parent=5 // pred_check_branch
      %302 = sbr.rel (%p300) target = $region40
    $region39: #{_mesh_edge_update_impl.2} parent=5 // pred_region
      // Predicated region
      $region41: #{_mesh_edge_update_impl.2} parent=39 // pred_check
        %p303 = pneg %p50
      $region42: #{_mesh_edge_update_impl.2} parent=39 // pred_check_branch
        %305 = sbr.rel (%p303) target = $region44
      $region43: #{_mesh_edge_update_impl.2} parent=39 // pred_region
        %s306 = smul.u32 16, %s24
        %p307 = scmp.lt.s32.totalorder %s23, 1
        %s308 = scalar_select %p307, %s23, 1
        %p309 = scmp.lt.s32.totalorder %s306, 15
        %s310 = scalar_select %p309, %s306, 15
        %s311 = smul.addr %s308, 16
        %s312 = sadd.s32 %s310, %s311
        %s313 = smul.addr %s312, 4
        %s314 = scalar_lea.vmem %s0, %s313
        %s315 = smul.u32 16, %s24
      $region44: #{_mesh_edge_update_impl.2} parent=39 // pred_fallthru
        _
    $region40: #{_mesh_edge_update_impl.2} parent=5 // pred_fallthru
      _
    %p316 = scmp.le.s32.totalorder 1, %s16
    %p317 = scmp.lt.s32.totalorder %s16, 3
    %p318 = pnand %p316, %p317
    %p319 = pneg %p318
    // Predicated region
    $region45: #{_mesh_edge_update_impl.2} parent=5 // pred_check
      _
    $region46: #{_mesh_edge_update_impl.2} parent=5 // pred_check_branch
      %321 = sbr.rel (%p318) target = $region48
    $region47: #{_mesh_edge_update_impl.2} parent=5 // pred_region
      %s322 = ssub.s32 %s16, 1
      %s323 = smul.u32 16, %s26
      %p324 = scmp.lt.s32.totalorder %s25, 1
      %s325 = scalar_select %p324, %s25, 1
      %p326 = scmp.lt.s32.totalorder %s323, 15
      %s327 = scalar_select %p326, %s323, 15
      %s328 = smul.addr %s325, 16
      %s329 = sadd.s32 %s327, %s328
      %s330 = smul.addr %s329, 4
      %s331 = scalar_lea.vmem %s0, %s330
      %p332 = pneg %p56
      %p333 = pneg %p53
      %p334 = pneg %p77
      %p335 = pneg %p74
      %p336 = pneg %p98
      %p337 = pneg %p95
      %p338 = pneg %p119
      %p339 = pneg %p116
      %p340 = pneg %p140
      %p341 = pneg %p137
      %p342 = pneg %p161
      %p343 = pneg %p158
      %p344 = pneg %p182
      %p345 = pneg %p179
      %p346 = pneg %p210
      %p347 = pneg %p207
      %s348 = smul.u32 16, %s26
      %p349 = scmp.lt.s32.totalorder %s25, 1
      %s350 = scalar_select %p349, %s25, 1
      %p351 = scmp.lt.s32.totalorder %s348, 15
      %s352 = scalar_select %p351, %s348, 15
      %s353 = smul.addr %s350, 16
      %s354 = sadd.s32 %s352, %s353
      %s355 = smul.addr %s354, 4
      %s356 = scalar_lea.vmem %s7, %s355
      %p357 = pneg %p238
      %p358 = pneg %p235
      %s359 = smul.u32 16, %s26
      %p360 = scmp.lt.s32.totalorder %s25, 1
      %s361 = scalar_select %p360, %s25, 1
      %p362 = scmp.lt.s32.totalorder %s359, 15
      %s363 = scalar_select %p362, %s359, 15
      %s364 = smul.addr %s361, 16
      %s365 = sadd.s32 %s363, %s364
      %s366 = smul.addr %s365, 8
      %s367 = scalar_lea.vmem %s8, %s366
      %p368 = pneg %p266
      %p369 = pneg %p263
      %s370 = smul.u32 16, %s26
      %p371 = scmp.lt.s32.totalorder %s25, 1
      %s372 = scalar_select %p371, %s25, 1
      %p373 = scmp.lt.s32.totalorder %s370, 15
      %s374 = scalar_select %p373, %s370, 15
      %s375 = smul.addr %s372, 16
      %s376 = sadd.s32 %s374, %s375
      %s377 = smul.addr %s376, 8
      %s378 = scalar_lea.vmem %s9, %s377
      %s379 = smul.u32 16, %s26
      %p380 = scmp.lt.s32.totalorder %s25, 1
      %s381 = scalar_select %p380, %s25, 1
      %p382 = scmp.lt.s32.totalorder %s379, 15
      %s383 = scalar_select %p382, %s379, 15
      %s384 = smul.addr %s381, 16
      %s385 = sadd.s32 %s383, %s384
      %s386 = smul.addr %s385, 4
      %s387 = scalar_lea.vmem %s0, %s386
      %s388 = smul.u32 16, %s26
      %s389 = smul.u32 16, %s26
      %p390 = scmp.lt.s32.totalorder %s25, 1
      %s391 = scalar_select %p390, %s25, 1
      %p392 = scmp.lt.s32.totalorder %s389, 15
      %s393 = scalar_select %p392, %s389, 15
      %s394 = smul.addr %s391, 16
      %s395 = sadd.s32 %s393, %s394
      %s396 = smul.addr %s395, 4
      %s397 = scalar_lea.vmem %s7, %s396
      %s398 = smul.u32 16, %s26
      %s399 = smul.u32 16, %s26
      %p400 = scmp.lt.s32.totalorder %s25, 1
      %s401 = scalar_select %p400, %s25, 1
      %p402 = scmp.lt.s32.totalorder %s399, 15
      %s403 = scalar_select %p402, %s399, 15
      %s404 = smul.addr %s401, 16
      %s405 = sadd.s32 %s403, %s404
      %s406 = smul.addr %s405, 8
      %s407 = scalar_lea.vmem %s8, %s406
      %s408 = smul.u32 16, %s26
      %s409 = smul.u32 16, %s26
      %p410 = scmp.lt.s32.totalorder %s25, 1
      %s411 = scalar_select %p410, %s25, 1
      %p412 = scmp.lt.s32.totalorder %s409, 15
      %s413 = scalar_select %p412, %s409, 15
      %s414 = smul.addr %s411, 16
      %s415 = sadd.s32 %s413, %s414
      %s416 = smul.addr %s415, 8
      %s417 = scalar_lea.vmem %s9, %s416
      %s418 = smul.u32 16, %s26
      %v420 = vld [vmem:[%s387] sm:$0xf]
      %v421 = vld [vmem:[%s387 + $0x4] sm:$0xf]
      %v422 = vld [vmem:[%s387 + $0x8] sm:$0xf]
      %v423 = vld [vmem:[%s387 + $0xc] sm:$0xf]
      %v424 = vld [vmem:[%s387 + $0x10] sm:$0xf]
      %v425 = vld [vmem:[%s387 + $0x14] sm:$0xf]
      %v426 = vld [vmem:[%s387 + $0x18] sm:$0xf]
      %v427 = vld [vmem:[%s387 + $0x1c] sm:$0xf]
      %v428 = vld [vmem:[%s387 + $0x20] sm:$0xf]
      %v429 = vld [vmem:[%s387 + $0x24] sm:$0xf]
      %v430 = vld [vmem:[%s387 + $0x28] sm:$0xf]
      %v431 = vld [vmem:[%s387 + $0x2c] sm:$0xf]
      %v432 = vld [vmem:[%s387 + $0x30] sm:$0xf]
      %v433 = vld [vmem:[%s387 + $0x34] sm:$0xf]
      %v434 = vld [vmem:[%s387 + $0x38] sm:$0xf]
      %v435 = vld [vmem:[%s387 + $0x3c] sm:$0xf]
      %v436 = vld [vmem:[%s1] sm:$0xff]
      %v437 = vld [vmem:[%s1 + $0x8] sm:$0xff]
      %v438 = vld [vmem:[%s1 + $0x10] sm:$0xff]
      %v439 = vld [vmem:[%s1 + $0x18] sm:$0xff]
      %v440 = vld [vmem:[%s1 + $0x20] sm:$0xff]
      %v441 = vld [vmem:[%s1 + $0x28] sm:$0xff]
      %v442 = vld [vmem:[%s1 + $0x30] sm:$0xff]
      %v443 = vld [vmem:[%s1 + $0x38] sm:$0xff]
      %v444 = vld [vmem:[%s1 + $0x40] sm:$0xff]
      %v445 = vld [vmem:[%s1 + $0x48] sm:$0xff]
      %v446 = vld [vmem:[%s1 + $0x50] sm:$0xff]
      %v447 = vld [vmem:[%s1 + $0x58] sm:$0xff]
      %v448 = vld [vmem:[%s1 + $0x60] sm:$0xff]
      %v449 = vld [vmem:[%s1 + $0x68] sm:$0xff]
      %v450 = vld [vmem:[%s1 + $0x70] sm:$0xff]
      %v451 = vld [vmem:[%s1 + $0x78] sm:$0xff]
      %v452 = vld [vmem:[%s1 + $0x80] sm:$0xff]
      %v453 = vld [vmem:[%s1 + $0x88] sm:$0xff]
      %v454 = vld [vmem:[%s1 + $0x90] sm:$0xff]
      %v455 = vld [vmem:[%s1 + $0x98] sm:$0xff]
      %v456 = vld [vmem:[%s1 + $0xa0] sm:$0xff]
      %v457 = vld [vmem:[%s1 + $0xa8] sm:$0xff]
      %v458 = vld [vmem:[%s1 + $0xb0] sm:$0xff]
      %v459 = vld [vmem:[%s1 + $0xb8] sm:$0xff]
      %v460 = vld [vmem:[%s2] sm:$0xf]
      %v462 = vperm.slane %v460, 0
      %v463 = vperm.slane %v460, 1
      %v464 = vperm.slane %v460, 2
      %v465 = vperm.slane %v460, 3
      %v486 = vunpack.c.l.b16 %v420
      %v487 = vunpack.c.l.b16 %v421
      %v488 = vunpack.c.l.b16 %v422
      %v489 = vunpack.c.l.b16 %v423
      %v490 = vunpack.c.l.b16 %v424
      %v491 = vunpack.c.l.b16 %v425
      %v492 = vunpack.c.l.b16 %v426
      %v493 = vunpack.c.l.b16 %v427
      %v494 = vunpack.c.l.b16 %v428
      %v495 = vunpack.c.l.b16 %v429
      %v496 = vunpack.c.l.b16 %v430
      %v497 = vunpack.c.l.b16 %v431
      %v498 = vunpack.c.l.b16 %v432
      %v499 = vunpack.c.l.b16 %v433
      %v500 = vunpack.c.l.b16 %v434
      %v501 = vunpack.c.l.b16 %v435
      %v502 = vpack.c.b16 %v487, %v486
      %v503 = vpack.c.b16 %v489, %v488
      %v504 = vpack.c.b16 %v491, %v490
      %v505 = vpack.c.b16 %v493, %v492
      %v506 = vpack.c.b16 %v495, %v494
      %v507 = vpack.c.b16 %v497, %v496
      %v508 = vpack.c.b16 %v499, %v498
      %v509 = vpack.c.b16 %v501, %v500
      %v534 = vunpack.c.l.b16 %v436
      %v535 = vunpack.c.h.b16 %v436
      %v536 = vunpack.c.l.b16 %v437
      %v537 = vunpack.c.h.b16 %v437
      %v538 = vunpack.c.l.b16 %v438
      %v539 = vunpack.c.h.b16 %v438
      %v540 = vunpack.c.l.b16 %v439
      %v541 = vunpack.c.h.b16 %v439
      %v542 = vunpack.c.l.b16 %v440
      %v543 = vunpack.c.h.b16 %v440
      %v544 = vunpack.c.l.b16 %v441
      %v545 = vunpack.c.h.b16 %v441
      %v546 = vunpack.c.l.b16 %v442
      %v547 = vunpack.c.h.b16 %v442
      %v548 = vunpack.c.l.b16 %v443
      %v549 = vunpack.c.h.b16 %v443
      %v550 = vunpack.c.l.b16 %v444
      %v551 = vunpack.c.h.b16 %v444
      %v552 = vunpack.c.l.b16 %v445
      %v553 = vunpack.c.h.b16 %v445
      %v554 = vunpack.c.l.b16 %v446
      %v555 = vunpack.c.h.b16 %v446
      %v556 = vunpack.c.l.b16 %v447
      %v557 = vunpack.c.h.b16 %v447
      %v558 = vunpack.c.l.b16 %v448
      %v559 = vunpack.c.h.b16 %v448
      %v560 = vunpack.c.l.b16 %v449
      %v561 = vunpack.c.h.b16 %v449
      %v562 = vunpack.c.l.b16 %v450
      %v563 = vunpack.c.h.b16 %v450
      %v564 = vunpack.c.l.b16 %v451
      %v565 = vunpack.c.h.b16 %v451
      %v566 = vunpack.c.l.b16 %v452
      %v567 = vunpack.c.h.b16 %v452
      %v568 = vunpack.c.l.b16 %v453
      %v569 = vunpack.c.h.b16 %v453
      %v570 = vunpack.c.l.b16 %v454
      %v571 = vunpack.c.h.b16 %v454
      %v572 = vunpack.c.l.b16 %v455
      %v573 = vunpack.c.h.b16 %v455
      %v574 = vunpack.c.l.b16 %v456
      %v575 = vunpack.c.h.b16 %v456
      %v576 = vunpack.c.l.b16 %v457
      %v577 = vunpack.c.h.b16 %v457
      %v578 = vunpack.c.l.b16 %v458
      %v579 = vunpack.c.h.b16 %v458
      %v580 = vunpack.c.l.b16 %v459
      %v581 = vunpack.c.h.b16 %v459
      %v582 = vpack.c.b16 %v538, %v534
      %v583 = vpack.c.b16 %v539, %v535
      %v584 = vpack.c.b16 %v540, %v536
      %v585 = vpack.c.b16 %v541, %v537
      %v586 = vpack.c.b16 %v546, %v542
      %v587 = vpack.c.b16 %v547, %v543
      %v588 = vpack.c.b16 %v548, %v544
      %v589 = vpack.c.b16 %v549, %v545
      %v590 = vpack.c.b16 %v554, %v550
      %v591 = vpack.c.b16 %v555, %v551
      %v592 = vpack.c.b16 %v556, %v552
      %v593 = vpack.c.b16 %v557, %v553
      %v594 = vpack.c.b16 %v562, %v558
      %v595 = vpack.c.b16 %v563, %v559
      %v596 = vpack.c.b16 %v564, %v560
      %v597 = vpack.c.b16 %v565, %v561
      %v598 = vpack.c.b16 %v570, %v566
      %v599 = vpack.c.b16 %v571, %v567
      %v600 = vpack.c.b16 %v572, %v568
      %v601 = vpack.c.b16 %v573, %v569
      %v602 = vpack.c.b16 %v578, %v574
      %v603 = vpack.c.b16 %v579, %v575
      %v604 = vpack.c.b16 %v580, %v576
      %v605 = vpack.c.b16 %v581, %v577
      %vm630 = vcmask 785408
      %v632 = vsel %vm630, %v502, 0
      %v635 = vsel %vm630, %v503, 0
      %v638 = vsel %vm630, %v504, 0
      %v641 = vsel %vm630, %v505, 0
      %v644 = vsel %vm630, %v506, 0
      %v647 = vsel %vm630, %v507, 0
      %v650 = vsel %vm630, %v508, 0
      %v653 = vsel %vm630, %v509, 0
      %655 = vmatpush.bf16.msra.mxu0 0
      %656 = vmatpush.bf16.msra.mxu0 0
      %657 = vmatpush.bf16.msra.mxu0 %v602
      %658 = vmatpush.bf16.msra.mxu0 %v598
      %659 = vmatpush.bf16.msra.mxu0 %v594
      %660 = vmatpush.bf16.msra.mxu0 %v590
      %661 = vmatpush.bf16.msra.mxu0 %v586
      %662 = vmatpush.bf16.msra.mxu0 %v582
      %663 = vmatmul.bf16.gmra.mxu0 %v632
      %v664 = vpop.f32.mrf.mxu0
      %v665 = vadd.f32 %v462, %v664
      %v666 = vpop.f32.mrf.mxu0
      %v667 = vadd.f32 %v462, %v666
      %668 = vmatmul.bf16.gmra.mxu0 %v635
      %v669 = vpop.f32.mrf.mxu0
      %v670 = vadd.f32 %v462, %v669
      %v671 = vpop.f32.mrf.mxu0
      %v672 = vadd.f32 %v462, %v671
      %673 = vmatmul.bf16.gmra.mxu0 %v638
      %v674 = vpop.f32.mrf.mxu0
      %v675 = vadd.f32 %v462, %v674
      %v676 = vpop.f32.mrf.mxu0
      %v677 = vadd.f32 %v462, %v676
      %678 = vmatmul.bf16.gmra.mxu0 %v641
      %v679 = vpop.f32.mrf.mxu0
      %v680 = vadd.f32 %v462, %v679
      %v681 = vpop.f32.mrf.mxu0
      %v682 = vadd.f32 %v462, %v681
      %683 = vmatmul.bf16.gmra.mxu0 %v644
      %v684 = vpop.f32.mrf.mxu0
      %v685 = vadd.f32 %v462, %v684
      %v686 = vpop.f32.mrf.mxu0
      %v687 = vadd.f32 %v462, %v686
      %688 = vmatmul.bf16.gmra.mxu0 %v647
      %v689 = vpop.f32.mrf.mxu0
      %v690 = vadd.f32 %v462, %v689
      %v691 = vpop.f32.mrf.mxu0
      %v692 = vadd.f32 %v462, %v691
      %693 = vmatmul.bf16.gmra.mxu0 %v650
      %v694 = vpop.f32.mrf.mxu0
      %v695 = vadd.f32 %v462, %v694
      %v696 = vpop.f32.mrf.mxu0
      %v697 = vadd.f32 %v462, %v696
      %698 = vmatmul.bf16.gmra.mxu0 %v653
      %v699 = vpop.f32.mrf.mxu0
      %v700 = vadd.f32 %v462, %v699
      %v701 = vpop.f32.mrf.mxu0
      %v702 = vadd.f32 %v462, %v701
      %703 = vdwg.mxu0
      %704 = vmatpush.bf16.msra.mxu0 0
      %705 = vmatpush.bf16.msra.mxu0 0
      %706 = vmatpush.bf16.msra.mxu0 %v603
      %707 = vmatpush.bf16.msra.mxu0 %v599
      %708 = vmatpush.bf16.msra.mxu0 %v595
      %709 = vmatpush.bf16.msra.mxu0 %v591
      %710 = vmatpush.bf16.msra.mxu0 %v587
      %711 = vmatpush.bf16.msra.mxu0 %v583
      %712 = vmatmul.bf16.gmra.mxu0 %v632
      %v713 = vpop.f32.mrf.mxu0
      %v714 = vadd.f32 %v463, %v713
      %v715 = vpop.f32.mrf.mxu0
      %v716 = vadd.f32 %v463, %v715
      %717 = vmatmul.bf16.gmra.mxu0 %v635
      %v718 = vpop.f32.mrf.mxu0
      %v719 = vadd.f32 %v463, %v718
      %v720 = vpop.f32.mrf.mxu0
      %v721 = vadd.f32 %v463, %v720
      %722 = vmatmul.bf16.gmra.mxu0 %v638
      %v723 = vpop.f32.mrf.mxu0
      %v724 = vadd.f32 %v463, %v723
      %v725 = vpop.f32.mrf.mxu0
      %v726 = vadd.f32 %v463, %v725
      %727 = vmatmul.bf16.gmra.mxu0 %v641
      %v728 = vpop.f32.mrf.mxu0
      %v729 = vadd.f32 %v463, %v728
      %v730 = vpop.f32.mrf.mxu0
      %v731 = vadd.f32 %v463, %v730
      %732 = vmatmul.bf16.gmra.mxu0 %v644
      %v733 = vpop.f32.mrf.mxu0
      %v734 = vadd.f32 %v463, %v733
      %v735 = vpop.f32.mrf.mxu0
      %v736 = vadd.f32 %v463, %v735
      %737 = vmatmul.bf16.gmra.mxu0 %v647
      %v738 = vpop.f32.mrf.mxu0
      %v739 = vadd.f32 %v463, %v738
      %v740 = vpop.f32.mrf.mxu0
      %v741 = vadd.f32 %v463, %v740
      %742 = vmatmul.bf16.gmra.mxu0 %v650
      %v743 = vpop.f32.mrf.mxu0
      %v744 = vadd.f32 %v463, %v743
      %v745 = vpop.f32.mrf.mxu0
      %v746 = vadd.f32 %v463, %v745
      %747 = vmatmul.bf16.gmra.mxu0 %v653
      %v748 = vpop.f32.mrf.mxu0
      %v749 = vadd.f32 %v463, %v748
      %v750 = vpop.f32.mrf.mxu0
      %v751 = vadd.f32 %v463, %v750
      %752 = vdwg.mxu0
      %753 = vmatpush.bf16.msra.mxu0 0
      %754 = vmatpush.bf16.msra.mxu0 0
      %755 = vmatpush.bf16.msra.mxu0 %v604
      %756 = vmatpush.bf16.msra.mxu0 %v600
      %757 = vmatpush.bf16.msra.mxu0 %v596
      %758 = vmatpush.bf16.msra.mxu0 %v592
      %759 = vmatpush.bf16.msra.mxu0 %v588
      %760 = vmatpush.bf16.msra.mxu0 %v584
      %761 = vmatmul.bf16.gmra.mxu0 %v632
      %v762 = vpop.f32.mrf.mxu0
      %v763 = vadd.f32 %v464, %v762
      %v764 = vpop.f32.mrf.mxu0
      %v765 = vadd.f32 %v464, %v764
      %766 = vmatmul.bf16.gmra.mxu0 %v635
      %v767 = vpop.f32.mrf.mxu0
      %v768 = vadd.f32 %v464, %v767
      %v769 = vpop.f32.mrf.mxu0
      %v770 = vadd.f32 %v464, %v769
      %771 = vmatmul.bf16.gmra.mxu0 %v638
      %v772 = vpop.f32.mrf.mxu0
      %v773 = vadd.f32 %v464, %v772
      %v774 = vpop.f32.mrf.mxu0
      %v775 = vadd.f32 %v464, %v774
      %776 = vmatmul.bf16.gmra.mxu0 %v641
      %v777 = vpop.f32.mrf.mxu0
      %v778 = vadd.f32 %v464, %v777
      %v779 = vpop.f32.mrf.mxu0
      %v780 = vadd.f32 %v464, %v779
      %781 = vmatmul.bf16.gmra.mxu0 %v644
      %v782 = vpop.f32.mrf.mxu0
      %v783 = vadd.f32 %v464, %v782
      %v784 = vpop.f32.mrf.mxu0
      %v785 = vadd.f32 %v464, %v784
      %786 = vmatmul.bf16.gmra.mxu0 %v647
      %v787 = vpop.f32.mrf.mxu0
      %v788 = vadd.f32 %v464, %v787
      %v789 = vpop.f32.mrf.mxu0
      %v790 = vadd.f32 %v464, %v789
      %791 = vmatmul.bf16.gmra.mxu0 %v650
      %v792 = vpop.f32.mrf.mxu0
      %v793 = vadd.f32 %v464, %v792
      %v794 = vpop.f32.mrf.mxu0
      %v795 = vadd.f32 %v464, %v794
      %796 = vmatmul.bf16.gmra.mxu0 %v653
      %v797 = vpop.f32.mrf.mxu0
      %v798 = vadd.f32 %v464, %v797
      %v799 = vpop.f32.mrf.mxu0
      %v800 = vadd.f32 %v464, %v799
      %801 = vdwg.mxu0
      %802 = vmatpush.bf16.msra.mxu0 0
      %803 = vmatpush.bf16.msra.mxu0 0
      %804 = vmatpush.bf16.msra.mxu0 %v605
      %805 = vmatpush.bf16.msra.mxu0 %v601
      %806 = vmatpush.bf16.msra.mxu0 %v597
      %807 = vmatpush.bf16.msra.mxu0 %v593
      %808 = vmatpush.bf16.msra.mxu0 %v589
      %809 = vmatpush.bf16.msra.mxu0 %v585
      %810 = vmatmul.bf16.gmra.mxu0 %v632
      %v811 = vpop.f32.mrf.mxu0
      %v812 = vadd.f32 %v465, %v811
      %v813 = vpop.f32.mrf.mxu0
      %v814 = vadd.f32 %v465, %v813
      %815 = vmatmul.bf16.gmra.mxu0 %v635
      %v816 = vpop.f32.mrf.mxu0
      %v817 = vadd.f32 %v465, %v816
      %v818 = vpop.f32.mrf.mxu0
      %v819 = vadd.f32 %v465, %v818
      %820 = vmatmul.bf16.gmra.mxu0 %v638
      %v821 = vpop.f32.mrf.mxu0
      %v822 = vadd.f32 %v465, %v821
      %v823 = vpop.f32.mrf.mxu0
      %v824 = vadd.f32 %v465, %v823
      %825 = vmatmul.bf16.gmra.mxu0 %v641
      %v826 = vpop.f32.mrf.mxu0
      %v827 = vadd.f32 %v465, %v826
      %v828 = vpop.f32.mrf.mxu0
      %v829 = vadd.f32 %v465, %v828
      %830 = vmatmul.bf16.gmra.mxu0 %v644
      %v831 = vpop.f32.mrf.mxu0
      %v832 = vadd.f32 %v465, %v831
      %v833 = vpop.f32.mrf.mxu0
      %v834 = vadd.f32 %v465, %v833
      %835 = vmatmul.bf16.gmra.mxu0 %v647
      %v836 = vpop.f32.mrf.mxu0
      %v837 = vadd.f32 %v465, %v836
      %v838 = vpop.f32.mrf.mxu0
      %v839 = vadd.f32 %v465, %v838
      %840 = vmatmul.bf16.gmra.mxu0 %v650
      %v841 = vpop.f32.mrf.mxu0
      %v842 = vadd.f32 %v465, %v841
      %v843 = vpop.f32.mrf.mxu0
      %v844 = vadd.f32 %v465, %v843
      %845 = vmatmul.bf16.gmra.mxu0 %v653
      %v846 = vpop.f32.mrf.mxu0
      %v847 = vadd.f32 %v465, %v846
      %v848 = vpop.f32.mrf.mxu0
      %v849 = vadd.f32 %v465, %v848
      %850 = vdwg.mxu0
      %v851 = vpack.c.bf16 %v714, %v665
      %v852 = vpack.c.bf16 %v812, %v763
      %v853 = vpack.c.bf16 %v716, %v667
      %v854 = vpack.c.bf16 %v814, %v765
      %v855 = vpack.c.bf16 %v719, %v670
      %v856 = vpack.c.bf16 %v817, %v768
      %v857 = vpack.c.bf16 %v721, %v672
      %v858 = vpack.c.bf16 %v819, %v770
      %v859 = vpack.c.bf16 %v724, %v675
      %v860 = vpack.c.bf16 %v822, %v773
      %v861 = vpack.c.bf16 %v726, %v677
      %v862 = vpack.c.bf16 %v824, %v775
      %v863 = vpack.c.bf16 %v729, %v680
      %v864 = vpack.c.bf16 %v827, %v778
      %v865 = vpack.c.bf16 %v731, %v682
      %v866 = vpack.c.bf16 %v829, %v780
      %v867 = vpack.c.bf16 %v734, %v685
      %v868 = vpack.c.bf16 %v832, %v783
      %v869 = vpack.c.bf16 %v736, %v687
      %v870 = vpack.c.bf16 %v834, %v785
      %v871 = vpack.c.bf16 %v739, %v690
      %v872 = vpack.c.bf16 %v837, %v788
      %v873 = vpack.c.bf16 %v741, %v692
      %v874 = vpack.c.bf16 %v839, %v790
      %v875 = vpack.c.bf16 %v744, %v695
      %v876 = vpack.c.bf16 %v842, %v793
      %v877 = vpack.c.bf16 %v746, %v697
      %v878 = vpack.c.bf16 %v844, %v795
      %v879 = vpack.c.bf16 %v749, %v700
      %v880 = vpack.c.bf16 %v847, %v798
      %v881 = vpack.c.bf16 %v751, %v702
      %v882 = vpack.c.bf16 %v849, %v800
      %v883 = vunpack.c.l.bf16 %v851
      %v884 = vunpack.c.h.bf16 %v851
      %v885 = vunpack.c.l.bf16 %v852
      %v886 = vunpack.c.h.bf16 %v852
      %v887 = vunpack.c.l.bf16 %v853
      %v888 = vunpack.c.h.bf16 %v853
      %v889 = vunpack.c.l.bf16 %v854
      %v890 = vunpack.c.h.bf16 %v854
      %v891 = vunpack.c.l.bf16 %v855
      %v892 = vunpack.c.h.bf16 %v855
      %v893 = vunpack.c.l.bf16 %v856
      %v894 = vunpack.c.h.bf16 %v856
      %v895 = vunpack.c.l.bf16 %v857
      %v896 = vunpack.c.h.bf16 %v857
      %v897 = vunpack.c.l.bf16 %v858
      %v898 = vunpack.c.h.bf16 %v858
      %v899 = vunpack.c.l.bf16 %v859
      %v900 = vunpack.c.h.bf16 %v859
      %v901 = vunpack.c.l.bf16 %v860
      %v902 = vunpack.c.h.bf16 %v860
      %v903 = vunpack.c.l.bf16 %v861
      %v904 = vunpack.c.h.bf16 %v861
      %v905 = vunpack.c.l.bf16 %v862
      %v906 = vunpack.c.h.bf16 %v862
      %v907 = vunpack.c.l.bf16 %v863
      %v908 = vunpack.c.h.bf16 %v863
      %v909 = vunpack.c.l.bf16 %v864
      %v910 = vunpack.c.h.bf16 %v864
      %v911 = vunpack.c.l.bf16 %v865
      %v912 = vunpack.c.h.bf16 %v865
      %v913 = vunpack.c.l.bf16 %v866
      %v914 = vunpack.c.h.bf16 %v866
      %v915 = vunpack.c.l.bf16 %v867
      %v916 = vunpack.c.h.bf16 %v867
      %v917 = vunpack.c.l.bf16 %v868
      %v918 = vunpack.c.h.bf16 %v868
      %v919 = vunpack.c.l.bf16 %v869
      %v920 = vunpack.c.h.bf16 %v869
      %v921 = vunpack.c.l.bf16 %v870
      %v922 = vunpack.c.h.bf16 %v870
      %v923 = vunpack.c.l.bf16 %v871
      %v924 = vunpack.c.h.bf16 %v871
      %v925 = vunpack.c.l.bf16 %v872
      %v926 = vunpack.c.h.bf16 %v872
      %v927 = vunpack.c.l.bf16 %v873
      %v928 = vunpack.c.h.bf16 %v873
      %v929 = vunpack.c.l.bf16 %v874
      %v930 = vunpack.c.h.bf16 %v874
      %v931 = vunpack.c.l.bf16 %v875
      %v932 = vunpack.c.h.bf16 %v875
      %v933 = vunpack.c.l.bf16 %v876
      %v934 = vunpack.c.h.bf16 %v876
      %v935 = vunpack.c.l.bf16 %v877
      %v936 = vunpack.c.h.bf16 %v877
      %v937 = vunpack.c.l.bf16 %v878
      %v938 = vunpack.c.h.bf16 %v878
      %v939 = vunpack.c.l.bf16 %v879
      %v940 = vunpack.c.h.bf16 %v879
      %v941 = vunpack.c.l.bf16 %v880
      %v942 = vunpack.c.h.bf16 %v880
      %v943 = vunpack.c.l.bf16 %v881
      %v944 = vunpack.c.h.bf16 %v881
      %v945 = vunpack.c.l.bf16 %v882
      %v946 = vunpack.c.h.bf16 %v882
      %v947 = vmul.f32 %v883, 0.5
      %v948 = vmul.f32 %v884, 0.5
      %v949 = vmul.f32 %v885, 0.5
      %v950 = vmul.f32 %v886, 0.5
      %v951 = vmul.f32 %v887, 0.5
      %v952 = vmul.f32 %v888, 0.5
      %v953 = vmul.f32 %v889, 0.5
      %v954 = vmul.f32 %v890, 0.5
      %v955 = vmul.f32 %v891, 0.5
      %v956 = vmul.f32 %v892, 0.5
      %v957 = vmul.f32 %v893, 0.5
      %v958 = vmul.f32 %v894, 0.5
      %v959 = vmul.f32 %v895, 0.5
      %v960 = vmul.f32 %v896, 0.5
      %v961 = vmul.f32 %v897, 0.5
      %v962 = vmul.f32 %v898, 0.5
      %v963 = vmul.f32 %v899, 0.5
      %v964 = vmul.f32 %v900, 0.5
      %v965 = vmul.f32 %v901, 0.5
      %v966 = vmul.f32 %v902, 0.5
      %v967 = vmul.f32 %v903, 0.5
      %v968 = vmul.f32 %v904, 0.5
      %v969 = vmul.f32 %v905, 0.5
      %v970 = vmul.f32 %v906, 0.5
      %v971 = vmul.f32 %v907, 0.5
      %v972 = vmul.f32 %v908, 0.5
      %v973 = vmul.f32 %v909, 0.5
      %v974 = vmul.f32 %v910, 0.5
      %v975 = vmul.f32 %v911, 0.5
      %v976 = vmul.f32 %v912, 0.5
      %v977 = vmul.f32 %v913, 0.5
      %v978 = vmul.f32 %v914, 0.5
      %v979 = vmul.f32 %v915, 0.5
      %v980 = vmul.f32 %v916, 0.5
      %v981 = vmul.f32 %v917, 0.5
      %v982 = vmul.f32 %v918, 0.5
      %v983 = vmul.f32 %v919, 0.5
      %v984 = vmul.f32 %v920, 0.5
      %v985 = vmul.f32 %v921, 0.5
      %v986 = vmul.f32 %v922, 0.5
      %v987 = vmul.f32 %v923, 0.5
      %v988 = vmul.f32 %v924, 0.5
      %v989 = vmul.f32 %v925, 0.5
      %v990 = vmul.f32 %v926, 0.5
      %v991 = vmul.f32 %v927, 0.5
      %v992 = vmul.f32 %v928, 0.5
      %v993 = vmul.f32 %v929, 0.5
      %v994 = vmul.f32 %v930, 0.5
      %v995 = vmul.f32 %v931, 0.5
      %v996 = vmul.f32 %v932, 0.5
      %v997 = vmul.f32 %v933, 0.5
      %v998 = vmul.f32 %v934, 0.5
      %v999 = vmul.f32 %v935, 0.5
      %v1000 = vmul.f32 %v936, 0.5
      %v1001 = vmul.f32 %v937, 0.5
      %v1002 = vmul.f32 %v938, 0.5
      %v1003 = vmul.f32 %v939, 0.5
      %v1004 = vmul.f32 %v940, 0.5
      %v1005 = vmul.f32 %v941, 0.5
      %v1006 = vmul.f32 %v942, 0.5
      %v1007 = vmul.f32 %v943, 0.5
      %v1008 = vmul.f32 %v944, 0.5
      %v1009 = vmul.f32 %v945, 0.5
      %v1010 = vmul.f32 %v946, 0.5
      %v1011 = vpack.c.bf16 %v948, %v947
      %v1012 = vpack.c.bf16 %v950, %v949
      %v1013 = vpack.c.bf16 %v952, %v951
      %v1014 = vpack.c.bf16 %v954, %v953
      %v1015 = vpack.c.bf16 %v956, %v955
      %v1016 = vpack.c.bf16 %v958, %v957
      %v1017 = vpack.c.bf16 %v960, %v959
      %v1018 = vpack.c.bf16 %v962, %v961
      %v1019 = vpack.c.bf16 %v964, %v963
      %v1020 = vpack.c.bf16 %v966, %v965
      %v1021 = vpack.c.bf16 %v968, %v967
      %v1022 = vpack.c.bf16 %v970, %v969
      %v1023 = vpack.c.bf16 %v972, %v971
      %v1024 = vpack.c.bf16 %v974, %v973
      %v1025 = vpack.c.bf16 %v976, %v975
      %v1026 = vpack.c.bf16 %v978, %v977
      %v1027 = vpack.c.bf16 %v980, %v979
      %v1028 = vpack.c.bf16 %v982, %v981
      %v1029 = vpack.c.bf16 %v984, %v983
      %v1030 = vpack.c.bf16 %v986, %v985
      %v1031 = vpack.c.bf16 %v988, %v987
      %v1032 = vpack.c.bf16 %v990, %v989
      %v1033 = vpack.c.bf16 %v992, %v991
      %v1034 = vpack.c.bf16 %v994, %v993
      %v1035 = vpack.c.bf16 %v996, %v995
      %v1036 = vpack.c.bf16 %v998, %v997
      %v1037 = vpack.c.bf16 %v1000, %v999
      %v1038 = vpack.c.bf16 %v1002, %v1001
      %v1039 = vpack.c.bf16 %v1004, %v1003
      %v1040 = vpack.c.bf16 %v1006, %v1005
      %v1041 = vpack.c.bf16 %v1008, %v1007
      %v1042 = vpack.c.bf16 %v1010, %v1009
      %v1043 = vunpack.c.l.bf16 %v1011
      %v1044 = vunpack.c.h.bf16 %v1011
      %v1045 = vunpack.c.l.bf16 %v1012
      %v1046 = vunpack.c.h.bf16 %v1012
      %v1047 = vunpack.c.l.bf16 %v1013
      %v1048 = vunpack.c.h.bf16 %v1013
      %v1049 = vunpack.c.l.bf16 %v1014
      %v1050 = vunpack.c.h.bf16 %v1014
      %v1051 = vunpack.c.l.bf16 %v1015
      %v1052 = vunpack.c.h.bf16 %v1015
      %v1053 = vunpack.c.l.bf16 %v1016
      %v1054 = vunpack.c.h.bf16 %v1016
      %v1055 = vunpack.c.l.bf16 %v1017
      %v1056 = vunpack.c.h.bf16 %v1017
      %v1057 = vunpack.c.l.bf16 %v1018
      %v1058 = vunpack.c.h.bf16 %v1018
      %v1059 = vunpack.c.l.bf16 %v1019
      %v1060 = vunpack.c.h.bf16 %v1019
      %v1061 = vunpack.c.l.bf16 %v1020
      %v1062 = vunpack.c.h.bf16 %v1020
      %v1063 = vunpack.c.l.bf16 %v1021
      %v1064 = vunpack.c.h.bf16 %v1021
      %v1065 = vunpack.c.l.bf16 %v1022
      %v1066 = vunpack.c.h.bf16 %v1022
      %v1067 = vunpack.c.l.bf16 %v1023
      %v1068 = vunpack.c.h.bf16 %v1023
      %v1069 = vunpack.c.l.bf16 %v1024
      %v1070 = vunpack.c.h.bf16 %v1024
      %v1071 = vunpack.c.l.bf16 %v1025
      %v1072 = vunpack.c.h.bf16 %v1025
      %v1073 = vunpack.c.l.bf16 %v1026
      %v1074 = vunpack.c.h.bf16 %v1026
      %v1075 = vunpack.c.l.bf16 %v1027
      %v1076 = vunpack.c.h.bf16 %v1027
      %v1077 = vunpack.c.l.bf16 %v1028
      %v1078 = vunpack.c.h.bf16 %v1028
      %v1079 = vunpack.c.l.bf16 %v1029
      %v1080 = vunpack.c.h.bf16 %v1029
      %v1081 = vunpack.c.l.bf16 %v1030
      %v1082 = vunpack.c.h.bf16 %v1030
      %v1083 = vunpack.c.l.bf16 %v1031
      %v1084 = vunpack.c.h.bf16 %v1031
      %v1085 = vunpack.c.l.bf16 %v1032
      %v1086 = vunpack.c.h.bf16 %v1032
      %v1087 = vunpack.c.l.bf16 %v1033
      %v1088 = vunpack.c.h.bf16 %v1033
      %v1089 = vunpack.c.l.bf16 %v1034
      %v1090 = vunpack.c.h.bf16 %v1034
      %v1091 = vunpack.c.l.bf16 %v1035
      %v1092 = vunpack.c.h.bf16 %v1035
      %v1093 = vunpack.c.l.bf16 %v1036
      %v1094 = vunpack.c.h.bf16 %v1036
      %v1095 = vunpack.c.l.bf16 %v1037
      %v1096 = vunpack.c.h.bf16 %v1037
      %v1097 = vunpack.c.l.bf16 %v1038
      %v1098 = vunpack.c.h.bf16 %v1038
      %v1099 = vunpack.c.l.bf16 %v1039
      %v1100 = vunpack.c.h.bf16 %v1039
      %v1101 = vunpack.c.l.bf16 %v1040
      %v1102 = vunpack.c.h.bf16 %v1040
      %v1103 = vunpack.c.l.bf16 %v1041
      %v1104 = vunpack.c.h.bf16 %v1041
      %v1105 = vunpack.c.l.bf16 %v1042
      %v1106 = vunpack.c.h.bf16 %v1042
      %v1107 = vtanh.pop %v1043
      %v1108 = vtanh.pop %v1044
      %v1109 = vtanh.pop %v1045
      %v1110 = vtanh.pop %v1046
      %v1111 = vtanh.pop %v1047
      %v1112 = vtanh.pop %v1048
      %v1113 = vtanh.pop %v1049
      %v1114 = vtanh.pop %v1050
      %v1115 = vtanh.pop %v1051
      %v1116 = vtanh.pop %v1052
      %v1117 = vtanh.pop %v1053
      %v1118 = vtanh.pop %v1054
      %v1119 = vtanh.pop %v1055
      %v1120 = vtanh.pop %v1056
      %v1121 = vtanh.pop %v1057
      %v1122 = vtanh.pop %v1058
      %v1123 = vtanh.pop %v1059
      %v1124 = vtanh.pop %v1060
      %v1125 = vtanh.pop %v1061
      %v1126 = vtanh.pop %v1062
      %v1127 = vtanh.pop %v1063
      %v1128 = vtanh.pop %v1064
      %v1129 = vtanh.pop %v1065
      %v1130 = vtanh.pop %v1066
      %v1131 = vtanh.pop %v1067
      %v1132 = vtanh.pop %v1068
      %v1133 = vtanh.pop %v1069
      %v1134 = vtanh.pop %v1070
      %v1135 = vtanh.pop %v1071
      %v1136 = vtanh.pop %v1072
      %v1137 = vtanh.pop %v1073
      %v1138 = vtanh.pop %v1074
      %v1139 = vtanh.pop %v1075
      %v1140 = vtanh.pop %v1076
      %v1141 = vtanh.pop %v1077
      %v1142 = vtanh.pop %v1078
      %v1143 = vtanh.pop %v1079
      %v1144 = vtanh.pop %v1080
      %v1145 = vtanh.pop %v1081
      %v1146 = vtanh.pop %v1082
      %v1147 = vtanh.pop %v1083
      %v1148 = vtanh.pop %v1084
      %v1149 = vtanh.pop %v1085
      %v1150 = vtanh.pop %v1086
      %v1151 = vtanh.pop %v1087
      %v1152 = vtanh.pop %v1088
      %v1153 = vtanh.pop %v1089
      %v1154 = vtanh.pop %v1090
      %v1155 = vtanh.pop %v1091
      %v1156 = vtanh.pop %v1092
      %v1157 = vtanh.pop %v1093
      %v1158 = vtanh.pop %v1094
      %v1159 = vtanh.pop %v1095
      %v1160 = vtanh.pop %v1096
      %v1161 = vtanh.pop %v1097
      %v1162 = vtanh.pop %v1098
      %v1163 = vtanh.pop %v1099
      %v1164 = vtanh.pop %v1100
      %v1165 = vtanh.pop %v1101
      %v1166 = vtanh.pop %v1102
      %v1167 = vtanh.pop %v1103
      %v1168 = vtanh.pop %v1104
      %v1169 = vtanh.pop %v1105
      %v1170 = vtanh.pop %v1106
      %v1171 = vpack.c.bf16 %v1108, %v1107
      %v1172 = vpack.c.bf16 %v1110, %v1109
      %v1173 = vpack.c.bf16 %v1112, %v1111
      %v1174 = vpack.c.bf16 %v1114, %v1113
      %v1175 = vpack.c.bf16 %v1116, %v1115
      %v1176 = vpack.c.bf16 %v1118, %v1117
      %v1177 = vpack.c.bf16 %v1120, %v1119
      %v1178 = vpack.c.bf16 %v1122, %v1121
      %v1179 = vpack.c.bf16 %v1124, %v1123
      %v1180 = vpack.c.bf16 %v1126, %v1125
      %v1181 = vpack.c.bf16 %v1128, %v1127
      %v1182 = vpack.c.bf16 %v1130, %v1129
      %v1183 = vpack.c.bf16 %v1132, %v1131
      %v1184 = vpack.c.bf16 %v1134, %v1133
      %v1185 = vpack.c.bf16 %v1136, %v1135
      %v1186 = vpack.c.bf16 %v1138, %v1137
      %v1187 = vpack.c.bf16 %v1140, %v1139
      %v1188 = vpack.c.bf16 %v1142, %v1141
      %v1189 = vpack.c.bf16 %v1144, %v1143
      %v1190 = vpack.c.bf16 %v1146, %v1145
      %v1191 = vpack.c.bf16 %v1148, %v1147
      %v1192 = vpack.c.bf16 %v1150, %v1149
      %v1193 = vpack.c.bf16 %v1152, %v1151
      %v1194 = vpack.c.bf16 %v1154, %v1153
      %v1195 = vpack.c.bf16 %v1156, %v1155
      %v1196 = vpack.c.bf16 %v1158, %v1157
      %v1197 = vpack.c.bf16 %v1160, %v1159
      %v1198 = vpack.c.bf16 %v1162, %v1161
      %v1199 = vpack.c.bf16 %v1164, %v1163
      %v1200 = vpack.c.bf16 %v1166, %v1165
      %v1201 = vpack.c.bf16 %v1168, %v1167
      %v1202 = vpack.c.bf16 %v1170, %v1169
      %v1203 = vunpack.c.l.bf16 %v1171
      %v1204 = vunpack.c.h.bf16 %v1171
      %v1205 = vunpack.c.l.bf16 %v1172
      %v1206 = vunpack.c.h.bf16 %v1172
      %v1207 = vunpack.c.l.bf16 %v1173
      %v1208 = vunpack.c.h.bf16 %v1173
      %v1209 = vunpack.c.l.bf16 %v1174
      %v1210 = vunpack.c.h.bf16 %v1174
      %v1211 = vunpack.c.l.bf16 %v1175
      %v1212 = vunpack.c.h.bf16 %v1175
      %v1213 = vunpack.c.l.bf16 %v1176
      %v1214 = vunpack.c.h.bf16 %v1176
      %v1215 = vunpack.c.l.bf16 %v1177
      %v1216 = vunpack.c.h.bf16 %v1177
      %v1217 = vunpack.c.l.bf16 %v1178
      %v1218 = vunpack.c.h.bf16 %v1178
      %v1219 = vunpack.c.l.bf16 %v1179
      %v1220 = vunpack.c.h.bf16 %v1179
      %v1221 = vunpack.c.l.bf16 %v1180
      %v1222 = vunpack.c.h.bf16 %v1180
      %v1223 = vunpack.c.l.bf16 %v1181
      %v1224 = vunpack.c.h.bf16 %v1181
      %v1225 = vunpack.c.l.bf16 %v1182
      %v1226 = vunpack.c.h.bf16 %v1182
      %v1227 = vunpack.c.l.bf16 %v1183
      %v1228 = vunpack.c.h.bf16 %v1183
      %v1229 = vunpack.c.l.bf16 %v1184
      %v1230 = vunpack.c.h.bf16 %v1184
      %v1231 = vunpack.c.l.bf16 %v1185
      %v1232 = vunpack.c.h.bf16 %v1185
      %v1233 = vunpack.c.l.bf16 %v1186
      %v1234 = vunpack.c.h.bf16 %v1186
      %v1235 = vunpack.c.l.bf16 %v1187
      %v1236 = vunpack.c.h.bf16 %v1187
      %v1237 = vunpack.c.l.bf16 %v1188
      %v1238 = vunpack.c.h.bf16 %v1188
      %v1239 = vunpack.c.l.bf16 %v1189
      %v1240 = vunpack.c.h.bf16 %v1189
      %v1241 = vunpack.c.l.bf16 %v1190
      %v1242 = vunpack.c.h.bf16 %v1190
      %v1243 = vunpack.c.l.bf16 %v1191
      %v1244 = vunpack.c.h.bf16 %v1191
      %v1245 = vunpack.c.l.bf16 %v1192
      %v1246 = vunpack.c.h.bf16 %v1192
      %v1247 = vunpack.c.l.bf16 %v1193
      %v1248 = vunpack.c.h.bf16 %v1193
      %v1249 = vunpack.c.l.bf16 %v1194
      %v1250 = vunpack.c.h.bf16 %v1194
      %v1251 = vunpack.c.l.bf16 %v1195
      %v1252 = vunpack.c.h.bf16 %v1195
      %v1253 = vunpack.c.l.bf16 %v1196
      %v1254 = vunpack.c.h.bf16 %v1196
      %v1255 = vunpack.c.l.bf16 %v1197
      %v1256 = vunpack.c.h.bf16 %v1197
      %v1257 = vunpack.c.l.bf16 %v1198
      %v1258 = vunpack.c.h.bf16 %v1198
      %v1259 = vunpack.c.l.bf16 %v1199
      %v1260 = vunpack.c.h.bf16 %v1199
      %v1261 = vunpack.c.l.bf16 %v1200
      %v1262 = vunpack.c.h.bf16 %v1200
      %v1263 = vunpack.c.l.bf16 %v1201
      %v1264 = vunpack.c.h.bf16 %v1201
      %v1265 = vunpack.c.l.bf16 %v1202
      %v1266 = vunpack.c.h.bf16 %v1202
      %v1267 = vadd.f32 %v1203, 1.0
      %v1268 = vadd.f32 %v1204, 1.0
      %v1269 = vadd.f32 %v1205, 1.0
      %v1270 = vadd.f32 %v1206, 1.0
      %v1271 = vadd.f32 %v1207, 1.0
      %v1272 = vadd.f32 %v1208, 1.0
      %v1273 = vadd.f32 %v1209, 1.0
      %v1274 = vadd.f32 %v1210, 1.0
      %v1275 = vadd.f32 %v1211, 1.0
      %v1276 = vadd.f32 %v1212, 1.0
      %v1277 = vadd.f32 %v1213, 1.0
      %v1278 = vadd.f32 %v1214, 1.0
      %v1279 = vadd.f32 %v1215, 1.0
      %v1280 = vadd.f32 %v1216, 1.0
      %v1281 = vadd.f32 %v1217, 1.0
      %v1282 = vadd.f32 %v1218, 1.0
      %v1283 = vadd.f32 %v1219, 1.0
      %v1284 = vadd.f32 %v1220, 1.0
      %v1285 = vadd.f32 %v1221, 1.0
      %v1286 = vadd.f32 %v1222, 1.0
      %v1287 = vadd.f32 %v1223, 1.0
      %v1288 = vadd.f32 %v1224, 1.0
      %v1289 = vadd.f32 %v1225, 1.0
      %v1290 = vadd.f32 %v1226, 1.0
      %v1291 = vadd.f32 %v1227, 1.0
      %v1292 = vadd.f32 %v1228, 1.0
      %v1293 = vadd.f32 %v1229, 1.0
      %v1294 = vadd.f32 %v1230, 1.0
      %v1295 = vadd.f32 %v1231, 1.0
      %v1296 = vadd.f32 %v1232, 1.0
      %v1297 = vadd.f32 %v1233, 1.0
      %v1298 = vadd.f32 %v1234, 1.0
      %v1299 = vadd.f32 %v1235, 1.0
      %v1300 = vadd.f32 %v1236, 1.0
      %v1301 = vadd.f32 %v1237, 1.0
      %v1302 = vadd.f32 %v1238, 1.0
      %v1303 = vadd.f32 %v1239, 1.0
      %v1304 = vadd.f32 %v1240, 1.0
      %v1305 = vadd.f32 %v1241, 1.0
      %v1306 = vadd.f32 %v1242, 1.0
      %v1307 = vadd.f32 %v1243, 1.0
      %v1308 = vadd.f32 %v1244, 1.0
      %v1309 = vadd.f32 %v1245, 1.0
      %v1310 = vadd.f32 %v1246, 1.0
      %v1311 = vadd.f32 %v1247, 1.0
      %v1312 = vadd.f32 %v1248, 1.0
      %v1313 = vadd.f32 %v1249, 1.0
      %v1314 = vadd.f32 %v1250, 1.0
      %v1315 = vadd.f32 %v1251, 1.0
      %v1316 = vadd.f32 %v1252, 1.0
      %v1317 = vadd.f32 %v1253, 1.0
      %v1318 = vadd.f32 %v1254, 1.0
      %v1319 = vadd.f32 %v1255, 1.0
      %v1320 = vadd.f32 %v1256, 1.0
      %v1321 = vadd.f32 %v1257, 1.0
      %v1322 = vadd.f32 %v1258, 1.0
      %v1323 = vadd.f32 %v1259, 1.0
      %v1324 = vadd.f32 %v1260, 1.0
      %v1325 = vadd.f32 %v1261, 1.0
      %v1326 = vadd.f32 %v1262, 1.0
      %v1327 = vadd.f32 %v1263, 1.0
      %v1328 = vadd.f32 %v1264, 1.0
      %v1329 = vadd.f32 %v1265, 1.0
      %v1330 = vadd.f32 %v1266, 1.0
      %v1331 = vpack.c.bf16 %v1268, %v1267
      %v1332 = vpack.c.bf16 %v1270, %v1269
      %v1333 = vpack.c.bf16 %v1272, %v1271
      %v1334 = vpack.c.bf16 %v1274, %v1273
      %v1335 = vpack.c.bf16 %v1276, %v1275
      %v1336 = vpack.c.bf16 %v1278, %v1277
      %v1337 = vpack.c.bf16 %v1280, %v1279
      %v1338 = vpack.c.bf16 %v1282, %v1281
      %v1339 = vpack.c.bf16 %v1284, %v1283
      %v1340 = vpack.c.bf16 %v1286, %v1285
      %v1341 = vpack.c.bf16 %v1288, %v1287
      %v1342 = vpack.c.bf16 %v1290, %v1289
      %v1343 = vpack.c.bf16 %v1292, %v1291
      %v1344 = vpack.c.bf16 %v1294, %v1293
      %v1345 = vpack.c.bf16 %v1296, %v1295
      %v1346 = vpack.c.bf16 %v1298, %v1297
      %v1347 = vpack.c.bf16 %v1300, %v1299
      %v1348 = vpack.c.bf16 %v1302, %v1301
      %v1349 = vpack.c.bf16 %v1304, %v1303
      %v1350 = vpack.c.bf16 %v1306, %v1305
      %v1351 = vpack.c.bf16 %v1308, %v1307
      %v1352 = vpack.c.bf16 %v1310, %v1309
      %v1353 = vpack.c.bf16 %v1312, %v1311
      %v1354 = vpack.c.bf16 %v1314, %v1313
      %v1355 = vpack.c.bf16 %v1316, %v1315
      %v1356 = vpack.c.bf16 %v1318, %v1317
      %v1357 = vpack.c.bf16 %v1320, %v1319
      %v1358 = vpack.c.bf16 %v1322, %v1321
      %v1359 = vpack.c.bf16 %v1324, %v1323
      %v1360 = vpack.c.bf16 %v1326, %v1325
      %v1361 = vpack.c.bf16 %v1328, %v1327
      %v1362 = vpack.c.bf16 %v1330, %v1329
      %v1363 = vunpack.c.l.bf16 %v1331
      %v1364 = vunpack.c.h.bf16 %v1331
      %v1365 = vunpack.c.l.bf16 %v1332
      %v1366 = vunpack.c.h.bf16 %v1332
      %v1367 = vunpack.c.l.bf16 %v1333
      %v1368 = vunpack.c.h.bf16 %v1333
      %v1369 = vunpack.c.l.bf16 %v1334
      %v1370 = vunpack.c.h.bf16 %v1334
      %v1371 = vunpack.c.l.bf16 %v1335
      %v1372 = vunpack.c.h.bf16 %v1335
      %v1373 = vunpack.c.l.bf16 %v1336
      %v1374 = vunpack.c.h.bf16 %v1336
      %v1375 = vunpack.c.l.bf16 %v1337
      %v1376 = vunpack.c.h.bf16 %v1337
      %v1377 = vunpack.c.l.bf16 %v1338
      %v1378 = vunpack.c.h.bf16 %v1338
      %v1379 = vunpack.c.l.bf16 %v1339
      %v1380 = vunpack.c.h.bf16 %v1339
      %v1381 = vunpack.c.l.bf16 %v1340
      %v1382 = vunpack.c.h.bf16 %v1340
      %v1383 = vunpack.c.l.bf16 %v1341
      %v1384 = vunpack.c.h.bf16 %v1341
      %v1385 = vunpack.c.l.bf16 %v1342
      %v1386 = vunpack.c.h.bf16 %v1342
      %v1387 = vunpack.c.l.bf16 %v1343
      %v1388 = vunpack.c.h.bf16 %v1343
      %v1389 = vunpack.c.l.bf16 %v1344
      %v1390 = vunpack.c.h.bf16 %v1344
      %v1391 = vunpack.c.l.bf16 %v1345
      %v1392 = vunpack.c.h.bf16 %v1345
      %v1393 = vunpack.c.l.bf16 %v1346
      %v1394 = vunpack.c.h.bf16 %v1346
      %v1395 = vunpack.c.l.bf16 %v1347
      %v1396 = vunpack.c.h.bf16 %v1347
      %v1397 = vunpack.c.l.bf16 %v1348
      %v1398 = vunpack.c.h.bf16 %v1348
      %v1399 = vunpack.c.l.bf16 %v1349
      %v1400 = vunpack.c.h.bf16 %v1349
      %v1401 = vunpack.c.l.bf16 %v1350
      %v1402 = vunpack.c.h.bf16 %v1350
      %v1403 = vunpack.c.l.bf16 %v1351
      %v1404 = vunpack.c.h.bf16 %v1351
      %v1405 = vunpack.c.l.bf16 %v1352
      %v1406 = vunpack.c.h.bf16 %v1352
      %v1407 = vunpack.c.l.bf16 %v1353
      %v1408 = vunpack.c.h.bf16 %v1353
      %v1409 = vunpack.c.l.bf16 %v1354
      %v1410 = vunpack.c.h.bf16 %v1354
      %v1411 = vunpack.c.l.bf16 %v1355
      %v1412 = vunpack.c.h.bf16 %v1355
      %v1413 = vunpack.c.l.bf16 %v1356
      %v1414 = vunpack.c.h.bf16 %v1356
      %v1415 = vunpack.c.l.bf16 %v1357
      %v1416 = vunpack.c.h.bf16 %v1357
      %v1417 = vunpack.c.l.bf16 %v1358
      %v1418 = vunpack.c.h.bf16 %v1358
      %v1419 = vunpack.c.l.bf16 %v1359
      %v1420 = vunpack.c.h.bf16 %v1359
      %v1421 = vunpack.c.l.bf16 %v1360
      %v1422 = vunpack.c.h.bf16 %v1360
      %v1423 = vunpack.c.l.bf16 %v1361
      %v1424 = vunpack.c.h.bf16 %v1361
      %v1425 = vunpack.c.l.bf16 %v1362
      %v1426 = vunpack.c.h.bf16 %v1362
      %v1427 = vmul.f32 %v1043, %v1363
      %v1428 = vmul.f32 %v1044, %v1364
      %v1429 = vmul.f32 %v1045, %v1365
      %v1430 = vmul.f32 %v1046, %v1366
      %v1431 = vmul.f32 %v1047, %v1367
      %v1432 = vmul.f32 %v1048, %v1368
      %v1433 = vmul.f32 %v1049, %v1369
      %v1434 = vmul.f32 %v1050, %v1370
      %v1435 = vmul.f32 %v1051, %v1371
      %v1436 = vmul.f32 %v1052, %v1372
      %v1437 = vmul.f32 %v1053, %v1373
      %v1438 = vmul.f32 %v1054, %v1374
      %v1439 = vmul.f32 %v1055, %v1375
      %v1440 = vmul.f32 %v1056, %v1376
      %v1441 = vmul.f32 %v1057, %v1377
      %v1442 = vmul.f32 %v1058, %v1378
      %v1443 = vmul.f32 %v1059, %v1379
      %v1444 = vmul.f32 %v1060, %v1380
      %v1445 = vmul.f32 %v1061, %v1381
      %v1446 = vmul.f32 %v1062, %v1382
      %v1447 = vmul.f32 %v1063, %v1383
      %v1448 = vmul.f32 %v1064, %v1384
      %v1449 = vmul.f32 %v1065, %v1385
      %v1450 = vmul.f32 %v1066, %v1386
      %v1451 = vmul.f32 %v1067, %v1387
      %v1452 = vmul.f32 %v1068, %v1388
      %v1453 = vmul.f32 %v1069, %v1389
      %v1454 = vmul.f32 %v1070, %v1390
      %v1455 = vmul.f32 %v1071, %v1391
      %v1456 = vmul.f32 %v1072, %v1392
      %v1457 = vmul.f32 %v1073, %v1393
      %v1458 = vmul.f32 %v1074, %v1394
      %v1459 = vmul.f32 %v1075, %v1395
      %v1460 = vmul.f32 %v1076, %v1396
      %v1461 = vmul.f32 %v1077, %v1397
      %v1462 = vmul.f32 %v1078, %v1398
      %v1463 = vmul.f32 %v1079, %v1399
      %v1464 = vmul.f32 %v1080, %v1400
      %v1465 = vmul.f32 %v1081, %v1401
      %v1466 = vmul.f32 %v1082, %v1402
      %v1467 = vmul.f32 %v1083, %v1403
      %v1468 = vmul.f32 %v1084, %v1404
      %v1469 = vmul.f32 %v1085, %v1405
      %v1470 = vmul.f32 %v1086, %v1406
      %v1471 = vmul.f32 %v1087, %v1407
      %v1472 = vmul.f32 %v1088, %v1408
      %v1473 = vmul.f32 %v1089, %v1409
      %v1474 = vmul.f32 %v1090, %v1410
      %v1475 = vmul.f32 %v1091, %v1411
      %v1476 = vmul.f32 %v1092, %v1412
      %v1477 = vmul.f32 %v1093, %v1413
      %v1478 = vmul.f32 %v1094, %v1414
      %v1479 = vmul.f32 %v1095, %v1415
      %v1480 = vmul.f32 %v1096, %v1416
      %v1481 = vmul.f32 %v1097, %v1417
      %v1482 = vmul.f32 %v1098, %v1418
      %v1483 = vmul.f32 %v1099, %v1419
      %v1484 = vmul.f32 %v1100, %v1420
      %v1485 = vmul.f32 %v1101, %v1421
      %v1486 = vmul.f32 %v1102, %v1422
      %v1487 = vmul.f32 %v1103, %v1423
      %v1488 = vmul.f32 %v1104, %v1424
      %v1489 = vmul.f32 %v1105, %v1425
      %v1490 = vmul.f32 %v1106, %v1426
      %v1491 = vpack.c.bf16 %v1431, %v1427
      %v1492 = vpack.c.bf16 %v1432, %v1428
      %v1493 = vpack.c.bf16 %v1433, %v1429
      %v1494 = vpack.c.bf16 %v1434, %v1430
      %v1495 = vpack.c.bf16 %v1439, %v1435
      %v1496 = vpack.c.bf16 %v1440, %v1436
      %v1497 = vpack.c.bf16 %v1441, %v1437
      %v1498 = vpack.c.bf16 %v1442, %v1438
      %v1499 = vpack.c.bf16 %v1447, %v1443
      %v1500 = vpack.c.bf16 %v1448, %v1444
      %v1501 = vpack.c.bf16 %v1449, %v1445
      %v1502 = vpack.c.bf16 %v1450, %v1446
      %v1503 = vpack.c.bf16 %v1455, %v1451
      %v1504 = vpack.c.bf16 %v1456, %v1452
      %v1505 = vpack.c.bf16 %v1457, %v1453
      %v1506 = vpack.c.bf16 %v1458, %v1454
      %v1507 = vpack.c.bf16 %v1463, %v1459
      %v1508 = vpack.c.bf16 %v1464, %v1460
      %v1509 = vpack.c.bf16 %v1465, %v1461
      %v1510 = vpack.c.bf16 %v1466, %v1462
      %v1511 = vpack.c.bf16 %v1471, %v1467
      %v1512 = vpack.c.bf16 %v1472, %v1468
      %v1513 = vpack.c.bf16 %v1473, %v1469
      %v1514 = vpack.c.bf16 %v1474, %v1470
      %v1515 = vpack.c.bf16 %v1479, %v1475
      %v1516 = vpack.c.bf16 %v1480, %v1476
      %v1517 = vpack.c.bf16 %v1481, %v1477
      %v1518 = vpack.c.bf16 %v1482, %v1478
      %v1519 = vpack.c.bf16 %v1487, %v1483
      %v1520 = vpack.c.bf16 %v1488, %v1484
      %v1521 = vpack.c.bf16 %v1489, %v1485
      %v1522 = vpack.c.bf16 %v1490, %v1486
      %v1523 = vld [vmem:[%s3] sm:$0xff]
      %v1524 = vld [vmem:[%s3 + $0x8] sm:$0xff]
      %v1525 = vld [vmem:[%s3 + $0x10] sm:$0xff]
      %v1526 = vld [vmem:[%s3 + $0x18] sm:$0xff]
      %v1527 = vld [vmem:[%s3 + $0x20] sm:$0xff]
      %v1528 = vld [vmem:[%s3 + $0x28] sm:$0xff]
      %v1529 = vld [vmem:[%s3 + $0x30] sm:$0xff]
      %v1530 = vld [vmem:[%s3 + $0x38] sm:$0xff]
      %v1531 = vld [vmem:[%s3 + $0x40] sm:$0xff]
      %v1532 = vld [vmem:[%s3 + $0x48] sm:$0xff]
      %v1533 = vld [vmem:[%s3 + $0x50] sm:$0xff]
      %v1534 = vld [vmem:[%s3 + $0x58] sm:$0xff]
      %v1535 = vld [vmem:[%s3 + $0x60] sm:$0xff]
      %v1536 = vld [vmem:[%s3 + $0x68] sm:$0xff]
      %v1537 = vld [vmem:[%s3 + $0x70] sm:$0xff]
      %v1538 = vld [vmem:[%s3 + $0x78] sm:$0xff]
      %v1539 = vld [vmem:[%s3 + $0x80] sm:$0xff]
      %v1540 = vld [vmem:[%s3 + $0x88] sm:$0xff]
      %v1541 = vld [vmem:[%s3 + $0x90] sm:$0xff]
      %v1542 = vld [vmem:[%s3 + $0x98] sm:$0xff]
      %v1543 = vld [vmem:[%s3 + $0xa0] sm:$0xff]
      %v1544 = vld [vmem:[%s3 + $0xa8] sm:$0xff]
      %v1545 = vld [vmem:[%s3 + $0xb0] sm:$0xff]
      %v1546 = vld [vmem:[%s3 + $0xb8] sm:$0xff]
      %v1547 = vld [vmem:[%s3 + $0xc0] sm:$0xff]
      %v1548 = vld [vmem:[%s3 + $0xc8] sm:$0xff]
      %v1549 = vld [vmem:[%s3 + $0xd0] sm:$0xff]
      %v1550 = vld [vmem:[%s3 + $0xd8] sm:$0xff]
      %v1551 = vld [vmem:[%s3 + $0xe0] sm:$0xff]
      %v1552 = vld [vmem:[%s3 + $0xe8] sm:$0xff]
      %v1553 = vld [vmem:[%s3 + $0xf0] sm:$0xff]
      %v1554 = vld [vmem:[%s3 + $0xf8] sm:$0xff]
      %v1555 = vld [vmem:[%s3 + $0x100] sm:$0xff]
      %v1556 = vld [vmem:[%s3 + $0x108] sm:$0xff]
      %v1557 = vld [vmem:[%s3 + $0x110] sm:$0xff]
      %v1558 = vld [vmem:[%s3 + $0x118] sm:$0xff]
      %v1559 = vld [vmem:[%s3 + $0x120] sm:$0xff]
      %v1560 = vld [vmem:[%s3 + $0x128] sm:$0xff]
      %v1561 = vld [vmem:[%s3 + $0x130] sm:$0xff]
      %v1562 = vld [vmem:[%s3 + $0x138] sm:$0xff]
      %v1563 = vld [vmem:[%s3 + $0x140] sm:$0xff]
      %v1564 = vld [vmem:[%s3 + $0x148] sm:$0xff]
      %v1565 = vld [vmem:[%s3 + $0x150] sm:$0xff]
      %v1566 = vld [vmem:[%s3 + $0x158] sm:$0xff]
      %v1567 = vld [vmem:[%s3 + $0x160] sm:$0xff]
      %v1568 = vld [vmem:[%s3 + $0x168] sm:$0xff]
      %v1569 = vld [vmem:[%s3 + $0x170] sm:$0xff]
      %v1570 = vld [vmem:[%s3 + $0x178] sm:$0xff]
      %v1571 = vld [vmem:[%s3 + $0x180] sm:$0xff]
      %v1572 = vld [vmem:[%s3 + $0x188] sm:$0xff]
      %v1573 = vld [vmem:[%s3 + $0x190] sm:$0xff]
      %v1574 = vld [vmem:[%s3 + $0x198] sm:$0xff]
      %v1575 = vld [vmem:[%s3 + $0x1a0] sm:$0xff]
      %v1576 = vld [vmem:[%s3 + $0x1a8] sm:$0xff]
      %v1577 = vld [vmem:[%s3 + $0x1b0] sm:$0xff]
      %v1578 = vld [vmem:[%s3 + $0x1b8] sm:$0xff]
      %v1579 = vld [vmem:[%s3 + $0x1c0] sm:$0xff]
      %v1580 = vld [vmem:[%s3 + $0x1c8] sm:$0xff]
      %v1581 = vld [vmem:[%s3 + $0x1d0] sm:$0xff]
      %v1582 = vld [vmem:[%s3 + $0x1d8] sm:$0xff]
      %v1583 = vld [vmem:[%s3 + $0x1e0] sm:$0xff]
      %v1584 = vld [vmem:[%s3 + $0x1e8] sm:$0xff]
      %v1585 = vld [vmem:[%s3 + $0x1f0] sm:$0xff]
      %v1586 = vld [vmem:[%s3 + $0x1f8] sm:$0xff]
      %v1587 = vld [vmem:[%s4] sm:$0x3]
      %v1589 = vperm.slane %v1587, 0
      %v1590 = vperm.slane %v1587, 1
      %v1657 = vunpack.c.l.b16 %v1523
      %v1658 = vunpack.c.h.b16 %v1523
      %v1659 = vunpack.c.l.b16 %v1524
      %v1660 = vunpack.c.h.b16 %v1524
      %v1661 = vunpack.c.l.b16 %v1525
      %v1662 = vunpack.c.h.b16 %v1525
      %v1663 = vunpack.c.l.b16 %v1526
      %v1664 = vunpack.c.h.b16 %v1526
      %v1665 = vunpack.c.l.b16 %v1527
      %v1666 = vunpack.c.h.b16 %v1527
      %v1667 = vunpack.c.l.b16 %v1528
      %v1668 = vunpack.c.h.b16 %v1528
      %v1669 = vunpack.c.l.b16 %v1529
      %v1670 = vunpack.c.h.b16 %v1529
      %v1671 = vunpack.c.l.b16 %v1530
      %v1672 = vunpack.c.h.b16 %v1530
      %v1673 = vunpack.c.l.b16 %v1531
      %v1674 = vunpack.c.h.b16 %v1531
      %v1675 = vunpack.c.l.b16 %v1532
      %v1676 = vunpack.c.h.b16 %v1532
      %v1677 = vunpack.c.l.b16 %v1533
      %v1678 = vunpack.c.h.b16 %v1533
      %v1679 = vunpack.c.l.b16 %v1534
      %v1680 = vunpack.c.h.b16 %v1534
      %v1681 = vunpack.c.l.b16 %v1535
      %v1682 = vunpack.c.h.b16 %v1535
      %v1683 = vunpack.c.l.b16 %v1536
      %v1684 = vunpack.c.h.b16 %v1536
      %v1685 = vunpack.c.l.b16 %v1537
      %v1686 = vunpack.c.h.b16 %v1537
      %v1687 = vunpack.c.l.b16 %v1538
      %v1688 = vunpack.c.h.b16 %v1538
      %v1689 = vunpack.c.l.b16 %v1539
      %v1690 = vunpack.c.h.b16 %v1539
      %v1691 = vunpack.c.l.b16 %v1540
      %v1692 = vunpack.c.h.b16 %v1540
      %v1693 = vunpack.c.l.b16 %v1541
      %v1694 = vunpack.c.h.b16 %v1541
      %v1695 = vunpack.c.l.b16 %v1542
      %v1696 = vunpack.c.h.b16 %v1542
      %v1697 = vunpack.c.l.b16 %v1543
      %v1698 = vunpack.c.h.b16 %v1543
      %v1699 = vunpack.c.l.b16 %v1544
      %v1700 = vunpack.c.h.b16 %v1544
      %v1701 = vunpack.c.l.b16 %v1545
      %v1702 = vunpack.c.h.b16 %v1545
      %v1703 = vunpack.c.l.b16 %v1546
      %v1704 = vunpack.c.h.b16 %v1546
      %v1705 = vunpack.c.l.b16 %v1547
      %v1706 = vunpack.c.h.b16 %v1547
      %v1707 = vunpack.c.l.b16 %v1548
      %v1708 = vunpack.c.h.b16 %v1548
      %v1709 = vunpack.c.l.b16 %v1549
      %v1710 = vunpack.c.h.b16 %v1549
      %v1711 = vunpack.c.l.b16 %v1550
      %v1712 = vunpack.c.h.b16 %v1550
      %v1713 = vunpack.c.l.b16 %v1551
      %v1714 = vunpack.c.h.b16 %v1551
      %v1715 = vunpack.c.l.b16 %v1552
      %v1716 = vunpack.c.h.b16 %v1552
      %v1717 = vunpack.c.l.b16 %v1553
      %v1718 = vunpack.c.h.b16 %v1553
      %v1719 = vunpack.c.l.b16 %v1554
      %v1720 = vunpack.c.h.b16 %v1554
      %v1721 = vunpack.c.l.b16 %v1555
      %v1722 = vunpack.c.h.b16 %v1555
      %v1723 = vunpack.c.l.b16 %v1556
      %v1724 = vunpack.c.h.b16 %v1556
      %v1725 = vunpack.c.l.b16 %v1557
      %v1726 = vunpack.c.h.b16 %v1557
      %v1727 = vunpack.c.l.b16 %v1558
      %v1728 = vunpack.c.h.b16 %v1558
      %v1729 = vunpack.c.l.b16 %v1559
      %v1730 = vunpack.c.h.b16 %v1559
      %v1731 = vunpack.c.l.b16 %v1560
      %v1732 = vunpack.c.h.b16 %v1560
      %v1733 = vunpack.c.l.b16 %v1561
      %v1734 = vunpack.c.h.b16 %v1561
      %v1735 = vunpack.c.l.b16 %v1562
      %v1736 = vunpack.c.h.b16 %v1562
      %v1737 = vunpack.c.l.b16 %v1563
      %v1738 = vunpack.c.h.b16 %v1563
      %v1739 = vunpack.c.l.b16 %v1564
      %v1740 = vunpack.c.h.b16 %v1564
      %v1741 = vunpack.c.l.b16 %v1565
      %v1742 = vunpack.c.h.b16 %v1565
      %v1743 = vunpack.c.l.b16 %v1566
      %v1744 = vunpack.c.h.b16 %v1566
      %v1745 = vunpack.c.l.b16 %v1567
      %v1746 = vunpack.c.h.b16 %v1567
      %v1747 = vunpack.c.l.b16 %v1568
      %v1748 = vunpack.c.h.b16 %v1568
      %v1749 = vunpack.c.l.b16 %v1569
      %v1750 = vunpack.c.h.b16 %v1569
      %v1751 = vunpack.c.l.b16 %v1570
      %v1752 = vunpack.c.h.b16 %v1570
      %v1753 = vunpack.c.l.b16 %v1571
      %v1754 = vunpack.c.h.b16 %v1571
      %v1755 = vunpack.c.l.b16 %v1572
      %v1756 = vunpack.c.h.b16 %v1572
      %v1757 = vunpack.c.l.b16 %v1573
      %v1758 = vunpack.c.h.b16 %v1573
      %v1759 = vunpack.c.l.b16 %v1574
      %v1760 = vunpack.c.h.b16 %v1574
      %v1761 = vunpack.c.l.b16 %v1575
      %v1762 = vunpack.c.h.b16 %v1575
      %v1763 = vunpack.c.l.b16 %v1576
      %v1764 = vunpack.c.h.b16 %v1576
      %v1765 = vunpack.c.l.b16 %v1577
      %v1766 = vunpack.c.h.b16 %v1577
      %v1767 = vunpack.c.l.b16 %v1578
      %v1768 = vunpack.c.h.b16 %v1578
      %v1769 = vunpack.c.l.b16 %v1579
      %v1770 = vunpack.c.h.b16 %v1579
      %v1771 = vunpack.c.l.b16 %v1580
      %v1772 = vunpack.c.h.b16 %v1580
      %v1773 = vunpack.c.l.b16 %v1581
      %v1774 = vunpack.c.h.b16 %v1581
      %v1775 = vunpack.c.l.b16 %v1582
      %v1776 = vunpack.c.h.b16 %v1582
      %v1777 = vunpack.c.l.b16 %v1583
      %v1778 = vunpack.c.h.b16 %v1583
      %v1779 = vunpack.c.l.b16 %v1584
      %v1780 = vunpack.c.h.b16 %v1584
      %v1781 = vunpack.c.l.b16 %v1585
      %v1782 = vunpack.c.h.b16 %v1585
      %v1783 = vunpack.c.l.b16 %v1586
      %v1784 = vunpack.c.h.b16 %v1586
      %v1785 = vpack.c.b16 %v1659, %v1657
      %v1786 = vpack.c.b16 %v1660, %v1658
      %v1787 = vpack.c.b16 %v1663, %v1661
      %v1788 = vpack.c.b16 %v1664, %v1662
      %v1789 = vpack.c.b16 %v1667, %v1665
      %v1790 = vpack.c.b16 %v1668, %v1666
      %v1791 = vpack.c.b16 %v1671, %v1669
      %v1792 = vpack.c.b16 %v1672, %v1670
      %v1793 = vpack.c.b16 %v1675, %v1673
      %v1794 = vpack.c.b16 %v1676, %v1674
      %v1795 = vpack.c.b16 %v1679, %v1677
      %v1796 = vpack.c.b16 %v1680, %v1678
      %v1797 = vpack.c.b16 %v1683, %v1681
      %v1798 = vpack.c.b16 %v1684, %v1682
      %v1799 = vpack.c.b16 %v1687, %v1685
      %v1800 = vpack.c.b16 %v1688, %v1686
      %v1801 = vpack.c.b16 %v1691, %v1689
      %v1802 = vpack.c.b16 %v1692, %v1690
      %v1803 = vpack.c.b16 %v1695, %v1693
      %v1804 = vpack.c.b16 %v1696, %v1694
      %v1805 = vpack.c.b16 %v1699, %v1697
      %v1806 = vpack.c.b16 %v1700, %v1698
      %v1807 = vpack.c.b16 %v1703, %v1701
      %v1808 = vpack.c.b16 %v1704, %v1702
      %v1809 = vpack.c.b16 %v1707, %v1705
      %v1810 = vpack.c.b16 %v1708, %v1706
      %v1811 = vpack.c.b16 %v1711, %v1709
      %v1812 = vpack.c.b16 %v1712, %v1710
      %v1813 = vpack.c.b16 %v1715, %v1713
      %v1814 = vpack.c.b16 %v1716, %v1714
      %v1815 = vpack.c.b16 %v1719, %v1717
      %v1816 = vpack.c.b16 %v1720, %v1718
      %v1817 = vpack.c.b16 %v1723, %v1721
      %v1818 = vpack.c.b16 %v1724, %v1722
      %v1819 = vpack.c.b16 %v1727, %v1725
      %v1820 = vpack.c.b16 %v1728, %v1726
      %v1821 = vpack.c.b16 %v1731, %v1729
      %v1822 = vpack.c.b16 %v1732, %v1730
      %v1823 = vpack.c.b16 %v1735, %v1733
      %v1824 = vpack.c.b16 %v1736, %v1734
      %v1825 = vpack.c.b16 %v1739, %v1737
      %v1826 = vpack.c.b16 %v1740, %v1738
      %v1827 = vpack.c.b16 %v1743, %v1741
      %v1828 = vpack.c.b16 %v1744, %v1742
      %v1829 = vpack.c.b16 %v1747, %v1745
      %v1830 = vpack.c.b16 %v1748, %v1746
      %v1831 = vpack.c.b16 %v1751, %v1749
      %v1832 = vpack.c.b16 %v1752, %v1750
      %v1833 = vpack.c.b16 %v1755, %v1753
      %v1834 = vpack.c.b16 %v1756, %v1754
      %v1835 = vpack.c.b16 %v1759, %v1757
      %v1836 = vpack.c.b16 %v1760, %v1758
      %v1837 = vpack.c.b16 %v1763, %v1761
      %v1838 = vpack.c.b16 %v1764, %v1762
      %v1839 = vpack.c.b16 %v1767, %v1765
      %v1840 = vpack.c.b16 %v1768, %v1766
      %v1841 = vpack.c.b16 %v1771, %v1769
      %v1842 = vpack.c.b16 %v1772, %v1770
      %v1843 = vpack.c.b16 %v1775, %v1773
      %v1844 = vpack.c.b16 %v1776, %v1774
      %v1845 = vpack.c.b16 %v1779, %v1777
      %v1846 = vpack.c.b16 %v1780, %v1778
      %v1847 = vpack.c.b16 %v1783, %v1781
      %v1848 = vpack.c.b16 %v1784, %v1782
      %1913 = vmatpush.bf16.msra.mxu0 %v1799
      %1914 = vmatpush.bf16.msra.mxu0 %v1797
      %1915 = vmatpush.bf16.msra.mxu0 %v1795
      %1916 = vmatpush.bf16.msra.mxu0 %v1793
      %1917 = vmatpush.bf16.msra.mxu0 %v1791
      %1918 = vmatpush.bf16.msra.mxu0 %v1789
      %1919 = vmatpush.bf16.msra.mxu0 %v1787
      %1920 = vmatpush.bf16.msra.mxu0 %v1785
      %1921 = vmatmul.bf16.gmra.mxu0 %v1491
      %v1922 = vpop.f32.mrf.mxu0
      %v1923 = vadd.f32 %v1589, %v1922
      %v1924 = vpop.f32.mrf.mxu0
      %v1925 = vadd.f32 %v1589, %v1924
      %1926 = vmatmul.bf16.gmra.mxu0 %v1495
      %v1927 = vpop.f32.mrf.mxu0
      %v1928 = vadd.f32 %v1589, %v1927
      %v1929 = vpop.f32.mrf.mxu0
      %v1930 = vadd.f32 %v1589, %v1929
      %1931 = vmatmul.bf16.gmra.mxu0 %v1499
      %v1932 = vpop.f32.mrf.mxu0
      %v1933 = vadd.f32 %v1589, %v1932
      %v1934 = vpop.f32.mrf.mxu0
      %v1935 = vadd.f32 %v1589, %v1934
      %1936 = vmatmul.bf16.gmra.mxu0 %v1503
      %v1937 = vpop.f32.mrf.mxu0
      %v1938 = vadd.f32 %v1589, %v1937
      %v1939 = vpop.f32.mrf.mxu0
      %v1940 = vadd.f32 %v1589, %v1939
      %1941 = vmatmul.bf16.gmra.mxu0 %v1507
      %v1942 = vpop.f32.mrf.mxu0
      %v1943 = vadd.f32 %v1589, %v1942
      %v1944 = vpop.f32.mrf.mxu0
      %v1945 = vadd.f32 %v1589, %v1944
      %1946 = vmatmul.bf16.gmra.mxu0 %v1511
      %v1947 = vpop.f32.mrf.mxu0
      %v1948 = vadd.f32 %v1589, %v1947
      %v1949 = vpop.f32.mrf.mxu0
      %v1950 = vadd.f32 %v1589, %v1949
      %1951 = vmatmul.bf16.gmra.mxu0 %v1515
      %v1952 = vpop.f32.mrf.mxu0
      %v1953 = vadd.f32 %v1589, %v1952
      %v1954 = vpop.f32.mrf.mxu0
      %v1955 = vadd.f32 %v1589, %v1954
      %1956 = vmatmul.bf16.gmra.mxu0 %v1519
      %v1957 = vpop.f32.mrf.mxu0
      %v1958 = vadd.f32 %v1589, %v1957
      %v1959 = vpop.f32.mrf.mxu0
      %v1960 = vadd.f32 %v1589, %v1959
      %1961 = vdwg.mxu0
      %1962 = vmatpush.bf16.msra.mxu0 %v1815
      %1963 = vmatpush.bf16.msra.mxu0 %v1813
      %1964 = vmatpush.bf16.msra.mxu0 %v1811
      %1965 = vmatpush.bf16.msra.mxu0 %v1809
      %1966 = vmatpush.bf16.msra.mxu0 %v1807
      %1967 = vmatpush.bf16.msra.mxu0 %v1805
      %1968 = vmatpush.bf16.msra.mxu0 %v1803
      %1969 = vmatpush.bf16.msra.mxu0 %v1801
      %1970 = vmatmul.bf16.gmra.mxu0 %v1492
      %v1971 = vpop.f32.mrf.mxu0
      %v1972 = vadd.f32 %v1923, %v1971
      %v1973 = vpop.f32.mrf.mxu0
      %v1974 = vadd.f32 %v1925, %v1973
      %1975 = vmatmul.bf16.gmra.mxu0 %v1496
      %v1976 = vpop.f32.mrf.mxu0
      %v1977 = vadd.f32 %v1928, %v1976
      %v1978 = vpop.f32.mrf.mxu0
      %v1979 = vadd.f32 %v1930, %v1978
      %1980 = vmatmul.bf16.gmra.mxu0 %v1500
      %v1981 = vpop.f32.mrf.mxu0
      %v1982 = vadd.f32 %v1933, %v1981
      %v1983 = vpop.f32.mrf.mxu0
      %v1984 = vadd.f32 %v1935, %v1983
      %1985 = vmatmul.bf16.gmra.mxu0 %v1504
      %v1986 = vpop.f32.mrf.mxu0
      %v1987 = vadd.f32 %v1938, %v1986
      %v1988 = vpop.f32.mrf.mxu0
      %v1989 = vadd.f32 %v1940, %v1988
      %1990 = vmatmul.bf16.gmra.mxu0 %v1508
      %v1991 = vpop.f32.mrf.mxu0
      %v1992 = vadd.f32 %v1943, %v1991
      %v1993 = vpop.f32.mrf.mxu0
      %v1994 = vadd.f32 %v1945, %v1993
      %1995 = vmatmul.bf16.gmra.mxu0 %v1512
      %v1996 = vpop.f32.mrf.mxu0
      %v1997 = vadd.f32 %v1948, %v1996
      %v1998 = vpop.f32.mrf.mxu0
      %v1999 = vadd.f32 %v1950, %v1998
      %2000 = vmatmul.bf16.gmra.mxu0 %v1516
      %v2001 = vpop.f32.mrf.mxu0
      %v2002 = vadd.f32 %v1953, %v2001
      %v2003 = vpop.f32.mrf.mxu0
      %v2004 = vadd.f32 %v1955, %v2003
      %2005 = vmatmul.bf16.gmra.mxu0 %v1520
      %v2006 = vpop.f32.mrf.mxu0
      %v2007 = vadd.f32 %v1958, %v2006
      %v2008 = vpop.f32.mrf.mxu0
      %v2009 = vadd.f32 %v1960, %v2008
      %2010 = vdwg.mxu0
      %2011 = vmatpush.bf16.msra.mxu0 %v1831
      %2012 = vmatpush.bf16.msra.mxu0 %v1829
      %2013 = vmatpush.bf16.msra.mxu0 %v1827
      %2014 = vmatpush.bf16.msra.mxu0 %v1825
      %2015 = vmatpush.bf16.msra.mxu0 %v1823
      %2016 = vmatpush.bf16.msra.mxu0 %v1821
      %2017 = vmatpush.bf16.msra.mxu0 %v1819
      %2018 = vmatpush.bf16.msra.mxu0 %v1817
      %2019 = vmatmul.bf16.gmra.mxu0 %v1493
      %v2020 = vpop.f32.mrf.mxu0
      %v2021 = vadd.f32 %v1972, %v2020
      %v2022 = vpop.f32.mrf.mxu0
      %v2023 = vadd.f32 %v1974, %v2022
      %2024 = vmatmul.bf16.gmra.mxu0 %v1497
      %v2025 = vpop.f32.mrf.mxu0
      %v2026 = vadd.f32 %v1977, %v2025
      %v2027 = vpop.f32.mrf.mxu0
      %v2028 = vadd.f32 %v1979, %v2027
      %2029 = vmatmul.bf16.gmra.mxu0 %v1501
      %v2030 = vpop.f32.mrf.mxu0
      %v2031 = vadd.f32 %v1982, %v2030
      %v2032 = vpop.f32.mrf.mxu0
      %v2033 = vadd.f32 %v1984, %v2032
      %2034 = vmatmul.bf16.gmra.mxu0 %v1505
      %v2035 = vpop.f32.mrf.mxu0
      %v2036 = vadd.f32 %v1987, %v2035
      %v2037 = vpop.f32.mrf.mxu0
      %v2038 = vadd.f32 %v1989, %v2037
      %2039 = vmatmul.bf16.gmra.mxu0 %v1509
      %v2040 = vpop.f32.mrf.mxu0
      %v2041 = vadd.f32 %v1992, %v2040
      %v2042 = vpop.f32.mrf.mxu0
      %v2043 = vadd.f32 %v1994, %v2042
      %2044 = vmatmul.bf16.gmra.mxu0 %v1513
      %v2045 = vpop.f32.mrf.mxu0
      %v2046 = vadd.f32 %v1997, %v2045
      %v2047 = vpop.f32.mrf.mxu0
      %v2048 = vadd.f32 %v1999, %v2047
      %2049 = vmatmul.bf16.gmra.mxu0 %v1517
      %v2050 = vpop.f32.mrf.mxu0
      %v2051 = vadd.f32 %v2002, %v2050
      %v2052 = vpop.f32.mrf.mxu0
      %v2053 = vadd.f32 %v2004, %v2052
      %2054 = vmatmul.bf16.gmra.mxu0 %v1521
      %v2055 = vpop.f32.mrf.mxu0
      %v2056 = vadd.f32 %v2007, %v2055
      %v2057 = vpop.f32.mrf.mxu0
      %v2058 = vadd.f32 %v2009, %v2057
      %2059 = vdwg.mxu0
      %2060 = vmatpush.bf16.msra.mxu0 %v1847
      %2061 = vmatpush.bf16.msra.mxu0 %v1845
      %2062 = vmatpush.bf16.msra.mxu0 %v1843
      %2063 = vmatpush.bf16.msra.mxu0 %v1841
      %2064 = vmatpush.bf16.msra.mxu0 %v1839
      %2065 = vmatpush.bf16.msra.mxu0 %v1837
      %2066 = vmatpush.bf16.msra.mxu0 %v1835
      %2067 = vmatpush.bf16.msra.mxu0 %v1833
      %2068 = vmatmul.bf16.gmra.mxu0 %v1494
      %v2069 = vpop.f32.mrf.mxu0
      %v2070 = vadd.f32 %v2021, %v2069
      %v2071 = vpop.f32.mrf.mxu0
      %v2072 = vadd.f32 %v2023, %v2071
      %2073 = vmatmul.bf16.gmra.mxu0 %v1498
      %v2074 = vpop.f32.mrf.mxu0
      %v2075 = vadd.f32 %v2026, %v2074
      %v2076 = vpop.f32.mrf.mxu0
      %v2077 = vadd.f32 %v2028, %v2076
      %2078 = vmatmul.bf16.gmra.mxu0 %v1502
      %v2079 = vpop.f32.mrf.mxu0
      %v2080 = vadd.f32 %v2031, %v2079
      %v2081 = vpop.f32.mrf.mxu0
      %v2082 = vadd.f32 %v2033, %v2081
      %2083 = vmatmul.bf16.gmra.mxu0 %v1506
      %v2084 = vpop.f32.mrf.mxu0
      %v2085 = vadd.f32 %v2036, %v2084
      %v2086 = vpop.f32.mrf.mxu0
      %v2087 = vadd.f32 %v2038, %v2086
      %2088 = vmatmul.bf16.gmra.mxu0 %v1510
      %v2089 = vpop.f32.mrf.mxu0
      %v2090 = vadd.f32 %v2041, %v2089
      %v2091 = vpop.f32.mrf.mxu0
      %v2092 = vadd.f32 %v2043, %v2091
      %2093 = vmatmul.bf16.gmra.mxu0 %v1514
      %v2094 = vpop.f32.mrf.mxu0
      %v2095 = vadd.f32 %v2046, %v2094
      %v2096 = vpop.f32.mrf.mxu0
      %v2097 = vadd.f32 %v2048, %v2096
      %2098 = vmatmul.bf16.gmra.mxu0 %v1518
      %v2099 = vpop.f32.mrf.mxu0
      %v2100 = vadd.f32 %v2051, %v2099
      %v2101 = vpop.f32.mrf.mxu0
      %v2102 = vadd.f32 %v2053, %v2101
      %2103 = vmatmul.bf16.gmra.mxu0 %v1522
      %v2104 = vpop.f32.mrf.mxu0
      %v2105 = vadd.f32 %v2056, %v2104
      %v2106 = vpop.f32.mrf.mxu0
      %v2107 = vadd.f32 %v2058, %v2106
      %2108 = vdwg.mxu0
      %2109 = vmatpush.bf16.msra.mxu0 %v1800
      %2110 = vmatpush.bf16.msra.mxu0 %v1798
      %2111 = vmatpush.bf16.msra.mxu0 %v1796
      %2112 = vmatpush.bf16.msra.mxu0 %v1794
      %2113 = vmatpush.bf16.msra.mxu0 %v1792
      %2114 = vmatpush.bf16.msra.mxu0 %v1790
      %2115 = vmatpush.bf16.msra.mxu0 %v1788
      %2116 = vmatpush.bf16.msra.mxu0 %v1786
      %2117 = vmatmul.bf16.gmra.mxu0 %v1491
      %v2118 = vpop.f32.mrf.mxu0
      %v2119 = vadd.f32 %v1590, %v2118
      %v2120 = vpop.f32.mrf.mxu0
      %v2121 = vadd.f32 %v1590, %v2120
      %2122 = vmatmul.bf16.gmra.mxu0 %v1495
      %v2123 = vpop.f32.mrf.mxu0
      %v2124 = vadd.f32 %v1590, %v2123
      %v2125 = vpop.f32.mrf.mxu0
      %v2126 = vadd.f32 %v1590, %v2125
      %2127 = vmatmul.bf16.gmra.mxu0 %v1499
      %v2128 = vpop.f32.mrf.mxu0
      %v2129 = vadd.f32 %v1590, %v2128
      %v2130 = vpop.f32.mrf.mxu0
      %v2131 = vadd.f32 %v1590, %v2130
      %2132 = vmatmul.bf16.gmra.mxu0 %v1503
      %v2133 = vpop.f32.mrf.mxu0
      %v2134 = vadd.f32 %v1590, %v2133
      %v2135 = vpop.f32.mrf.mxu0
      %v2136 = vadd.f32 %v1590, %v2135
      %2137 = vmatmul.bf16.gmra.mxu0 %v1507
      %v2138 = vpop.f32.mrf.mxu0
      %v2139 = vadd.f32 %v1590, %v2138
      %v2140 = vpop.f32.mrf.mxu0
      %v2141 = vadd.f32 %v1590, %v2140
      %2142 = vmatmul.bf16.gmra.mxu0 %v1511
      %v2143 = vpop.f32.mrf.mxu0
      %v2144 = vadd.f32 %v1590, %v2143
      %v2145 = vpop.f32.mrf.mxu0
      %v2146 = vadd.f32 %v1590, %v2145
      %2147 = vmatmul.bf16.gmra.mxu0 %v1515
      %v2148 = vpop.f32.mrf.mxu0
      %v2149 = vadd.f32 %v1590, %v2148
      %v2150 = vpop.f32.mrf.mxu0
      %v2151 = vadd.f32 %v1590, %v2150
      %2152 = vmatmul.bf16.gmra.mxu0 %v1519
      %v2153 = vpop.f32.mrf.mxu0
      %v2154 = vadd.f32 %v1590, %v2153
      %v2155 = vpop.f32.mrf.mxu0
      %v2156 = vadd.f32 %v1590, %v2155
      %2157 = vdwg.mxu0
      %2158 = vmatpush.bf16.msra.mxu0 %v1816
      %2159 = vmatpush.bf16.msra.mxu0 %v1814
      %2160 = vmatpush.bf16.msra.mxu0 %v1812
      %2161 = vmatpush.bf16.msra.mxu0 %v1810
      %2162 = vmatpush.bf16.msra.mxu0 %v1808
      %2163 = vmatpush.bf16.msra.mxu0 %v1806
      %2164 = vmatpush.bf16.msra.mxu0 %v1804
      %2165 = vmatpush.bf16.msra.mxu0 %v1802
      %2166 = vmatmul.bf16.gmra.mxu0 %v1492
      %v2167 = vpop.f32.mrf.mxu0
      %v2168 = vadd.f32 %v2119, %v2167
      %v2169 = vpop.f32.mrf.mxu0
      %v2170 = vadd.f32 %v2121, %v2169
      %2171 = vmatmul.bf16.gmra.mxu0 %v1496
      %v2172 = vpop.f32.mrf.mxu0
      %v2173 = vadd.f32 %v2124, %v2172
      %v2174 = vpop.f32.mrf.mxu0
      %v2175 = vadd.f32 %v2126, %v2174
      %2176 = vmatmul.bf16.gmra.mxu0 %v1500
      %v2177 = vpop.f32.mrf.mxu0
      %v2178 = vadd.f32 %v2129, %v2177
      %v2179 = vpop.f32.mrf.mxu0
      %v2180 = vadd.f32 %v2131, %v2179
      %2181 = vmatmul.bf16.gmra.mxu0 %v1504
      %v2182 = vpop.f32.mrf.mxu0
      %v2183 = vadd.f32 %v2134, %v2182
      %v2184 = vpop.f32.mrf.mxu0
      %v2185 = vadd.f32 %v2136, %v2184
      %2186 = vmatmul.bf16.gmra.mxu0 %v1508
      %v2187 = vpop.f32.mrf.mxu0
      %v2188 = vadd.f32 %v2139, %v2187
      %v2189 = vpop.f32.mrf.mxu0
      %v2190 = vadd.f32 %v2141, %v2189
      %2191 = vmatmul.bf16.gmra.mxu0 %v1512
      %v2192 = vpop.f32.mrf.mxu0
      %v2193 = vadd.f32 %v2144, %v2192
      %v2194 = vpop.f32.mrf.mxu0
      %v2195 = vadd.f32 %v2146, %v2194
      %2196 = vmatmul.bf16.gmra.mxu0 %v1516
      %v2197 = vpop.f32.mrf.mxu0
      %v2198 = vadd.f32 %v2149, %v2197
      %v2199 = vpop.f32.mrf.mxu0
      %v2200 = vadd.f32 %v2151, %v2199
      %2201 = vmatmul.bf16.gmra.mxu0 %v1520
      %v2202 = vpop.f32.mrf.mxu0
      %v2203 = vadd.f32 %v2154, %v2202
      %v2204 = vpop.f32.mrf.mxu0
      %v2205 = vadd.f32 %v2156, %v2204
      %2206 = vdwg.mxu0
      %2207 = vmatpush.bf16.msra.mxu0 %v1832
      %2208 = vmatpush.bf16.msra.mxu0 %v1830
      %2209 = vmatpush.bf16.msra.mxu0 %v1828
      %2210 = vmatpush.bf16.msra.mxu0 %v1826
      %2211 = vmatpush.bf16.msra.mxu0 %v1824
      %2212 = vmatpush.bf16.msra.mxu0 %v1822
      %2213 = vmatpush.bf16.msra.mxu0 %v1820
      %2214 = vmatpush.bf16.msra.mxu0 %v1818
      %2215 = vmatmul.bf16.gmra.mxu0 %v1493
      %v2216 = vpop.f32.mrf.mxu0
      %v2217 = vadd.f32 %v2168, %v2216
      %v2218 = vpop.f32.mrf.mxu0
      %v2219 = vadd.f32 %v2170, %v2218
      %2220 = vmatmul.bf16.gmra.mxu0 %v1497
      %v2221 = vpop.f32.mrf.mxu0
      %v2222 = vadd.f32 %v2173, %v2221
      %v2223 = vpop.f32.mrf.mxu0
      %v2224 = vadd.f32 %v2175, %v2223
      %2225 = vmatmul.bf16.gmra.mxu0 %v1501
      %v2226 = vpop.f32.mrf.mxu0
      %v2227 = vadd.f32 %v2178, %v2226
      %v2228 = vpop.f32.mrf.mxu0
      %v2229 = vadd.f32 %v2180, %v2228
      %2230 = vmatmul.bf16.gmra.mxu0 %v1505
      %v2231 = vpop.f32.mrf.mxu0
      %v2232 = vadd.f32 %v2183, %v2231
      %v2233 = vpop.f32.mrf.mxu0
      %v2234 = vadd.f32 %v2185, %v2233
      %2235 = vmatmul.bf16.gmra.mxu0 %v1509
      %v2236 = vpop.f32.mrf.mxu0
      %v2237 = vadd.f32 %v2188, %v2236
      %v2238 = vpop.f32.mrf.mxu0
      %v2239 = vadd.f32 %v2190, %v2238
      %2240 = vmatmul.bf16.gmra.mxu0 %v1513
      %v2241 = vpop.f32.mrf.mxu0
      %v2242 = vadd.f32 %v2193, %v2241
      %v2243 = vpop.f32.mrf.mxu0
      %v2244 = vadd.f32 %v2195, %v2243
      %2245 = vmatmul.bf16.gmra.mxu0 %v1517
      %v2246 = vpop.f32.mrf.mxu0
      %v2247 = vadd.f32 %v2198, %v2246
      %v2248 = vpop.f32.mrf.mxu0
      %v2249 = vadd.f32 %v2200, %v2248
      %2250 = vmatmul.bf16.gmra.mxu0 %v1521
      %v2251 = vpop.f32.mrf.mxu0
      %v2252 = vadd.f32 %v2203, %v2251
      %v2253 = vpop.f32.mrf.mxu0
      %v2254 = vadd.f32 %v2205, %v2253
      %2255 = vdwg.mxu0
      %2256 = vmatpush.bf16.msra.mxu0 %v1848
      %2257 = vmatpush.bf16.msra.mxu0 %v1846
      %2258 = vmatpush.bf16.msra.mxu0 %v1844
      %2259 = vmatpush.bf16.msra.mxu0 %v1842
      %2260 = vmatpush.bf16.msra.mxu0 %v1840
      %2261 = vmatpush.bf16.msra.mxu0 %v1838
      %2262 = vmatpush.bf16.msra.mxu0 %v1836
      %2263 = vmatpush.bf16.msra.mxu0 %v1834
      %2264 = vmatmul.bf16.gmra.mxu0 %v1494
      %v2265 = vpop.f32.mrf.mxu0
      %v2266 = vadd.f32 %v2217, %v2265
      %v2267 = vpop.f32.mrf.mxu0
      %v2268 = vadd.f32 %v2219, %v2267
      %2269 = vmatmul.bf16.gmra.mxu0 %v1498
      %v2270 = vpop.f32.mrf.mxu0
      %v2271 = vadd.f32 %v2222, %v2270
      %v2272 = vpop.f32.mrf.mxu0
      %v2273 = vadd.f32 %v2224, %v2272
      %2274 = vmatmul.bf16.gmra.mxu0 %v1502
      %v2275 = vpop.f32.mrf.mxu0
      %v2276 = vadd.f32 %v2227, %v2275
      %v2277 = vpop.f32.mrf.mxu0
      %v2278 = vadd.f32 %v2229, %v2277
      %2279 = vmatmul.bf16.gmra.mxu0 %v1506
      %v2280 = vpop.f32.mrf.mxu0
      %v2281 = vadd.f32 %v2232, %v2280
      %v2282 = vpop.f32.mrf.mxu0
      %v2283 = vadd.f32 %v2234, %v2282
      %2284 = vmatmul.bf16.gmra.mxu0 %v1510
      %v2285 = vpop.f32.mrf.mxu0
      %v2286 = vadd.f32 %v2237, %v2285
      %v2287 = vpop.f32.mrf.mxu0
      %v2288 = vadd.f32 %v2239, %v2287
      %2289 = vmatmul.bf16.gmra.mxu0 %v1514
      %v2290 = vpop.f32.mrf.mxu0
      %v2291 = vadd.f32 %v2242, %v2290
      %v2292 = vpop.f32.mrf.mxu0
      %v2293 = vadd.f32 %v2244, %v2292
      %2294 = vmatmul.bf16.gmra.mxu0 %v1518
      %v2295 = vpop.f32.mrf.mxu0
      %v2296 = vadd.f32 %v2247, %v2295
      %v2297 = vpop.f32.mrf.mxu0
      %v2298 = vadd.f32 %v2249, %v2297
      %2299 = vmatmul.bf16.gmra.mxu0 %v1522
      %v2300 = vpop.f32.mrf.mxu0
      %v2301 = vadd.f32 %v2252, %v2300
      %v2302 = vpop.f32.mrf.mxu0
      %v2303 = vadd.f32 %v2254, %v2302
      %2304 = vdwg.mxu0
      %v2305 = vpack.c.bf16 %v2266, %v2070
      %v2306 = vpack.c.bf16 %v2268, %v2072
      %v2307 = vpack.c.bf16 %v2271, %v2075
      %v2308 = vpack.c.bf16 %v2273, %v2077
      %v2309 = vpack.c.bf16 %v2276, %v2080
      %v2310 = vpack.c.bf16 %v2278, %v2082
      %v2311 = vpack.c.bf16 %v2281, %v2085
      %v2312 = vpack.c.bf16 %v2283, %v2087
      %v2313 = vpack.c.bf16 %v2286, %v2090
      %v2314 = vpack.c.bf16 %v2288, %v2092
      %v2315 = vpack.c.bf16 %v2291, %v2095
      %v2316 = vpack.c.bf16 %v2293, %v2097
      %v2317 = vpack.c.bf16 %v2296, %v2100
      %v2318 = vpack.c.bf16 %v2298, %v2102
      %v2319 = vpack.c.bf16 %v2301, %v2105
      %v2320 = vpack.c.bf16 %v2303, %v2107
      %v2321 = vunpack.c.l.bf16 %v2305
      %v2322 = vunpack.c.h.bf16 %v2305
      %v2323 = vunpack.c.l.bf16 %v2306
      %v2324 = vunpack.c.h.bf16 %v2306
      %v2325 = vunpack.c.l.bf16 %v2307
      %v2326 = vunpack.c.h.bf16 %v2307
      %v2327 = vunpack.c.l.bf16 %v2308
      %v2328 = vunpack.c.h.bf16 %v2308
      %v2329 = vunpack.c.l.bf16 %v2309
      %v2330 = vunpack.c.h.bf16 %v2309
      %v2331 = vunpack.c.l.bf16 %v2310
      %v2332 = vunpack.c.h.bf16 %v2310
      %v2333 = vunpack.c.l.bf16 %v2311
      %v2334 = vunpack.c.h.bf16 %v2311
      %v2335 = vunpack.c.l.bf16 %v2312
      %v2336 = vunpack.c.h.bf16 %v2312
      %v2337 = vunpack.c.l.bf16 %v2313
      %v2338 = vunpack.c.h.bf16 %v2313
      %v2339 = vunpack.c.l.bf16 %v2314
      %v2340 = vunpack.c.h.bf16 %v2314
      %v2341 = vunpack.c.l.bf16 %v2315
      %v2342 = vunpack.c.h.bf16 %v2315
      %v2343 = vunpack.c.l.bf16 %v2316
      %v2344 = vunpack.c.h.bf16 %v2316
      %v2345 = vunpack.c.l.bf16 %v2317
      %v2346 = vunpack.c.h.bf16 %v2317
      %v2347 = vunpack.c.l.bf16 %v2318
      %v2348 = vunpack.c.h.bf16 %v2318
      %v2349 = vunpack.c.l.bf16 %v2319
      %v2350 = vunpack.c.h.bf16 %v2319
      %v2351 = vunpack.c.l.bf16 %v2320
      %v2352 = vunpack.c.h.bf16 %v2320
      %v2353 = vmul.f32 %v2321, 0.5
      %v2354 = vmul.f32 %v2322, 0.5
      %v2355 = vmul.f32 %v2323, 0.5
      %v2356 = vmul.f32 %v2324, 0.5
      %v2357 = vmul.f32 %v2325, 0.5
      %v2358 = vmul.f32 %v2326, 0.5
      %v2359 = vmul.f32 %v2327, 0.5
      %v2360 = vmul.f32 %v2328, 0.5
      %v2361 = vmul.f32 %v2329, 0.5
      %v2362 = vmul.f32 %v2330, 0.5
      %v2363 = vmul.f32 %v2331, 0.5
      %v2364 = vmul.f32 %v2332, 0.5
      %v2365 = vmul.f32 %v2333, 0.5
      %v2366 = vmul.f32 %v2334, 0.5
      %v2367 = vmul.f32 %v2335, 0.5
      %v2368 = vmul.f32 %v2336, 0.5
      %v2369 = vmul.f32 %v2337, 0.5
      %v2370 = vmul.f32 %v2338, 0.5
      %v2371 = vmul.f32 %v2339, 0.5
      %v2372 = vmul.f32 %v2340, 0.5
      %v2373 = vmul.f32 %v2341, 0.5
      %v2374 = vmul.f32 %v2342, 0.5
      %v2375 = vmul.f32 %v2343, 0.5
      %v2376 = vmul.f32 %v2344, 0.5
      %v2377 = vmul.f32 %v2345, 0.5
      %v2378 = vmul.f32 %v2346, 0.5
      %v2379 = vmul.f32 %v2347, 0.5
      %v2380 = vmul.f32 %v2348, 0.5
      %v2381 = vmul.f32 %v2349, 0.5
      %v2382 = vmul.f32 %v2350, 0.5
      %v2383 = vmul.f32 %v2351, 0.5
      %v2384 = vmul.f32 %v2352, 0.5
      %v2385 = vpack.c.bf16 %v2354, %v2353
      %v2386 = vpack.c.bf16 %v2356, %v2355
      %v2387 = vpack.c.bf16 %v2358, %v2357
      %v2388 = vpack.c.bf16 %v2360, %v2359
      %v2389 = vpack.c.bf16 %v2362, %v2361
      %v2390 = vpack.c.bf16 %v2364, %v2363
      %v2391 = vpack.c.bf16 %v2366, %v2365
      %v2392 = vpack.c.bf16 %v2368, %v2367
      %v2393 = vpack.c.bf16 %v2370, %v2369
      %v2394 = vpack.c.bf16 %v2372, %v2371
      %v2395 = vpack.c.bf16 %v2374, %v2373
      %v2396 = vpack.c.bf16 %v2376, %v2375
      %v2397 = vpack.c.bf16 %v2378, %v2377
      %v2398 = vpack.c.bf16 %v2380, %v2379
      %v2399 = vpack.c.bf16 %v2382, %v2381
      %v2400 = vpack.c.bf16 %v2384, %v2383
      %v2401 = vunpack.c.l.bf16 %v2385
      %v2402 = vunpack.c.h.bf16 %v2385
      %v2403 = vunpack.c.l.bf16 %v2386
      %v2404 = vunpack.c.h.bf16 %v2386
      %v2405 = vunpack.c.l.bf16 %v2387
      %v2406 = vunpack.c.h.bf16 %v2387
      %v2407 = vunpack.c.l.bf16 %v2388
      %v2408 = vunpack.c.h.bf16 %v2388
      %v2409 = vunpack.c.l.bf16 %v2389
      %v2410 = vunpack.c.h.bf16 %v2389
      %v2411 = vunpack.c.l.bf16 %v2390
      %v2412 = vunpack.c.h.bf16 %v2390
      %v2413 = vunpack.c.l.bf16 %v2391
      %v2414 = vunpack.c.h.bf16 %v2391
      %v2415 = vunpack.c.l.bf16 %v2392
      %v2416 = vunpack.c.h.bf16 %v2392
      %v2417 = vunpack.c.l.bf16 %v2393
      %v2418 = vunpack.c.h.bf16 %v2393
      %v2419 = vunpack.c.l.bf16 %v2394
      %v2420 = vunpack.c.h.bf16 %v2394
      %v2421 = vunpack.c.l.bf16 %v2395
      %v2422 = vunpack.c.h.bf16 %v2395
      %v2423 = vunpack.c.l.bf16 %v2396
      %v2424 = vunpack.c.h.bf16 %v2396
      %v2425 = vunpack.c.l.bf16 %v2397
      %v2426 = vunpack.c.h.bf16 %v2397
      %v2427 = vunpack.c.l.bf16 %v2398
      %v2428 = vunpack.c.h.bf16 %v2398
      %v2429 = vunpack.c.l.bf16 %v2399
      %v2430 = vunpack.c.h.bf16 %v2399
      %v2431 = vunpack.c.l.bf16 %v2400
      %v2432 = vunpack.c.h.bf16 %v2400
      %v2433 = vtanh.pop %v2401
      %v2434 = vtanh.pop %v2402
      %v2435 = vtanh.pop %v2403
      %v2436 = vtanh.pop %v2404
      %v2437 = vtanh.pop %v2405
      %v2438 = vtanh.pop %v2406
      %v2439 = vtanh.pop %v2407
      %v2440 = vtanh.pop %v2408
      %v2441 = vtanh.pop %v2409
      %v2442 = vtanh.pop %v2410
      %v2443 = vtanh.pop %v2411
      %v2444 = vtanh.pop %v2412
      %v2445 = vtanh.pop %v2413
      %v2446 = vtanh.pop %v2414
      %v2447 = vtanh.pop %v2415
      %v2448 = vtanh.pop %v2416
      %v2449 = vtanh.pop %v2417
      %v2450 = vtanh.pop %v2418
      %v2451 = vtanh.pop %v2419
      %v2452 = vtanh.pop %v2420
      %v2453 = vtanh.pop %v2421
      %v2454 = vtanh.pop %v2422
      %v2455 = vtanh.pop %v2423
      %v2456 = vtanh.pop %v2424
      %v2457 = vtanh.pop %v2425
      %v2458 = vtanh.pop %v2426
      %v2459 = vtanh.pop %v2427
      %v2460 = vtanh.pop %v2428
      %v2461 = vtanh.pop %v2429
      %v2462 = vtanh.pop %v2430
      %v2463 = vtanh.pop %v2431
      %v2464 = vtanh.pop %v2432
      %v2465 = vpack.c.bf16 %v2434, %v2433
      %v2466 = vpack.c.bf16 %v2436, %v2435
      %v2467 = vpack.c.bf16 %v2438, %v2437
      %v2468 = vpack.c.bf16 %v2440, %v2439
      %v2469 = vpack.c.bf16 %v2442, %v2441
      %v2470 = vpack.c.bf16 %v2444, %v2443
      %v2471 = vpack.c.bf16 %v2446, %v2445
      %v2472 = vpack.c.bf16 %v2448, %v2447
      %v2473 = vpack.c.bf16 %v2450, %v2449
      %v2474 = vpack.c.bf16 %v2452, %v2451
      %v2475 = vpack.c.bf16 %v2454, %v2453
      %v2476 = vpack.c.bf16 %v2456, %v2455
      %v2477 = vpack.c.bf16 %v2458, %v2457
      %v2478 = vpack.c.bf16 %v2460, %v2459
      %v2479 = vpack.c.bf16 %v2462, %v2461
      %v2480 = vpack.c.bf16 %v2464, %v2463
      %v2481 = vunpack.c.l.bf16 %v2465
      %v2482 = vunpack.c.h.bf16 %v2465
      %v2483 = vunpack.c.l.bf16 %v2466
      %v2484 = vunpack.c.h.bf16 %v2466
      %v2485 = vunpack.c.l.bf16 %v2467
      %v2486 = vunpack.c.h.bf16 %v2467
      %v2487 = vunpack.c.l.bf16 %v2468
      %v2488 = vunpack.c.h.bf16 %v2468
      %v2489 = vunpack.c.l.bf16 %v2469
      %v2490 = vunpack.c.h.bf16 %v2469
      %v2491 = vunpack.c.l.bf16 %v2470
      %v2492 = vunpack.c.h.bf16 %v2470
      %v2493 = vunpack.c.l.bf16 %v2471
      %v2494 = vunpack.c.h.bf16 %v2471
      %v2495 = vunpack.c.l.bf16 %v2472
      %v2496 = vunpack.c.h.bf16 %v2472
      %v2497 = vunpack.c.l.bf16 %v2473
      %v2498 = vunpack.c.h.bf16 %v2473
      %v2499 = vunpack.c.l.bf16 %v2474
      %v2500 = vunpack.c.h.bf16 %v2474
      %v2501 = vunpack.c.l.bf16 %v2475
      %v2502 = vunpack.c.h.bf16 %v2475
      %v2503 = vunpack.c.l.bf16 %v2476
      %v2504 = vunpack.c.h.bf16 %v2476
      %v2505 = vunpack.c.l.bf16 %v2477
      %v2506 = vunpack.c.h.bf16 %v2477
      %v2507 = vunpack.c.l.bf16 %v2478
      %v2508 = vunpack.c.h.bf16 %v2478
      %v2509 = vunpack.c.l.bf16 %v2479
      %v2510 = vunpack.c.h.bf16 %v2479
      %v2511 = vunpack.c.l.bf16 %v2480
      %v2512 = vunpack.c.h.bf16 %v2480
      %v2513 = vadd.f32 %v2481, 1.0
      %v2514 = vadd.f32 %v2482, 1.0
      %v2515 = vadd.f32 %v2483, 1.0
      %v2516 = vadd.f32 %v2484, 1.0
      %v2517 = vadd.f32 %v2485, 1.0
      %v2518 = vadd.f32 %v2486, 1.0
      %v2519 = vadd.f32 %v2487, 1.0
      %v2520 = vadd.f32 %v2488, 1.0
      %v2521 = vadd.f32 %v2489, 1.0
      %v2522 = vadd.f32 %v2490, 1.0
      %v2523 = vadd.f32 %v2491, 1.0
      %v2524 = vadd.f32 %v2492, 1.0
      %v2525 = vadd.f32 %v2493, 1.0
      %v2526 = vadd.f32 %v2494, 1.0
      %v2527 = vadd.f32 %v2495, 1.0
      %v2528 = vadd.f32 %v2496, 1.0
      %v2529 = vadd.f32 %v2497, 1.0
      %v2530 = vadd.f32 %v2498, 1.0
      %v2531 = vadd.f32 %v2499, 1.0
      %v2532 = vadd.f32 %v2500, 1.0
      %v2533 = vadd.f32 %v2501, 1.0
      %v2534 = vadd.f32 %v2502, 1.0
      %v2535 = vadd.f32 %v2503, 1.0
      %v2536 = vadd.f32 %v2504, 1.0
      %v2537 = vadd.f32 %v2505, 1.0
      %v2538 = vadd.f32 %v2506, 1.0
      %v2539 = vadd.f32 %v2507, 1.0
      %v2540 = vadd.f32 %v2508, 1.0
      %v2541 = vadd.f32 %v2509, 1.0
      %v2542 = vadd.f32 %v2510, 1.0
      %v2543 = vadd.f32 %v2511, 1.0
      %v2544 = vadd.f32 %v2512, 1.0
      %v2545 = vpack.c.bf16 %v2514, %v2513
      %v2546 = vpack.c.bf16 %v2516, %v2515
      %v2547 = vpack.c.bf16 %v2518, %v2517
      %v2548 = vpack.c.bf16 %v2520, %v2519
      %v2549 = vpack.c.bf16 %v2522, %v2521
      %v2550 = vpack.c.bf16 %v2524, %v2523
      %v2551 = vpack.c.bf16 %v2526, %v2525
      %v2552 = vpack.c.bf16 %v2528, %v2527
      %v2553 = vpack.c.bf16 %v2530, %v2529
      %v2554 = vpack.c.bf16 %v2532, %v2531
      %v2555 = vpack.c.bf16 %v2534, %v2533
      %v2556 = vpack.c.bf16 %v2536, %v2535
      %v2557 = vpack.c.bf16 %v2538, %v2537
      %v2558 = vpack.c.bf16 %v2540, %v2539
      %v2559 = vpack.c.bf16 %v2542, %v2541
      %v2560 = vpack.c.bf16 %v2544, %v2543
      %v2561 = vunpack.c.l.bf16 %v2545
      %v2562 = vunpack.c.h.bf16 %v2545
      %v2563 = vunpack.c.l.bf16 %v2546
      %v2564 = vunpack.c.h.bf16 %v2546
      %v2565 = vunpack.c.l.bf16 %v2547
      %v2566 = vunpack.c.h.bf16 %v2547
      %v2567 = vunpack.c.l.bf16 %v2548
      %v2568 = vunpack.c.h.bf16 %v2548
      %v2569 = vunpack.c.l.bf16 %v2549
      %v2570 = vunpack.c.h.bf16 %v2549
      %v2571 = vunpack.c.l.bf16 %v2550
      %v2572 = vunpack.c.h.bf16 %v2550
      %v2573 = vunpack.c.l.bf16 %v2551
      %v2574 = vunpack.c.h.bf16 %v2551
      %v2575 = vunpack.c.l.bf16 %v2552
      %v2576 = vunpack.c.h.bf16 %v2552
      %v2577 = vunpack.c.l.bf16 %v2553
      %v2578 = vunpack.c.h.bf16 %v2553
      %v2579 = vunpack.c.l.bf16 %v2554
      %v2580 = vunpack.c.h.bf16 %v2554
      %v2581 = vunpack.c.l.bf16 %v2555
      %v2582 = vunpack.c.h.bf16 %v2555
      %v2583 = vunpack.c.l.bf16 %v2556
      %v2584 = vunpack.c.h.bf16 %v2556
      %v2585 = vunpack.c.l.bf16 %v2557
      %v2586 = vunpack.c.h.bf16 %v2557
      %v2587 = vunpack.c.l.bf16 %v2558
      %v2588 = vunpack.c.h.bf16 %v2558
      %v2589 = vunpack.c.l.bf16 %v2559
      %v2590 = vunpack.c.h.bf16 %v2559
      %v2591 = vunpack.c.l.bf16 %v2560
      %v2592 = vunpack.c.h.bf16 %v2560
      %v2593 = vmul.f32 %v2401, %v2561
      %v2594 = vmul.f32 %v2402, %v2562
      %v2595 = vmul.f32 %v2403, %v2563
      %v2596 = vmul.f32 %v2404, %v2564
      %v2597 = vmul.f32 %v2405, %v2565
      %v2598 = vmul.f32 %v2406, %v2566
      %v2599 = vmul.f32 %v2407, %v2567
      %v2600 = vmul.f32 %v2408, %v2568
      %v2601 = vmul.f32 %v2409, %v2569
      %v2602 = vmul.f32 %v2410, %v2570
      %v2603 = vmul.f32 %v2411, %v2571
      %v2604 = vmul.f32 %v2412, %v2572
      %v2605 = vmul.f32 %v2413, %v2573
      %v2606 = vmul.f32 %v2414, %v2574
      %v2607 = vmul.f32 %v2415, %v2575
      %v2608 = vmul.f32 %v2416, %v2576
      %v2609 = vmul.f32 %v2417, %v2577
      %v2610 = vmul.f32 %v2418, %v2578
      %v2611 = vmul.f32 %v2419, %v2579
      %v2612 = vmul.f32 %v2420, %v2580
      %v2613 = vmul.f32 %v2421, %v2581
      %v2614 = vmul.f32 %v2422, %v2582
      %v2615 = vmul.f32 %v2423, %v2583
      %v2616 = vmul.f32 %v2424, %v2584
      %v2617 = vmul.f32 %v2425, %v2585
      %v2618 = vmul.f32 %v2426, %v2586
      %v2619 = vmul.f32 %v2427, %v2587
      %v2620 = vmul.f32 %v2428, %v2588
      %v2621 = vmul.f32 %v2429, %v2589
      %v2622 = vmul.f32 %v2430, %v2590
      %v2623 = vmul.f32 %v2431, %v2591
      %v2624 = vmul.f32 %v2432, %v2592
      %v2625 = vpack.c.bf16 %v2595, %v2593
      %v2626 = vpack.c.bf16 %v2596, %v2594
      %v2627 = vpack.c.bf16 %v2599, %v2597
      %v2628 = vpack.c.bf16 %v2600, %v2598
      %v2629 = vpack.c.bf16 %v2603, %v2601
      %v2630 = vpack.c.bf16 %v2604, %v2602
      %v2631 = vpack.c.bf16 %v2607, %v2605
      %v2632 = vpack.c.bf16 %v2608, %v2606
      %v2633 = vpack.c.bf16 %v2611, %v2609
      %v2634 = vpack.c.bf16 %v2612, %v2610
      %v2635 = vpack.c.bf16 %v2615, %v2613
      %v2636 = vpack.c.bf16 %v2616, %v2614
      %v2637 = vpack.c.bf16 %v2619, %v2617
      %v2638 = vpack.c.bf16 %v2620, %v2618
      %v2639 = vpack.c.bf16 %v2623, %v2621
      %v2640 = vpack.c.bf16 %v2624, %v2622
      %v2641 = vld [vmem:[%s5] sm:$0xf]
      %v2642 = vld [vmem:[%s5 + $0x4] sm:$0xf]
      %v2643 = vld [vmem:[%s5 + $0x8] sm:$0xf]
      %v2644 = vld [vmem:[%s5 + $0xc] sm:$0xf]
      %v2645 = vld [vmem:[%s5 + $0x10] sm:$0xf]
      %v2646 = vld [vmem:[%s5 + $0x14] sm:$0xf]
      %v2647 = vld [vmem:[%s5 + $0x18] sm:$0xf]
      %v2648 = vld [vmem:[%s5 + $0x1c] sm:$0xf]
      %v2649 = vld [vmem:[%s5 + $0x20] sm:$0xf]
      %v2650 = vld [vmem:[%s5 + $0x24] sm:$0xf]
      %v2651 = vld [vmem:[%s5 + $0x28] sm:$0xf]
      %v2652 = vld [vmem:[%s5 + $0x2c] sm:$0xf]
      %v2653 = vld [vmem:[%s5 + $0x30] sm:$0xf]
      %v2654 = vld [vmem:[%s5 + $0x34] sm:$0xf]
      %v2655 = vld [vmem:[%s5 + $0x38] sm:$0xf]
      %v2656 = vld [vmem:[%s5 + $0x3c] sm:$0xf]
      %v2657 = vld [vmem:[%s5 + $0x40] sm:$0xf]
      %v2658 = vld [vmem:[%s5 + $0x44] sm:$0xf]
      %v2659 = vld [vmem:[%s5 + $0x48] sm:$0xf]
      %v2660 = vld [vmem:[%s5 + $0x4c] sm:$0xf]
      %v2661 = vld [vmem:[%s5 + $0x50] sm:$0xf]
      %v2662 = vld [vmem:[%s5 + $0x54] sm:$0xf]
      %v2663 = vld [vmem:[%s5 + $0x58] sm:$0xf]
      %v2664 = vld [vmem:[%s5 + $0x5c] sm:$0xf]
      %v2665 = vld [vmem:[%s5 + $0x60] sm:$0xf]
      %v2666 = vld [vmem:[%s5 + $0x64] sm:$0xf]
      %v2667 = vld [vmem:[%s5 + $0x68] sm:$0xf]
      %v2668 = vld [vmem:[%s5 + $0x6c] sm:$0xf]
      %v2669 = vld [vmem:[%s5 + $0x70] sm:$0xf]
      %v2670 = vld [vmem:[%s5 + $0x74] sm:$0xf]
      %v2671 = vld [vmem:[%s5 + $0x78] sm:$0xf]
      %v2672 = vld [vmem:[%s5 + $0x7c] sm:$0xf]
      %v2673 = vld [vmem:[%s6] sm:$0x1]
      %v2675 = vperm.slane %v2673, 0
      %v2709 = vunpack.c.l.b16 %v2641
      %v2710 = vunpack.c.l.b16 %v2642
      %v2711 = vunpack.c.l.b16 %v2643
      %v2712 = vunpack.c.l.b16 %v2644
      %v2713 = vunpack.c.l.b16 %v2645
      %v2714 = vunpack.c.l.b16 %v2646
      %v2715 = vunpack.c.l.b16 %v2647
      %v2716 = vunpack.c.l.b16 %v2648
      %v2717 = vunpack.c.l.b16 %v2649
      %v2718 = vunpack.c.l.b16 %v2650
      %v2719 = vunpack.c.l.b16 %v2651
      %v2720 = vunpack.c.l.b16 %v2652
      %v2721 = vunpack.c.l.b16 %v2653
      %v2722 = vunpack.c.l.b16 %v2654
      %v2723 = vunpack.c.l.b16 %v2655
      %v2724 = vunpack.c.l.b16 %v2656
      %v2725 = vunpack.c.l.b16 %v2657
      %v2726 = vunpack.c.l.b16 %v2658
      %v2727 = vunpack.c.l.b16 %v2659
      %v2728 = vunpack.c.l.b16 %v2660
      %v2729 = vunpack.c.l.b16 %v2661
      %v2730 = vunpack.c.l.b16 %v2662
      %v2731 = vunpack.c.l.b16 %v2663
      %v2732 = vunpack.c.l.b16 %v2664
      %v2733 = vunpack.c.l.b16 %v2665
      %v2734 = vunpack.c.l.b16 %v2666
      %v2735 = vunpack.c.l.b16 %v2667
      %v2736 = vunpack.c.l.b16 %v2668
      %v2737 = vunpack.c.l.b16 %v2669
      %v2738 = vunpack.c.l.b16 %v2670
      %v2739 = vunpack.c.l.b16 %v2671
      %v2740 = vunpack.c.l.b16 %v2672
      %v2741 = vpack.c.b16 %v2710, %v2709
      %v2742 = vpack.c.b16 %v2712, %v2711
      %v2743 = vpack.c.b16 %v2714, %v2713
      %v2744 = vpack.c.b16 %v2716, %v2715
      %v2745 = vpack.c.b16 %v2718, %v2717
      %v2746 = vpack.c.b16 %v2720, %v2719
      %v2747 = vpack.c.b16 %v2722, %v2721
      %v2748 = vpack.c.b16 %v2724, %v2723
      %v2749 = vpack.c.b16 %v2726, %v2725
      %v2750 = vpack.c.b16 %v2728, %v2727
      %v2751 = vpack.c.b16 %v2730, %v2729
      %v2752 = vpack.c.b16 %v2732, %v2731
      %v2753 = vpack.c.b16 %v2734, %v2733
      %v2754 = vpack.c.b16 %v2736, %v2735
      %v2755 = vpack.c.b16 %v2738, %v2737
      %v2756 = vpack.c.b16 %v2740, %v2739
      %2773 = vmatpush.bf16.msra.mxu0 %v2748
      %2774 = vmatpush.bf16.msra.mxu0 %v2747
      %2775 = vmatpush.bf16.msra.mxu0 %v2746
      %2776 = vmatpush.bf16.msra.mxu0 %v2745
      %2777 = vmatpush.bf16.msra.mxu0 %v2744
      %2778 = vmatpush.bf16.msra.mxu0 %v2743
      %2779 = vmatpush.bf16.msra.mxu0 %v2742
      %2780 = vmatpush.bf16.msra.mxu0 %v2741
      %2781 = vmatmul.bf16.gmra.mxu0 %v2625
      %v2782 = vpop.f32.mrf.mxu0
      %v2783 = vadd.f32 %v2675, %v2782
      %v2784 = vpop.f32.mrf.mxu0
      %v2785 = vadd.f32 %v2675, %v2784
      %2786 = vmatmul.bf16.gmra.mxu0 %v2627
      %v2787 = vpop.f32.mrf.mxu0
      %v2788 = vadd.f32 %v2675, %v2787
      %v2789 = vpop.f32.mrf.mxu0
      %v2790 = vadd.f32 %v2675, %v2789
      %2791 = vmatmul.bf16.gmra.mxu0 %v2629
      %v2792 = vpop.f32.mrf.mxu0
      %v2793 = vadd.f32 %v2675, %v2792
      %v2794 = vpop.f32.mrf.mxu0
      %v2795 = vadd.f32 %v2675, %v2794
      %2796 = vmatmul.bf16.gmra.mxu0 %v2631
      %v2797 = vpop.f32.mrf.mxu0
      %v2798 = vadd.f32 %v2675, %v2797
      %v2799 = vpop.f32.mrf.mxu0
      %v2800 = vadd.f32 %v2675, %v2799
      %2801 = vmatmul.bf16.gmra.mxu0 %v2633
      %v2802 = vpop.f32.mrf.mxu0
      %v2803 = vadd.f32 %v2675, %v2802
      %v2804 = vpop.f32.mrf.mxu0
      %v2805 = vadd.f32 %v2675, %v2804
      %2806 = vmatmul.bf16.gmra.mxu0 %v2635
      %v2807 = vpop.f32.mrf.mxu0
      %v2808 = vadd.f32 %v2675, %v2807
      %v2809 = vpop.f32.mrf.mxu0
      %v2810 = vadd.f32 %v2675, %v2809
      %2811 = vmatmul.bf16.gmra.mxu0 %v2637
      %v2812 = vpop.f32.mrf.mxu0
      %v2813 = vadd.f32 %v2675, %v2812
      %v2814 = vpop.f32.mrf.mxu0
      %v2815 = vadd.f32 %v2675, %v2814
      %2816 = vmatmul.bf16.gmra.mxu0 %v2639
      %v2817 = vpop.f32.mrf.mxu0
      %v2818 = vadd.f32 %v2675, %v2817
      %v2819 = vpop.f32.mrf.mxu0
      %v2820 = vadd.f32 %v2675, %v2819
      %2821 = vdwg.mxu0
      %2822 = vmatpush.bf16.msra.mxu0 %v2756
      %2823 = vmatpush.bf16.msra.mxu0 %v2755
      %2824 = vmatpush.bf16.msra.mxu0 %v2754
      %2825 = vmatpush.bf16.msra.mxu0 %v2753
      %2826 = vmatpush.bf16.msra.mxu0 %v2752
      %2827 = vmatpush.bf16.msra.mxu0 %v2751
      %2828 = vmatpush.bf16.msra.mxu0 %v2750
      %2829 = vmatpush.bf16.msra.mxu0 %v2749
      %2830 = vmatmul.bf16.gmra.mxu0 %v2626
      %v2831 = vpop.f32.mrf.mxu0
      %v2832 = vadd.f32 %v2783, %v2831
      %v2833 = vpop.f32.mrf.mxu0
      %v2834 = vadd.f32 %v2785, %v2833
      %2835 = vmatmul.bf16.gmra.mxu0 %v2628
      %v2836 = vpop.f32.mrf.mxu0
      %v2837 = vadd.f32 %v2788, %v2836
      %v2838 = vpop.f32.mrf.mxu0
      %v2839 = vadd.f32 %v2790, %v2838
      %2840 = vmatmul.bf16.gmra.mxu0 %v2630
      %v2841 = vpop.f32.mrf.mxu0
      %v2842 = vadd.f32 %v2793, %v2841
      %v2843 = vpop.f32.mrf.mxu0
      %v2844 = vadd.f32 %v2795, %v2843
      %2845 = vmatmul.bf16.gmra.mxu0 %v2632
      %v2846 = vpop.f32.mrf.mxu0
      %v2847 = vadd.f32 %v2798, %v2846
      %v2848 = vpop.f32.mrf.mxu0
      %v2849 = vadd.f32 %v2800, %v2848
      %2850 = vmatmul.bf16.gmra.mxu0 %v2634
      %v2851 = vpop.f32.mrf.mxu0
      %v2852 = vadd.f32 %v2803, %v2851
      %v2853 = vpop.f32.mrf.mxu0
      %v2854 = vadd.f32 %v2805, %v2853
      %2855 = vmatmul.bf16.gmra.mxu0 %v2636
      %v2856 = vpop.f32.mrf.mxu0
      %v2857 = vadd.f32 %v2808, %v2856
      %v2858 = vpop.f32.mrf.mxu0
      %v2859 = vadd.f32 %v2810, %v2858
      %2860 = vmatmul.bf16.gmra.mxu0 %v2638
      %v2861 = vpop.f32.mrf.mxu0
      %v2862 = vadd.f32 %v2813, %v2861
      %v2863 = vpop.f32.mrf.mxu0
      %v2864 = vadd.f32 %v2815, %v2863
      %2865 = vmatmul.bf16.gmra.mxu0 %v2640
      %v2866 = vpop.f32.mrf.mxu0
      %v2867 = vadd.f32 %v2818, %v2866
      %v2868 = vpop.f32.mrf.mxu0
      %v2869 = vadd.f32 %v2820, %v2868
      %2870 = vdwg.mxu0
      %vm2871 = vcmask 261120
      %v2872 = vsel %vm2871, %v2832, 0.0
      %2873 = vadd.xlane.f32.xlu0 %v2872
      %v2874 = vpop.xlane.xlu0 %2873
      %v2875 = vsel %vm2871, %v2834, 0.0
      %2876 = vadd.xlane.f32.xlu0 %v2875
      %v2877 = vpop.xlane.xlu0 %2876
      %v2878 = vsel %vm2871, %v2837, 0.0
      %2879 = vadd.xlane.f32.xlu0 %v2878
      %v2880 = vpop.xlane.xlu0 %2879
      %v2881 = vsel %vm2871, %v2839, 0.0
      %2882 = vadd.xlane.f32.xlu0 %v2881
      %v2883 = vpop.xlane.xlu0 %2882
      %v2884 = vsel %vm2871, %v2842, 0.0
      %2885 = vadd.xlane.f32.xlu0 %v2884
      %v2886 = vpop.xlane.xlu0 %2885
      %v2887 = vsel %vm2871, %v2844, 0.0
      %2888 = vadd.xlane.f32.xlu0 %v2887
      %v2889 = vpop.xlane.xlu0 %2888
      %v2890 = vsel %vm2871, %v2847, 0.0
      %2891 = vadd.xlane.f32.xlu0 %v2890
      %v2892 = vpop.xlane.xlu0 %2891
      %v2893 = vsel %vm2871, %v2849, 0.0
      %2894 = vadd.xlane.f32.xlu0 %v2893
      %v2895 = vpop.xlane.xlu0 %2894
      %v2896 = vsel %vm2871, %v2852, 0.0
      %2897 = vadd.xlane.f32.xlu0 %v2896
      %v2898 = vpop.xlane.xlu0 %2897
      %v2899 = vsel %vm2871, %v2854, 0.0
      %2900 = vadd.xlane.f32.xlu0 %v2899
      %v2901 = vpop.xlane.xlu0 %2900
      %v2902 = vsel %vm2871, %v2857, 0.0
      %2903 = vadd.xlane.f32.xlu0 %v2902
      %v2904 = vpop.xlane.xlu0 %2903
      %v2905 = vsel %vm2871, %v2859, 0.0
      %2906 = vadd.xlane.f32.xlu0 %v2905
      %v2907 = vpop.xlane.xlu0 %2906
      %v2908 = vsel %vm2871, %v2862, 0.0
      %2909 = vadd.xlane.f32.xlu0 %v2908
      %v2910 = vpop.xlane.xlu0 %2909
      %v2911 = vsel %vm2871, %v2864, 0.0
      %2912 = vadd.xlane.f32.xlu0 %v2911
      %v2913 = vpop.xlane.xlu0 %2912
      %v2914 = vsel %vm2871, %v2867, 0.0
      %2915 = vadd.xlane.f32.xlu0 %v2914
      %v2916 = vpop.xlane.xlu0 %2915
      %v2917 = vsel %vm2871, %v2869, 0.0
      %2918 = vadd.xlane.f32.xlu0 %v2917
      %v2919 = vpop.xlane.xlu0 %2918
      %vm2920 = vcmask 7168
      %2921 = vst.msk [vmem:[%s407] sm:$0xff] %vm2920, %v2874
      %2922 = vst.msk [vmem:[%s407 + $0x8] sm:$0xff] %vm2920, %v2877
      %2923 = vst.msk [vmem:[%s407 + $0x10] sm:$0xff] %vm2920, %v2880
      %2924 = vst.msk [vmem:[%s407 + $0x18] sm:$0xff] %vm2920, %v2883
      %2925 = vst.msk [vmem:[%s407 + $0x20] sm:$0xff] %vm2920, %v2886
      %2926 = vst.msk [vmem:[%s407 + $0x28] sm:$0xff] %vm2920, %v2889
      %2927 = vst.msk [vmem:[%s407 + $0x30] sm:$0xff] %vm2920, %v2892
      %2928 = vst.msk [vmem:[%s407 + $0x38] sm:$0xff] %vm2920, %v2895
      %2929 = vst.msk [vmem:[%s407 + $0x40] sm:$0xff] %vm2920, %v2898
      %2930 = vst.msk [vmem:[%s407 + $0x48] sm:$0xff] %vm2920, %v2901
      %2931 = vst.msk [vmem:[%s407 + $0x50] sm:$0xff] %vm2920, %v2904
      %2932 = vst.msk [vmem:[%s407 + $0x58] sm:$0xff] %vm2920, %v2907
      %2933 = vst.msk [vmem:[%s407 + $0x60] sm:$0xff] %vm2920, %v2910
      %2934 = vst.msk [vmem:[%s407 + $0x68] sm:$0xff] %vm2920, %v2913
      %2935 = vst.msk [vmem:[%s407 + $0x70] sm:$0xff] %vm2920, %v2916
      %2936 = vst.msk [vmem:[%s407 + $0x78] sm:$0xff] %vm2920, %v2919
      %v2937 = vmul.f32 %v2832, %v2832
      %v2938 = vmul.f32 %v2834, %v2834
      %v2939 = vmul.f32 %v2837, %v2837
      %v2940 = vmul.f32 %v2839, %v2839
      %v2941 = vmul.f32 %v2842, %v2842
      %v2942 = vmul.f32 %v2844, %v2844
      %v2943 = vmul.f32 %v2847, %v2847
      %v2944 = vmul.f32 %v2849, %v2849
      %v2945 = vmul.f32 %v2852, %v2852
      %v2946 = vmul.f32 %v2854, %v2854
      %v2947 = vmul.f32 %v2857, %v2857
      %v2948 = vmul.f32 %v2859, %v2859
      %v2949 = vmul.f32 %v2862, %v2862
      %v2950 = vmul.f32 %v2864, %v2864
      %v2951 = vmul.f32 %v2867, %v2867
      %v2952 = vmul.f32 %v2869, %v2869
      %v2953 = vsel %vm2871, %v2937, 0.0
      %2954 = vadd.xlane.f32.xlu0 %v2953
      %v2955 = vpop.xlane.xlu0 %2954
      %v2956 = vsel %vm2871, %v2938, 0.0
      %2957 = vadd.xlane.f32.xlu0 %v2956
      %v2958 = vpop.xlane.xlu0 %2957
      %v2959 = vsel %vm2871, %v2939, 0.0
      %2960 = vadd.xlane.f32.xlu0 %v2959
      %v2961 = vpop.xlane.xlu0 %2960
      %v2962 = vsel %vm2871, %v2940, 0.0
      %2963 = vadd.xlane.f32.xlu0 %v2962
      %v2964 = vpop.xlane.xlu0 %2963
      %v2965 = vsel %vm2871, %v2941, 0.0
      %2966 = vadd.xlane.f32.xlu0 %v2965
      %v2967 = vpop.xlane.xlu0 %2966
      %v2968 = vsel %vm2871, %v2942, 0.0
      %2969 = vadd.xlane.f32.xlu0 %v2968
      %v2970 = vpop.xlane.xlu0 %2969
      %v2971 = vsel %vm2871, %v2943, 0.0
      %2972 = vadd.xlane.f32.xlu0 %v2971
      %v2973 = vpop.xlane.xlu0 %2972
      %v2974 = vsel %vm2871, %v2944, 0.0
      %2975 = vadd.xlane.f32.xlu0 %v2974
      %v2976 = vpop.xlane.xlu0 %2975
      %v2977 = vsel %vm2871, %v2945, 0.0
      %2978 = vadd.xlane.f32.xlu0 %v2977
      %v2979 = vpop.xlane.xlu0 %2978
      %v2980 = vsel %vm2871, %v2946, 0.0
      %2981 = vadd.xlane.f32.xlu0 %v2980
      %v2982 = vpop.xlane.xlu0 %2981
      %v2983 = vsel %vm2871, %v2947, 0.0
      %2984 = vadd.xlane.f32.xlu0 %v2983
      %v2985 = vpop.xlane.xlu0 %2984
      %v2986 = vsel %vm2871, %v2948, 0.0
      %2987 = vadd.xlane.f32.xlu0 %v2986
      %v2988 = vpop.xlane.xlu0 %2987
      %v2989 = vsel %vm2871, %v2949, 0.0
      %2990 = vadd.xlane.f32.xlu0 %v2989
      %v2991 = vpop.xlane.xlu0 %2990
      %v2992 = vsel %vm2871, %v2950, 0.0
      %2993 = vadd.xlane.f32.xlu0 %v2992
      %v2994 = vpop.xlane.xlu0 %2993
      %v2995 = vsel %vm2871, %v2951, 0.0
      %2996 = vadd.xlane.f32.xlu0 %v2995
      %v2997 = vpop.xlane.xlu0 %2996
      %v2998 = vsel %vm2871, %v2952, 0.0
      %2999 = vadd.xlane.f32.xlu0 %v2998
      %v3000 = vpop.xlane.xlu0 %2999
      %3001 = vst.msk [vmem:[%s417] sm:$0xff] %vm2920, %v2955
      %3002 = vst.msk [vmem:[%s417 + $0x8] sm:$0xff] %vm2920, %v2958
      %3003 = vst.msk [vmem:[%s417 + $0x10] sm:$0xff] %vm2920, %v2961
      %3004 = vst.msk [vmem:[%s417 + $0x18] sm:$0xff] %vm2920, %v2964
      %3005 = vst.msk [vmem:[%s417 + $0x20] sm:$0xff] %vm2920, %v2967
      %3006 = vst.msk [vmem:[%s417 + $0x28] sm:$0xff] %vm2920, %v2970
      %3007 = vst.msk [vmem:[%s417 + $0x30] sm:$0xff] %vm2920, %v2973
      %3008 = vst.msk [vmem:[%s417 + $0x38] sm:$0xff] %vm2920, %v2976
      %3009 = vst.msk [vmem:[%s417 + $0x40] sm:$0xff] %vm2920, %v2979
      %3010 = vst.msk [vmem:[%s417 + $0x48] sm:$0xff] %vm2920, %v2982
      %3011 = vst.msk [vmem:[%s417 + $0x50] sm:$0xff] %vm2920, %v2985
      %3012 = vst.msk [vmem:[%s417 + $0x58] sm:$0xff] %vm2920, %v2988
      %3013 = vst.msk [vmem:[%s417 + $0x60] sm:$0xff] %vm2920, %v2991
      %3014 = vst.msk [vmem:[%s417 + $0x68] sm:$0xff] %vm2920, %v2994
      %3015 = vst.msk [vmem:[%s417 + $0x70] sm:$0xff] %vm2920, %v2997
      %3016 = vst.msk [vmem:[%s417 + $0x78] sm:$0xff] %vm2920, %v3000
      %v3017 = vpack.c.bf16 %v2832, %v2832
      %v3018 = vpack.c.bf16 %v2834, %v2834
      %v3019 = vpack.c.bf16 %v2837, %v2837
      %v3020 = vpack.c.bf16 %v2839, %v2839
      %v3021 = vpack.c.bf16 %v2842, %v2842
      %v3022 = vpack.c.bf16 %v2844, %v2844
      %v3023 = vpack.c.bf16 %v2847, %v2847
      %v3024 = vpack.c.bf16 %v2849, %v2849
      %v3025 = vpack.c.bf16 %v2852, %v2852
      %v3026 = vpack.c.bf16 %v2854, %v2854
      %v3027 = vpack.c.bf16 %v2857, %v2857
      %v3028 = vpack.c.bf16 %v2859, %v2859
      %v3029 = vpack.c.bf16 %v2862, %v2862
      %v3030 = vpack.c.bf16 %v2864, %v2864
      %v3031 = vpack.c.bf16 %v2867, %v2867
      %v3032 = vpack.c.bf16 %v2869, %v2869
      %vm3033 = vcmask 257024
      %3034 = vst.msk [vmem:[%s397] sm:$0xf] %vm3033, %v3017
      %3035 = vst.msk [vmem:[%s397 + $0x4] sm:$0xf] %vm3033, %v3018
      %3036 = vst.msk [vmem:[%s397 + $0x8] sm:$0xf] %vm3033, %v3019
      %3037 = vst.msk [vmem:[%s397 + $0xc] sm:$0xf] %vm3033, %v3020
      %3038 = vst.msk [vmem:[%s397 + $0x10] sm:$0xf] %vm3033, %v3021
      %3039 = vst.msk [vmem:[%s397 + $0x14] sm:$0xf] %vm3033, %v3022
      %3040 = vst.msk [vmem:[%s397 + $0x18] sm:$0xf] %vm3033, %v3023
      %3041 = vst.msk [vmem:[%s397 + $0x1c] sm:$0xf] %vm3033, %v3024
      %3042 = vst.msk [vmem:[%s397 + $0x20] sm:$0xf] %vm3033, %v3025
      %3043 = vst.msk [vmem:[%s397 + $0x24] sm:$0xf] %vm3033, %v3026
      %3044 = vst.msk [vmem:[%s397 + $0x28] sm:$0xf] %vm3033, %v3027
      %3045 = vst.msk [vmem:[%s397 + $0x2c] sm:$0xf] %vm3033, %v3028
      %3046 = vst.msk [vmem:[%s397 + $0x30] sm:$0xf] %vm3033, %v3029
      %3047 = vst.msk [vmem:[%s397 + $0x34] sm:$0xf] %vm3033, %v3030
      %3048 = vst.msk [vmem:[%s397 + $0x38] sm:$0xf] %vm3033, %v3031
      %3049 = vst.msk [vmem:[%s397 + $0x3c] sm:$0xf] %vm3033, %v3032
      %s3050 = smul.u32 16, %s26
      %p3051 = scmp.lt.s32.totalorder %s25, 1
      %s3052 = scalar_select %p3051, %s25, 1
      %p3053 = scmp.lt.s32.totalorder %s3050, 15
      %s3054 = scalar_select %p3053, %s3050, 15
      %s3055 = smul.addr %s3052, 16
      %s3056 = sadd.s32 %s3054, %s3055
      %s3057 = smul.addr %s3056, 4
      %s3058 = scalar_lea.vmem %s7, %s3057
      %s3059 = smul.u32 16, %s26
      %p3060 = scmp.lt.s32.totalorder %s25, 1
      %s3061 = scalar_select %p3060, %s25, 1
      %p3062 = scmp.lt.s32.totalorder %s3059, 15
      %s3063 = scalar_select %p3062, %s3059, 15
      %s3064 = smul.addr %s3061, 16
      %s3065 = sadd.s32 %s3063, %s3064
      %s3066 = smul.addr %s3065, 8
      %s3067 = scalar_lea.vmem %s8, %s3066
      %s3068 = smul.u32 16, %s26
      %p3069 = scmp.lt.s32.totalorder %s25, 1
      %s3070 = scalar_select %p3069, %s25, 1
      %p3071 = scmp.lt.s32.totalorder %s3068, 15
      %s3072 = scalar_select %p3071, %s3068, 15
      %s3073 = smul.addr %s3070, 16
      %s3074 = sadd.s32 %s3072, %s3073
      %s3075 = smul.addr %s3074, 8
      %s3076 = scalar_lea.vmem %s9, %s3075
      // Predicated region
      $region49: #{_mesh_edge_update_impl.2} parent=47 // pred_check
        %p3077 = pneg %p207
      $region50: #{_mesh_edge_update_impl.2} parent=47 // pred_check_branch
        %3079 = sbr.rel (%p3077) target = $region52
      $region51: #{_mesh_edge_update_impl.2} parent=47 // pred_region
        %s3080 = smul.u32 16, %s26
      $region52: #{_mesh_edge_update_impl.2} parent=47 // pred_fallthru
        _
      // Predicated region
      $region53: #{_mesh_edge_update_impl.2} parent=47 // pred_check
        %p3081 = pneg %p235
      $region54: #{_mesh_edge_update_impl.2} parent=47 // pred_check_branch
        %3083 = sbr.rel (%p3081) target = $region56
      $region55: #{_mesh_edge_update_impl.2} parent=47 // pred_region
        %s3084 = smul.u32 16, %s26
      $region56: #{_mesh_edge_update_impl.2} parent=47 // pred_fallthru
        _
      // Predicated region
      $region57: #{_mesh_edge_update_impl.2} parent=47 // pred_check
        %p3085 = pneg %p263
      $region58: #{_mesh_edge_update_impl.2} parent=47 // pred_check_branch
        %3087 = sbr.rel (%p3085) target = $region60
      $region59: #{_mesh_edge_update_impl.2} parent=47 // pred_region
        %s3088 = smul.u32 16, %s26
      $region60: #{_mesh_edge_update_impl.2} parent=47 // pred_fallthru
        _
    $region48: #{_mesh_edge_update_impl.2} parent=5 // pred_fallthru
      _
    %p3089 = scmp.le.s32.totalorder 2, %s16
    // Predicated region
    $region61: #{_mesh_edge_update_impl.2} parent=5 // pred_check
      %p3090 = pneg %p3089
    $region62: #{_mesh_edge_update_impl.2} parent=5 // pred_check_branch
      %3092 = sbr.rel (%p3090) target = $region64
    $region63: #{_mesh_edge_update_impl.2} parent=5 // pred_region
      %s3093 = ssub.s32 %s16, 2
      // Predicated region
      $region65: #{_mesh_edge_update_impl.2} parent=63 // pred_check
        %p3094 = pneg %p213
      $region66: #{_mesh_edge_update_impl.2} parent=63 // pred_check_branch
        %3096 = sbr.rel (%p3094) target = $region68
      $region67: #{_mesh_edge_update_impl.2} parent=63 // pred_region
        %s3097 = smul.u32 16, %s28
        %p3098 = scmp.lt.s32.totalorder %s27, 1
        %s3099 = scalar_select %p3098, %s27, 1
        %p3100 = scmp.lt.s32.totalorder %s3097, 15
        %s3101 = scalar_select %p3100, %s3097, 15
        %s3102 = smul.addr %s3099, 16
        %s3103 = sadd.s32 %s3101, %s3102
        %s3104 = smul.addr %s3103, 4
        %s3105 = scalar_lea.vmem %s7, %s3104
      $region68: #{_mesh_edge_update_impl.2} parent=63 // pred_fallthru
        _
      // Predicated region
      $region69: #{_mesh_edge_update_impl.2} parent=63 // pred_check
        %p3106 = pneg %p241
      $region70: #{_mesh_edge_update_impl.2} parent=63 // pred_check_branch
        %3108 = sbr.rel (%p3106) target = $region72
      $region71: #{_mesh_edge_update_impl.2} parent=63 // pred_region
        %s3109 = smul.u32 16, %s28
        %p3110 = scmp.lt.s32.totalorder %s27, 1
        %s3111 = scalar_select %p3110, %s27, 1
        %p3112 = scmp.lt.s32.totalorder %s3109, 15
        %s3113 = scalar_select %p3112, %s3109, 15
        %s3114 = smul.addr %s3111, 16
        %s3115 = sadd.s32 %s3113, %s3114
        %s3116 = smul.addr %s3115, 8
        %s3117 = scalar_lea.vmem %s8, %s3116
      $region72: #{_mesh_edge_update_impl.2} parent=63 // pred_fallthru
        _
      // Predicated region
      $region73: #{_mesh_edge_update_impl.2} parent=63 // pred_check
        %p3118 = pneg %p269
      $region74: #{_mesh_edge_update_impl.2} parent=63 // pred_check_branch
        %3120 = sbr.rel (%p3118) target = $region76
      $region75: #{_mesh_edge_update_impl.2} parent=63 // pred_region
        %s3121 = smul.u32 16, %s28
        %p3122 = scmp.lt.s32.totalorder %s27, 1
        %s3123 = scalar_select %p3122, %s27, 1
        %p3124 = scmp.lt.s32.totalorder %s3121, 15
        %s3125 = scalar_select %p3124, %s3121, 15
        %s3126 = smul.addr %s3123, 16
        %s3127 = sadd.s32 %s3125, %s3126
        %s3128 = smul.addr %s3127, 8
        %s3129 = scalar_lea.vmem %s9, %s3128
      $region76: #{_mesh_edge_update_impl.2} parent=63 // pred_fallthru
        _
    $region64: #{_mesh_edge_update_impl.2} parent=5 // pred_fallthru
      _
  $region6: #{_mesh_edge_update_impl.2} parent=0 // loop_footer
    %s20 = sadd.s32 1, %s16
  $region7: #{_mesh_edge_update_impl.2} parent=0 // loop_footer_branch
    %15 = sbr.rel target = $region3
  $region8: #{_mesh_edge_update_impl.2} parent=0 // loop_exit
    _

</llo_original>
